<compile_context>
chip_gen: v7x
topology: tpu7x:2x2x1
jax: 0.10.0
libtpu: 0.0.40
codegen_flags: <defaults>
</compile_context>

<pallas_src>
import jax
import jax.numpy as jnp
from jax.experimental import pallas as pl
from jax.experimental.pallas import tpu as pltpu


# ---------------------------------------------------------------------------
# Kernel
# ---------------------------------------------------------------------------
def gru_kernel(x_ref,                          # (T*Bp, 128)   bf16  (time-major, Bp rows/step)
               w_ih1_ref, b_ih1_ref,           # (128, Gp) bf16, (1, Gp) f32
               w_hh1_ref, b_hh1_ref,           # (Hp, Gp) bf16,  (1, Gp) f32
               w_ih2_ref, b_ih2_ref,           # (Hp, Gp) bf16,  (1, Gp) f32
               w_hh2_ref, b_hh2_ref,           # (Hp, Gp) bf16,  (1, Gp) f32
               w_lin_ref, b_lin_ref,           # (Hp, OUTp) bf16, (1, OUTp) f32
               out_ref,                        # (B, OUTp) f32
               gi1_ref):                       # scratch VMEM (T, Bp, Gp) f32
    T, Bp, Gp = gi1_ref.shape
    Hp = Gp // 3
    B = out_ref.shape[0]

    # ---- Prologue: layer-1 input projection for ALL timesteps, one MXU matmul.
    gi1_all = jnp.dot(x_ref[...], w_ih1_ref[...],
                      preferred_element_type=jnp.float32) + b_ih1_ref[...]
    # (T*Bp, Gp) -> (T, Bp, Gp): splits rows on a sublane-tile boundary (layout free).
    gi1_ref[...] = gi1_all.reshape(T, Bp, Gp)

    def cell(gi, gh, h):
        # gi = x@W_ih + b_ih, gh = h@W_hh + b_hh; gate order r|z|n on lanes 0/128/256.
        r = jax.nn.sigmoid(gi[:, :Hp] + gh[:, :Hp])
        z = jax.nn.sigmoid(gi[:, Hp:2 * Hp] + gh[:, Hp:2 * Hp])
        # b_hh_n stays inside the reset-gated term (torch.nn.GRU semantics).
        n = jnp.tanh(gi[:, 2 * Hp:] + r * gh[:, 2 * Hp:])
        return (1.0 - z) * n + z * h

    def hh_proj(h, w_ref, b_ref):
        # bf16 LHS/RHS on the MXU, f32 accumulate; weight read inside the step
        # (cheap vld) instead of hoisted as ~24 live vregs per weight.
        return jnp.dot(h.astype(jnp.bfloat16), w_ref[...],
                       preferred_element_type=jnp.float32) + b_ref[...]

    def step(t, carry):
        h1, h2 = carry
        # gh2 depends only on the carried h2 -> compute it first so it overlaps
        # with the layer-1 chain (2 serial matmuls per step instead of 3).
        gh2 = hh_proj(h2, w_hh2_ref, b_hh2_ref)
        gh1 = hh_proj(h1, w_hh1_ref, b_hh1_ref)
        gi1 = gi1_ref[t][:B]                     # aligned leading-dim read
        h1 = cell(gi1, gh1, h1)
        gi2 = hh_proj(h1, w_ih2_ref, b_ih2_ref)
        h2 = cell(gi2, gh2, h2)
        return (h1, h2)

    h0 = jnp.zeros((B, Hp), jnp.float32)
    _, h2 = jax.lax.fori_loop(0, T, step, (h0, h0), unroll=True)

    # ---- Epilogue: final Linear on the last hidden state, lane-dense store.
    out_ref[...] = (jnp.dot(h2.astype(jnp.bfloat16), w_lin_ref[...],
                            preferred_element_type=jnp.float32)
                    + b_lin_ref[...])


# ---------------------------------------------------------------------------
# Weight packing (fused gates, lane-aligned per-gate padding, bf16 weights)
# ---------------------------------------------------------------------------
def _round_up(n, m):
    return ((n + m - 1) // m) * m


def _pack_gate_weight(w, rows_pad, hp):
    """w: (3, in_dim, H) -> (rows_pad, 3*hp) bf16; gate g at cols [g*hp, g*hp+H)."""
    _, in_dim, h = w.shape
    out = jnp.zeros((rows_pad, 3 * hp), jnp.float32)
    for g in range(3):
        out = out.at[:in_dim, g * hp:g * hp + h].set(w[g])
    return out.astype(jnp.bfloat16)


def _pack_gate_bias(b, hp):
    """b: (3, 1, H) -> (1, 3*hp) f32 (biases stay f32: added post-matmul on the VPU)."""
    _, _, h = b.shape
    out = jnp.zeros((1, 3 * hp), jnp.float32)
    for g in range(3):
        out = out.at[:, g * hp:g * hp + h].set(b[g])
    return out


# ---------------------------------------------------------------------------
# Wrapper
# ---------------------------------------------------------------------------
@jax.jit
def gru_forward(x, params):
    """x: (B, T, D) float32, batch_first like the PyTorch module."""
    B, T, D = x.shape
    H = params["w_hh1"].shape[-1]
    OUT = params["w_lin"].shape[-1]
    Hp = _round_up(H, 128)          # per-gate lane padding -> gate slices at 0/128/256
    Gp = 3 * Hp
    Bp = _round_up(B, 8)            # one sublane tile of rows per timestep
    Dp = 128                        # lane-pad the tiny feature dim
    OUTp = _round_up(OUT, 128)      # lane-dense output; wrapper slices [:, :OUT]

    # Fused, padded gate layouts (bf16 weights / f32 biases).
    w_ih1_p = _pack_gate_weight(params["w_ih1"], Dp, Hp)
    w_hh1_p = _pack_gate_weight(params["w_hh1"], Hp, Hp)
    w_ih2_p = _pack_gate_weight(params["w_ih2"], Hp, Hp)
    w_hh2_p = _pack_gate_weight(params["w_hh2"], Hp, Hp)
    b_ih1_p = _pack_gate_bias(params["b_ih1"], Hp)
    b_hh1_p = _pack_gate_bias(params["b_hh1"], Hp)
    b_ih2_p = _pack_gate_bias(params["b_ih2"], Hp)
    b_hh2_p = _pack_gate_bias(params["b_hh2"], Hp)
    w_lin_p = (jnp.zeros((Hp, OUTp), jnp.float32)
               .at[:H, :OUT].set(params["w_lin"]).astype(jnp.bfloat16))
    b_lin_p = jnp.zeros((1, OUTp), jnp.float32).at[:, :OUT].set(params["b_lin"])

    # x: (B, T, D) -> time-major (T*Bp, 128) bf16; timestep t occupies rows
    # [t*Bp, t*Bp+B), extra rows/lanes are zero.
    x_p = jnp.zeros((T, Bp, Dp), jnp.float32)
    x_p = x_p.at[:, :B, :D].set(jnp.transpose(x, (1, 0, 2)))
    x_p = x_p.reshape(T * Bp, Dp).astype(jnp.bfloat16)

    ordered = [x_p,
               w_ih1_p, b_ih1_p,
               w_hh1_p, b_hh1_p,
               w_ih2_p, b_ih2_p,
               w_hh2_p, b_hh2_p,
               w_lin_p, b_lin_p]

    grid_spec = pltpu.PrefetchScalarGridSpec(
        num_scalar_prefetch=0,
        grid=(1,),                       # single invocation; time loop inside the kernel
        in_specs=[pl.BlockSpec(a.shape, lambda i, _nd=a.ndim: (0,) * _nd)
                  for a in ordered],
        out_specs=pl.BlockSpec((B, OUTp), lambda i: (0, 0)),
        scratch_shapes=[pltpu.VMEM((T, Bp, Gp), jnp.float32)],
    )

    out_padded = pl.pallas_call(
        gru_kernel,
        out_shape=jax.ShapeDtypeStruct((B, OUTp), jnp.float32),
        grid_spec=grid_spec,
        compiler_params=pltpu.CompilerParams(
            dimension_semantics=("arbitrary",)),
    )(*ordered)

    return out_padded[:, :OUT]


# ---------------------------------------------------------------------------
# Pure-JAX f32 reference (torch.nn.GRU(batch_first) + Linear semantics)
# ---------------------------------------------------------------------------
def gru_reference(x, p):
    B, T, D = x.shape
    hi = jax.lax.Precision.HIGHEST
    H = p["w_hh1"].shape[-1]
    h1 = jnp.zeros((B, H), jnp.float32)
    h2 = jnp.zeros((B, H), jnp.float32)

    def cell(xt, h, w_ih, w_hh, b_ih, b_hh):
        r = jax.nn.sigmoid(jnp.dot(xt, w_ih[0], precision=hi) + b_ih[0]
                           + jnp.dot(h, w_hh[0], precision=hi) + b_hh[0])
        z = jax.nn.sigmoid(jnp.dot(xt, w_ih[1], precision=hi) + b_ih[1]
                           + jnp.dot(h, w_hh[1], precision=hi) + b_hh[1])
        n = jnp.tanh(jnp.dot(xt, w_ih[2], precision=hi) + b_ih[2]
                     + r * (jnp.dot(h, w_hh[2], precision=hi) + b_hh[2]))
        return (1.0 - z) * n + z * h

    for t in range(T):
        xt = x[:, t, :]
        h1 = cell(xt, h1, p["w_ih1"], p["w_hh1"], p["b_ih1"], p["b_hh1"])
        h2 = cell(h1, h2, p["w_ih2"], p["w_hh2"], p["b_ih2"], p["b_hh2"])
    return jnp.dot(h2, p["w_lin"], precision=hi) + p["b_lin"]


def init_params(key, input_dim, hidden_dim, output_dim):
    """PyTorch-style U(-1/sqrt(H), 1/sqrt(H)) init.

    Gate weights stored pre-transposed and gate-stacked:
      w_ih*: (3, in_dim, H), w_hh*: (3, H, H), biases: (3, 1, H); gate order (r, z, n).
    """
    k = 1.0 / jnp.sqrt(hidden_dim)
    keys = jax.random.split(key, 10)
    u = lambda kk, shape: jax.random.uniform(kk, shape, jnp.float32, -k, k)
    return {
        "w_ih1": u(keys[0], (3, input_dim, hidden_dim)),
        "w_hh1": u(keys[1], (3, hidden_dim, hidden_dim)),
        "b_ih1": u(keys[2], (3, 1, hidden_dim)),
        "b_hh1": u(keys[3], (3, 1, hidden_dim)),
        "w_ih2": u(keys[4], (3, hidden_dim, hidden_dim)),
        "w_hh2": u(keys[5], (3, hidden_dim, hidden_dim)),
        "b_ih2": u(keys[6], (3, 1, hidden_dim)),
        "b_hh2": u(keys[7], (3, 1, hidden_dim)),
        "w_lin": u(keys[8], (hidden_dim, output_dim)),
        "b_lin": u(keys[9], (1, output_dim)),
    }


if __name__ == "__main__":
    # Module defaults: input_dim=5, hidden_dim=50, num_layers=2, output_dim=1
    B, T, D, H, OUT = 2, 8, 5, 50, 1

    key = jax.random.PRNGKey(0)
    kx, kp = jax.random.split(key)
    x = jax.random.normal(kx, (B, T, D), jnp.float32)
    params = init_params(kp, D, H, OUT)

    out = jax.block_until_ready(gru_forward(x, params))
    ref = gru_reference(x, params)

    assert out.shape == (B, OUT), out.shape
    # bf16 weights + bf16-cast matmul LHS (per perf review), f32 accumulation:
    # expected ~1e-3-level absolute deviation vs the pure-f32 reference after
    # T=8 recurrent steps, hence the relaxed tolerance.
    assert jnp.allclose(out, ref, rtol=2e-2, atol=2e-2), (out, ref)

    print("KERNEL_OK")
</pallas_src>

<mosaic_0001>
module attributes {stable_mosaic.version = 11 : i64} {
  func.func @gru_kernel(%arg0: i32, %arg1: memref<64x128xbf16, #tpu.memory_space<vmem>>, %arg2: memref<128x384xbf16, #tpu.memory_space<vmem>>, %arg3: memref<1x384xf32, #tpu.memory_space<vmem>>, %arg4: memref<128x384xbf16, #tpu.memory_space<vmem>>, %arg5: memref<1x384xf32, #tpu.memory_space<vmem>>, %arg6: memref<128x384xbf16, #tpu.memory_space<vmem>>, %arg7: memref<1x384xf32, #tpu.memory_space<vmem>>, %arg8: memref<128x384xbf16, #tpu.memory_space<vmem>>, %arg9: memref<1x384xf32, #tpu.memory_space<vmem>>, %arg10: memref<128x128xbf16, #tpu.memory_space<vmem>>, %arg11: memref<1x128xf32, #tpu.memory_space<vmem>>, %arg12: memref<2x128xf32, #tpu.memory_space<vmem>>, %arg13: memref<8x8x384xf32, #tpu.memory_space<vmem>>) attributes {dimension_semantics = [#tpu.dimension_semantics<arbitrary>], iteration_bounds = array<i64: 1>, scalar_prefetch = 0 : i64, scratch_operands = 1 : i64, tpu.core_type = #tpu.core_type<tc>, window_params = [{pipeline_mode = #tpu.pipeline_mode<synchronous>, transform_indices = @transform_0, window_bounds = array<i64: 64, 128>}, {pipeline_mode = #tpu.pipeline_mode<synchronous>, transform_indices = @transform_1, window_bounds = array<i64: 128, 384>}, {pipeline_mode = #tpu.pipeline_mode<synchronous>, transform_indices = @transform_2, window_bounds = array<i64: 1, 384>}, {pipeline_mode = #tpu.pipeline_mode<synchronous>, transform_indices = @transform_3, window_bounds = array<i64: 128, 384>}, {pipeline_mode = #tpu.pipeline_mode<synchronous>, transform_indices = @transform_4, window_bounds = array<i64: 1, 384>}, {pipeline_mode = #tpu.pipeline_mode<synchronous>, transform_indices = @transform_5, window_bounds = array<i64: 128, 384>}, {pipeline_mode = #tpu.pipeline_mode<synchronous>, transform_indices = @transform_6, window_bounds = array<i64: 1, 384>}, {pipeline_mode = #tpu.pipeline_mode<synchronous>, transform_indices = @transform_7, window_bounds = array<i64: 128, 384>}, {pipeline_mode = #tpu.pipeline_mode<synchronous>, transform_indices = @transform_8, window_bounds = array<i64: 1, 384>}, {pipeline_mode = #tpu.pipeline_mode<synchronous>, transform_indices = @transform_9, window_bounds = array<i64: 128, 128>}, {pipeline_mode = #tpu.pipeline_mode<synchronous>, transform_indices = @transform_10, window_bounds = array<i64: 1, 128>}, {pipeline_mode = #tpu.pipeline_mode<synchronous>, transform_indices = @transform_11, window_bounds = array<i64: 2, 128>}]} {
    %c0 = arith.constant 0 : index
    %c0_0 = arith.constant 0 : index
    %0 = vector.load %arg1[%c0, %c0_0] : memref<64x128xbf16, #tpu.memory_space<vmem>>, vector<64x128xbf16>
    %c0_1 = arith.constant 0 : index
    %c0_2 = arith.constant 0 : index
    %1 = vector.load %arg2[%c0_1, %c0_2] : memref<128x384xbf16, #tpu.memory_space<vmem>>, vector<128x384xbf16>
    %cst = arith.constant dense<0.000000e+00> : vector<64x384xf32>
    %2 = tpu.matmul %0, %1, %cst {dimension_numbers = #tpu.dot_dimension_numbers<[1], [0], [0], [1], [0, 0, 1, 1], [], []>} : vector<64x128xbf16>, vector<128x384xbf16>, vector<64x384xf32> -> vector<64x384xf32>
    %c0_3 = arith.constant 0 : index
    %c0_4 = arith.constant 0 : index
    %3 = vector.load %arg3[%c0_3, %c0_4] : memref<1x384xf32, #tpu.memory_space<vmem>>, vector<1x384xf32>
    %4 = vector.broadcast %3 : vector<1x384xf32> to vector<64x384xf32>
    %5 = arith.addf %2, %4 : vector<64x384xf32>
    %6 = vector.shape_cast %5 : vector<64x384xf32> to vector<8x8x384xf32>
    %c0_5 = arith.constant 0 : index
    %c0_6 = arith.constant 0 : index
    %c0_7 = arith.constant 0 : index
    %7 = vector.load %arg13[%c0_5, %c0_6, %c0_7] : memref<8x8x384xf32, #tpu.memory_space<vmem>>, vector<8x8x384xf32>
    tpu.vector_store %arg13[%c0_5, %c0_6, %c0_7], %6 {strides = array<i32>} : memref<8x8x384xf32, #tpu.memory_space<vmem>>, vector<8x8x384xf32>,
    %cst_8 = arith.constant 0.000000e+00 : f32
    %8 = vector.broadcast %cst_8 : f32 to vector<2x128xf32>
    %c0_i32 = arith.constant 0 : i32
    %9 = arith.truncf %8 : vector<2x128xf32> to vector<2x128xbf16>
    %c0_9 = arith.constant 0 : index
    %c0_10 = arith.constant 0 : index
    %10 = vector.load %arg8[%c0_9, %c0_10] : memref<128x384xbf16, #tpu.memory_space<vmem>>, vector<128x384xbf16>
    %cst_11 = arith.constant dense<0.000000e+00> : vector<2x384xf32>
    %11 = tpu.matmul %9, %10, %cst_11 {dimension_numbers = #tpu.dot_dimension_numbers<[1], [0], [0], [1], [0, 0, 1, 1], [], []>} : vector<2x128xbf16>, vector<128x384xbf16>, vector<2x384xf32> -> vector<2x384xf32>
    %c0_12 = arith.constant 0 : index
    %c0_13 = arith.constant 0 : index
    %12 = vector.load %arg9[%c0_12, %c0_13] : memref<1x384xf32, #tpu.memory_space<vmem>>, vector<1x384xf32>
    %13 = vector.broadcast %12 : vector<1x384xf32> to vector<2x384xf32>
    %14 = arith.addf %11, %13 : vector<2x384xf32>
    %15 = arith.truncf %8 : vector<2x128xf32> to vector<2x128xbf16>
    %c0_14 = arith.constant 0 : index
    %c0_15 = arith.constant 0 : index
    %16 = vector.load %arg4[%c0_14, %c0_15] : memref<128x384xbf16, #tpu.memory_space<vmem>>, vector<128x384xbf16>
    %cst_16 = arith.constant dense<0.000000e+00> : vector<2x384xf32>
    %17 = tpu.matmul %15, %16, %cst_16 {dimension_numbers = #tpu.dot_dimension_numbers<[1], [0], [0], [1], [0, 0, 1, 1], [], []>} : vector<2x128xbf16>, vector<128x384xbf16>, vector<2x384xf32> -> vector<2x384xf32>
    %c0_17 = arith.constant 0 : index
    %c0_18 = arith.constant 0 : index
    %18 = vector.load %arg5[%c0_17, %c0_18] : memref<1x384xf32, #tpu.memory_space<vmem>>, vector<1x384xf32>
    %19 = vector.broadcast %18 : vector<1x384xf32> to vector<2x384xf32>
    %20 = arith.addf %17, %19 : vector<2x384xf32>
    %21 = arith.index_cast %c0_i32 : i32 to index
    %c0_19 = arith.constant 0 : index
    %c0_20 = arith.constant 0 : index
    %22 = vector.load %arg13[%21, %c0_19, %c0_20] : memref<8x8x384xf32, #tpu.memory_space<vmem>>, vector<1x8x384xf32>
    %23 = vector.shape_cast %22 : vector<1x8x384xf32> to vector<8x384xf32>
    %24 = vector.extract_strided_slice %23 {offsets = [0, 0], sizes = [2, 384], strides = [1, 1]} : vector<8x384xf32> to vector<2x384xf32>
    %25 = vector.extract_strided_slice %24 {offsets = [0, 0], sizes = [2, 128], strides = [1, 1]} : vector<2x384xf32> to vector<2x128xf32>
    %26 = vector.extract_strided_slice %20 {offsets = [0, 0], sizes = [2, 128], strides = [1, 1]} : vector<2x384xf32> to vector<2x128xf32>
    %27 = arith.addf %25, %26 : vector<2x128xf32>
    %28 = arith.negf %27 : vector<2x128xf32>
    %29 = math.exp %28 : vector<2x128xf32>
    %cst_21 = arith.constant 1.000000e+00 : f32
    %30 = vector.broadcast %cst_21 : f32 to vector<2x128xf32>
    %31 = arith.addf %30, %29 : vector<2x128xf32>
    %32 = arith.divf %30, %31 : vector<2x128xf32>
    %33 = vector.extract_strided_slice %24 {offsets = [0, 128], sizes = [2, 128], strides = [1, 1]} : vector<2x384xf32> to vector<2x128xf32>
    %34 = vector.extract_strided_slice %20 {offsets = [0, 128], sizes = [2, 128], strides = [1, 1]} : vector<2x384xf32> to vector<2x128xf32>
    %35 = arith.addf %33, %34 : vector<2x128xf32>
    %36 = arith.negf %35 : vector<2x128xf32>
    %37 = math.exp %36 : vector<2x128xf32>
    %cst_22 = arith.constant 1.000000e+00 : f32
    %38 = vector.broadcast %cst_22 : f32 to vector<2x128xf32>
    %39 = arith.addf %38, %37 : vector<2x128xf32>
    %40 = arith.divf %38, %39 : vector<2x128xf32>
    %41 = vector.extract_strided_slice %24 {offsets = [0, 256], sizes = [2, 128], strides = [1, 1]} : vector<2x384xf32> to vector<2x128xf32>
    %42 = vector.extract_strided_slice %20 {offsets = [0, 256], sizes = [2, 128], strides = [1, 1]} : vector<2x384xf32> to vector<2x128xf32>
    %43 = arith.mulf %32, %42 : vector<2x128xf32>
    %44 = arith.addf %41, %43 : vector<2x128xf32>
    %45 = math.tanh %44 : vector<2x128xf32>
    %cst_23 = arith.constant 1.000000e+00 : f32
    %46 = vector.broadcast %cst_23 : f32 to vector<2x128xf32>
    %47 = arith.subf %46, %40 : vector<2x128xf32>
    %48 = arith.mulf %47, %45 : vector<2x128xf32>
    %49 = arith.mulf %40, %8 : vector<2x128xf32>
    %50 = arith.addf %48, %49 : vector<2x128xf32>
    %51 = arith.truncf %50 : vector<2x128xf32> to vector<2x128xbf16>
    %c0_24 = arith.constant 0 : index
    %c0_25 = arith.constant 0 : index
    %52 = vector.load %arg6[%c0_24, %c0_25] : memref<128x384xbf16, #tpu.memory_space<vmem>>, vector<128x384xbf16>
    %cst_26 = arith.constant dense<0.000000e+00> : vector<2x384xf32>
    %53 = tpu.matmul %51, %52, %cst_26 {dimension_numbers = #tpu.dot_dimension_numbers<[1], [0], [0], [1], [0, 0, 1, 1], [], []>} : vector<2x128xbf16>, vector<128x384xbf16>, vector<2x384xf32> -> vector<2x384xf32>
    %c0_27 = arith.constant 0 : index
    %c0_28 = arith.constant 0 : index
    %54 = vector.load %arg7[%c0_27, %c0_28] : memref<1x384xf32, #tpu.memory_space<vmem>>, vector<1x384xf32>
    %55 = vector.broadcast %54 : vector<1x384xf32> to vector<2x384xf32>
    %56 = arith.addf %53, %55 : vector<2x384xf32>
    %57 = vector.extract_strided_slice %56 {offsets = [0, 0], sizes = [2, 128], strides = [1, 1]} : vector<2x384xf32> to vector<2x128xf32>
    %58 = vector.extract_strided_slice %14 {offsets = [0, 0], sizes = [2, 128], strides = [1, 1]} : vector<2x384xf32> to vector<2x128xf32>
    %59 = arith.addf %57, %58 : vector<2x128xf32>
    %60 = arith.negf %59 : vector<2x128xf32>
    %61 = math.exp %60 : vector<2x128xf32>
    %cst_29 = arith.constant 1.000000e+00 : f32
    %62 = vector.broadcast %cst_29 : f32 to vector<2x128xf32>
    %63 = arith.addf %62, %61 : vector<2x128xf32>
    %64 = arith.divf %62, %63 : vector<2x128xf32>
    %65 = vector.extract_strided_slice %56 {offsets = [0, 128], sizes = [2, 128], strides = [1, 1]} : vector<2x384xf32> to vector<2x128xf32>
    %66 = vector.extract_strided_slice %14 {offsets = [0, 128], sizes = [2, 128], strides = [1, 1]} : vector<2x384xf32> to vector<2x128xf32>
    %67 = arith.addf %65, %66 : vector<2x128xf32>
    %68 = arith.negf %67 : vector<2x128xf32>
    %69 = math.exp %68 : vector<2x128xf32>
    %cst_30 = arith.constant 1.000000e+00 : f32
    %70 = vector.broadcast %cst_30 : f32 to vector<2x128xf32>
    %71 = arith.addf %70, %69 : vector<2x128xf32>
    %72 = arith.divf %70, %71 : vector<2x128xf32>
    %73 = vector.extract_strided_slice %56 {offsets = [0, 256], sizes = [2, 128], strides = [1, 1]} : vector<2x384xf32> to vector<2x128xf32>
    %74 = vector.extract_strided_slice %14 {offsets = [0, 256], sizes = [2, 128], strides = [1, 1]} : vector<2x384xf32> to vector<2x128xf32>
    %75 = arith.mulf %64, %74 : vector<2x128xf32>
    %76 = arith.addf %73, %75 : vector<2x128xf32>
    %77 = math.tanh %76 : vector<2x128xf32>
    %cst_31 = arith.constant 1.000000e+00 : f32
    %78 = vector.broadcast %cst_31 : f32 to vector<2x128xf32>
    %79 = arith.subf %78, %72 : vector<2x128xf32>
    %80 = arith.mulf %79, %77 : vector<2x128xf32>
    %81 = arith.mulf %72, %8 : vector<2x128xf32>
    %82 = arith.addf %80, %81 : vector<2x128xf32>
    %c1_i32 = arith.constant 1 : i32
    %83 = arith.truncf %82 : vector<2x128xf32> to vector<2x128xbf16>
    %c0_32 = arith.constant 0 : index
    %c0_33 = arith.constant 0 : index
    %84 = vector.load %arg8[%c0_32, %c0_33] : memref<128x384xbf16, #tpu.memory_space<vmem>>, vector<128x384xbf16>
    %cst_34 = arith.constant dense<0.000000e+00> : vector<2x384xf32>
    %85 = tpu.matmul %83, %84, %cst_34 {dimension_numbers = #tpu.dot_dimension_numbers<[1], [0], [0], [1], [0, 0, 1, 1], [], []>} : vector<2x128xbf16>, vector<128x384xbf16>, vector<2x384xf32> -> vector<2x384xf32>
    %c0_35 = arith.constant 0 : index
    %c0_36 = arith.constant 0 : index
    %86 = vector.load %arg9[%c0_35, %c0_36] : memref<1x384xf32, #tpu.memory_space<vmem>>, vector<1x384xf32>
    %87 = vector.broadcast %86 : vector<1x384xf32> to vector<2x384xf32>
    %88 = arith.addf %85, %87 : vector<2x384xf32>
    %89 = arith.truncf %50 : vector<2x128xf32> to vector<2x128xbf16>
    %c0_37 = arith.constant 0 : index
    %c0_38 = arith.constant 0 : index
    %90 = vector.load %arg4[%c0_37, %c0_38] : memref<128x384xbf16, #tpu.memory_space<vmem>>, vector<128x384xbf16>
    %cst_39 = arith.constant dense<0.000000e+00> : vector<2x384xf32>
    %91 = tpu.matmul %89, %90, %cst_39 {dimension_numbers = #tpu.dot_dimension_numbers<[1], [0], [0], [1], [0, 0, 1, 1], [], []>} : vector<2x128xbf16>, vector<128x384xbf16>, vector<2x384xf32> -> vector<2x384xf32>
    %c0_40 = arith.constant 0 : index
    %c0_41 = arith.constant 0 : index
    %92 = vector.load %arg5[%c0_40, %c0_41] : memref<1x384xf32, #tpu.memory_space<vmem>>, vector<1x384xf32>
    %93 = vector.broadcast %92 : vector<1x384xf32> to vector<2x384xf32>
    %94 = arith.addf %91, %93 : vector<2x384xf32>
    %95 = arith.index_cast %c1_i32 : i32 to index
    %c0_42 = arith.constant 0 : index
    %c0_43 = arith.constant 0 : index
    %96 = vector.load %arg13[%95, %c0_42, %c0_43] : memref<8x8x384xf32, #tpu.memory_space<vmem>>, vector<1x8x384xf32>
    %97 = vector.shape_cast %96 : vector<1x8x384xf32> to vector<8x384xf32>
    %98 = vector.extract_strided_slice %97 {offsets = [0, 0], sizes = [2, 384], strides = [1, 1]} : vector<8x384xf32> to vector<2x384xf32>
    %99 = vector.extract_strided_slice %98 {offsets = [0, 0], sizes = [2, 128], strides = [1, 1]} : vector<2x384xf32> to vector<2x128xf32>
    %100 = vector.extract_strided_slice %94 {offsets = [0, 0], sizes = [2, 128], strides = [1, 1]} : vector<2x384xf32> to vector<2x128xf32>
    %101 = arith.addf %99, %100 : vector<2x128xf32>
    %102 = arith.negf %101 : vector<2x128xf32>
    %103 = math.exp %102 : vector<2x128xf32>
    %cst_44 = arith.constant 1.000000e+00 : f32
    %104 = vector.broadcast %cst_44 : f32 to vector<2x128xf32>
    %105 = arith.addf %104, %103 : vector<2x128xf32>
    %106 = arith.divf %104, %105 : vector<2x128xf32>
    %107 = vector.extract_strided_slice %98 {offsets = [0, 128], sizes = [2, 128], strides = [1, 1]} : vector<2x384xf32> to vector<2x128xf32>
    %108 = vector.extract_strided_slice %94 {offsets = [0, 128], sizes = [2, 128], strides = [1, 1]} : vector<2x384xf32> to vector<2x128xf32>
    %109 = arith.addf %107, %108 : vector<2x128xf32>
    %110 = arith.negf %109 : vector<2x128xf32>
    %111 = math.exp %110 : vector<2x128xf32>
    %cst_45 = arith.constant 1.000000e+00 : f32
    %112 = vector.broadcast %cst_45 : f32 to vector<2x128xf32>
    %113 = arith.addf %112, %111 : vector<2x128xf32>
    %114 = arith.divf %112, %113 : vector<2x128xf32>
    %115 = vector.extract_strided_slice %98 {offsets = [0, 256], sizes = [2, 128], strides = [1, 1]} : vector<2x384xf32> to vector<2x128xf32>
    %116 = vector.extract_strided_slice %94 {offsets = [0, 256], sizes = [2, 128], strides = [1, 1]} : vector<2x384xf32> to vector<2x128xf32>
    %117 = arith.mulf %106, %116 : vector<2x128xf32>
    %118 = arith.addf %115, %117 : vector<2x128xf32>
    %119 = math.tanh %118 : vector<2x128xf32>
    %cst_46 = arith.constant 1.000000e+00 : f32
    %120 = vector.broadcast %cst_46 : f32 to vector<2x128xf32>
    %121 = arith.subf %120, %114 : vector<2x128xf32>
    %122 = arith.mulf %121, %119 : vector<2x128xf32>
    %123 = arith.mulf %114, %50 : vector<2x128xf32>
    %124 = arith.addf %122, %123 : vector<2x128xf32>
    %125 = arith.truncf %124 : vector<2x128xf32> to vector<2x128xbf16>
    %c0_47 = arith.constant 0 : index
    %c0_48 = arith.constant 0 : index
    %126 = vector.load %arg6[%c0_47, %c0_48] : memref<128x384xbf16, #tpu.memory_space<vmem>>, vector<128x384xbf16>
    %cst_49 = arith.constant dense<0.000000e+00> : vector<2x384xf32>
    %127 = tpu.matmul %125, %126, %cst_49 {dimension_numbers = #tpu.dot_dimension_numbers<[1], [0], [0], [1], [0, 0, 1, 1], [], []>} : vector<2x128xbf16>, vector<128x384xbf16>, vector<2x384xf32> -> vector<2x384xf32>
    %c0_50 = arith.constant 0 : index
    %c0_51 = arith.constant 0 : index
    %128 = vector.load %arg7[%c0_50, %c0_51] : memref<1x384xf32, #tpu.memory_space<vmem>>, vector<1x384xf32>
    %129 = vector.broadcast %128 : vector<1x384xf32> to vector<2x384xf32>
    %130 = arith.addf %127, %129 : vector<2x384xf32>
    %131 = vector.extract_strided_slice %130 {offsets = [0, 0], sizes = [2, 128], strides = [1, 1]} : vector<2x384xf32> to vector<2x128xf32>
    %132 = vector.extract_strided_slice %88 {offsets = [0, 0], sizes = [2, 128], strides = [1, 1]} : vector<2x384xf32> to vector<2x128xf32>
    %133 = arith.addf %131, %132 : vector<2x128xf32>
    %134 = arith.negf %133 : vector<2x128xf32>
    %135 = math.exp %134 : vector<2x128xf32>
    %cst_52 = arith.constant 1.000000e+00 : f32
    %136 = vector.broadcast %cst_52 : f32 to vector<2x128xf32>
    %137 = arith.addf %136, %135 : vector<2x128xf32>
    %138 = arith.divf %136, %137 : vector<2x128xf32>
    %139 = vector.extract_strided_slice %130 {offsets = [0, 128], sizes = [2, 128], strides = [1, 1]} : vector<2x384xf32> to vector<2x128xf32>
    %140 = vector.extract_strided_slice %88 {offsets = [0, 128], sizes = [2, 128], strides = [1, 1]} : vector<2x384xf32> to vector<2x128xf32>
    %141 = arith.addf %139, %140 : vector<2x128xf32>
    %142 = arith.negf %141 : vector<2x128xf32>
    %143 = math.exp %142 : vector<2x128xf32>
    %cst_53 = arith.constant 1.000000e+00 : f32
    %144 = vector.broadcast %cst_53 : f32 to vector<2x128xf32>
    %145 = arith.addf %144, %143 : vector<2x128xf32>
    %146 = arith.divf %144, %145 : vector<2x128xf32>
    %147 = vector.extract_strided_slice %130 {offsets = [0, 256], sizes = [2, 128], strides = [1, 1]} : vector<2x384xf32> to vector<2x128xf32>
    %148 = vector.extract_strided_slice %88 {offsets = [0, 256], sizes = [2, 128], strides = [1, 1]} : vector<2x384xf32> to vector<2x128xf32>
    %149 = arith.mulf %138, %148 : vector<2x128xf32>
    %150 = arith.addf %147, %149 : vector<2x128xf32>
    %151 = math.tanh %150 : vector<2x128xf32>
    %cst_54 = arith.constant 1.000000e+00 : f32
    %152 = vector.broadcast %cst_54 : f32 to vector<2x128xf32>
    %153 = arith.subf %152, %146 : vector<2x128xf32>
    %154 = arith.mulf %153, %151 : vector<2x128xf32>
    %155 = arith.mulf %146, %82 : vector<2x128xf32>
    %156 = arith.addf %154, %155 : vector<2x128xf32>
    %c2_i32 = arith.constant 2 : i32
    %157 = arith.truncf %156 : vector<2x128xf32> to vector<2x128xbf16>
    %c0_55 = arith.constant 0 : index
    %c0_56 = arith.constant 0 : index
    %158 = vector.load %arg8[%c0_55, %c0_56] : memref<128x384xbf16, #tpu.memory_space<vmem>>, vector<128x384xbf16>
    %cst_57 = arith.constant dense<0.000000e+00> : vector<2x384xf32>
    %159 = tpu.matmul %157, %158, %cst_57 {dimension_numbers = #tpu.dot_dimension_numbers<[1], [0], [0], [1], [0, 0, 1, 1], [], []>} : vector<2x128xbf16>, vector<128x384xbf16>, vector<2x384xf32> -> vector<2x384xf32>
    %c0_58 = arith.constant 0 : index
    %c0_59 = arith.constant 0 : index
    %160 = vector.load %arg9[%c0_58, %c0_59] : memref<1x384xf32, #tpu.memory_space<vmem>>, vector<1x384xf32>
    %161 = vector.broadcast %160 : vector<1x384xf32> to vector<2x384xf32>
    %162 = arith.addf %159, %161 : vector<2x384xf32>
    %163 = arith.truncf %124 : vector<2x128xf32> to vector<2x128xbf16>
    %c0_60 = arith.constant 0 : index
    %c0_61 = arith.constant 0 : index
    %164 = vector.load %arg4[%c0_60, %c0_61] : memref<128x384xbf16, #tpu.memory_space<vmem>>, vector<128x384xbf16>
    %cst_62 = arith.constant dense<0.000000e+00> : vector<2x384xf32>
    %165 = tpu.matmul %163, %164, %cst_62 {dimension_numbers = #tpu.dot_dimension_numbers<[1], [0], [0], [1], [0, 0, 1, 1], [], []>} : vector<2x128xbf16>, vector<128x384xbf16>, vector<2x384xf32> -> vector<2x384xf32>
    %c0_63 = arith.constant 0 : index
    %c0_64 = arith.constant 0 : index
    %166 = vector.load %arg5[%c0_63, %c0_64] : memref<1x384xf32, #tpu.memory_space<vmem>>, vector<1x384xf32>
    %167 = vector.broadcast %166 : vector<1x384xf32> to vector<2x384xf32>
    %168 = arith.addf %165, %167 : vector<2x384xf32>
    %169 = arith.index_cast %c2_i32 : i32 to index
    %c0_65 = arith.constant 0 : index
    %c0_66 = arith.constant 0 : index
    %170 = vector.load %arg13[%169, %c0_65, %c0_66] : memref<8x8x384xf32, #tpu.memory_space<vmem>>, vector<1x8x384xf32>
    %171 = vector.shape_cast %170 : vector<1x8x384xf32> to vector<8x384xf32>
    %172 = vector.extract_strided_slice %171 {offsets = [0, 0], sizes = [2, 384], strides = [1, 1]} : vector<8x384xf32> to vector<2x384xf32>
    %173 = vector.extract_strided_slice %172 {offsets = [0, 0], sizes = [2, 128], strides = [1, 1]} : vector<2x384xf32> to vector<2x128xf32>
    %174 = vector.extract_strided_slice %168 {offsets = [0, 0], sizes = [2, 128], strides = [1, 1]} : vector<2x384xf32> to vector<2x128xf32>
    %175 = arith.addf %173, %174 : vector<2x128xf32>
    %176 = arith.negf %175 : vector<2x128xf32>
    %177 = math.exp %176 : vector<2x128xf32>
    %cst_67 = arith.constant 1.000000e+00 : f32
    %178 = vector.broadcast %cst_67 : f32 to vector<2x128xf32>
    %179 = arith.addf %178, %177 : vector<2x128xf32>
    %180 = arith.divf %178, %179 : vector<2x128xf32>
    %181 = vector.extract_strided_slice %172 {offsets = [0, 128], sizes = [2, 128], strides = [1, 1]} : vector<2x384xf32> to vector<2x128xf32>
    %182 = vector.extract_strided_slice %168 {offsets = [0, 128], sizes = [2, 128], strides = [1, 1]} : vector<2x384xf32> to vector<2x128xf32>
    %183 = arith.addf %181, %182 : vector<2x128xf32>
    %184 = arith.negf %183 : vector<2x128xf32>
    %185 = math.exp %184 : vector<2x128xf32>
    %cst_68 = arith.constant 1.000000e+00 : f32
    %186 = vector.broadcast %cst_68 : f32 to vector<2x128xf32>
    %187 = arith.addf %186, %185 : vector<2x128xf32>
    %188 = arith.divf %186, %187 : vector<2x128xf32>
    %189 = vector.extract_strided_slice %172 {offsets = [0, 256], sizes = [2, 128], strides = [1, 1]} : vector<2x384xf32> to vector<2x128xf32>
    %190 = vector.extract_strided_slice %168 {offsets = [0, 256], sizes = [2, 128], strides = [1, 1]} : vector<2x384xf32> to vector<2x128xf32>
    %191 = arith.mulf %180, %190 : vector<2x128xf32>
    %192 = arith.addf %189, %191 : vector<2x128xf32>
    %193 = math.tanh %192 : vector<2x128xf32>
    %cst_69 = arith.constant 1.000000e+00 : f32
    %194 = vector.broadcast %cst_69 : f32 to vector<2x128xf32>
    %195 = arith.subf %194, %188 : vector<2x128xf32>
    %196 = arith.mulf %195, %193 : vector<2x128xf32>
    %197 = arith.mulf %188, %124 : vector<2x128xf32>
    %198 = arith.addf %196, %197 : vector<2x128xf32>
    %199 = arith.truncf %198 : vector<2x128xf32> to vector<2x128xbf16>
    %c0_70 = arith.constant 0 : index
    %c0_71 = arith.constant 0 : index
    %200 = vector.load %arg6[%c0_70, %c0_71] : memref<128x384xbf16, #tpu.memory_space<vmem>>, vector<128x384xbf16>
    %cst_72 = arith.constant dense<0.000000e+00> : vector<2x384xf32>
    %201 = tpu.matmul %199, %200, %cst_72 {dimension_numbers = #tpu.dot_dimension_numbers<[1], [0], [0], [1], [0, 0, 1, 1], [], []>} : vector<2x128xbf16>, vector<128x384xbf16>, vector<2x384xf32> -> vector<2x384xf32>
    %c0_73 = arith.constant 0 : index
    %c0_74 = arith.constant 0 : index
    %202 = vector.load %arg7[%c0_73, %c0_74] : memref<1x384xf32, #tpu.memory_space<vmem>>, vector<1x384xf32>
    %203 = vector.broadcast %202 : vector<1x384xf32> to vector<2x384xf32>
    %204 = arith.addf %201, %203 : vector<2x384xf32>
    %205 = vector.extract_strided_slice %204 {offsets = [0, 0], sizes = [2, 128], strides = [1, 1]} : vector<2x384xf32> to vector<2x128xf32>
    %206 = vector.extract_strided_slice %162 {offsets = [0, 0], sizes = [2, 128], strides = [1, 1]} : vector<2x384xf32> to vector<2x128xf32>
    %207 = arith.addf %205, %206 : vector<2x128xf32>
    %208 = arith.negf %207 : vector<2x128xf32>
    %209 = math.exp %208 : vector<2x128xf32>
    %cst_75 = arith.constant 1.000000e+00 : f32
    %210 = vector.broadcast %cst_75 : f32 to vector<2x128xf32>
    %211 = arith.addf %210, %209 : vector<2x128xf32>
    %212 = arith.divf %210, %211 : vector<2x128xf32>
    %213 = vector.extract_strided_slice %204 {offsets = [0, 128], sizes = [2, 128], strides = [1, 1]} : vector<2x384xf32> to vector<2x128xf32>
    %214 = vector.extract_strided_slice %162 {offsets = [0, 128], sizes = [2, 128], strides = [1, 1]} : vector<2x384xf32> to vector<2x128xf32>
    %215 = arith.addf %213, %214 : vector<2x128xf32>
    %216 = arith.negf %215 : vector<2x128xf32>
    %217 = math.exp %216 : vector<2x128xf32>
    %cst_76 = arith.constant 1.000000e+00 : f32
    %218 = vector.broadcast %cst_76 : f32 to vector<2x128xf32>
    %219 = arith.addf %218, %217 : vector<2x128xf32>
    %220 = arith.divf %218, %219 : vector<2x128xf32>
    %221 = vector.extract_strided_slice %204 {offsets = [0, 256], sizes = [2, 128], strides = [1, 1]} : vector<2x384xf32> to vector<2x128xf32>
    %222 = vector.extract_strided_slice %162 {offsets = [0, 256], sizes = [2, 128], strides = [1, 1]} : vector<2x384xf32> to vector<2x128xf32>
    %223 = arith.mulf %212, %222 : vector<2x128xf32>
    %224 = arith.addf %221, %223 : vector<2x128xf32>
    %225 = math.tanh %224 : vector<2x128xf32>
    %cst_77 = arith.constant 1.000000e+00 : f32
    %226 = vector.broadcast %cst_77 : f32 to vector<2x128xf32>
    %227 = arith.subf %226, %220 : vector<2x128xf32>
    %228 = arith.mulf %227, %225 : vector<2x128xf32>
    %229 = arith.mulf %220, %156 : vector<2x128xf32>
    %230 = arith.addf %228, %229 : vector<2x128xf32>
    %c3_i32 = arith.constant 3 : i32
    %231 = arith.truncf %230 : vector<2x128xf32> to vector<2x128xbf16>
    %c0_78 = arith.constant 0 : index
    %c0_79 = arith.constant 0 : index
    %232 = vector.load %arg8[%c0_78, %c0_79] : memref<128x384xbf16, #tpu.memory_space<vmem>>, vector<128x384xbf16>
    %cst_80 = arith.constant dense<0.000000e+00> : vector<2x384xf32>
    %233 = tpu.matmul %231, %232, %cst_80 {dimension_numbers = #tpu.dot_dimension_numbers<[1], [0], [0], [1], [0, 0, 1, 1], [], []>} : vector<2x128xbf16>, vector<128x384xbf16>, vector<2x384xf32> -> vector<2x384xf32>
    %c0_81 = arith.constant 0 : index
    %c0_82 = arith.constant 0 : index
    %234 = vector.load %arg9[%c0_81, %c0_82] : memref<1x384xf32, #tpu.memory_space<vmem>>, vector<1x384xf32>
    %235 = vector.broadcast %234 : vector<1x384xf32> to vector<2x384xf32>
    %236 = arith.addf %233, %235 : vector<2x384xf32>
    %237 = arith.truncf %198 : vector<2x128xf32> to vector<2x128xbf16>
    %c0_83 = arith.constant 0 : index
    %c0_84 = arith.constant 0 : index
    %238 = vector.load %arg4[%c0_83, %c0_84] : memref<128x384xbf16, #tpu.memory_space<vmem>>, vector<128x384xbf16>
    %cst_85 = arith.constant dense<0.000000e+00> : vector<2x384xf32>
    %239 = tpu.matmul %237, %238, %cst_85 {dimension_numbers = #tpu.dot_dimension_numbers<[1], [0], [0], [1], [0, 0, 1, 1], [], []>} : vector<2x128xbf16>, vector<128x384xbf16>, vector<2x384xf32> -> vector<2x384xf32>
    %c0_86 = arith.constant 0 : index
    %c0_87 = arith.constant 0 : index
    %240 = vector.load %arg5[%c0_86, %c0_87] : memref<1x384xf32, #tpu.memory_space<vmem>>, vector<1x384xf32>
    %241 = vector.broadcast %240 : vector<1x384xf32> to vector<2x384xf32>
    %242 = arith.addf %239, %241 : vector<2x384xf32>
    %243 = arith.index_cast %c3_i32 : i32 to index
    %c0_88 = arith.constant 0 : index
    %c0_89 = arith.constant 0 : index
    %244 = vector.load %arg13[%243, %c0_88, %c0_89] : memref<8x8x384xf32, #tpu.memory_space<vmem>>, vector<1x8x384xf32>
    %245 = vector.shape_cast %244 : vector<1x8x384xf32> to vector<8x384xf32>
    %246 = vector.extract_strided_slice %245 {offsets = [0, 0], sizes = [2, 384], strides = [1, 1]} : vector<8x384xf32> to vector<2x384xf32>
    %247 = vector.extract_strided_slice %246 {offsets = [0, 0], sizes = [2, 128], strides = [1, 1]} : vector<2x384xf32> to vector<2x128xf32>
    %248 = vector.extract_strided_slice %242 {offsets = [0, 0], sizes = [2, 128], strides = [1, 1]} : vector<2x384xf32> to vector<2x128xf32>
    %249 = arith.addf %247, %248 : vector<2x128xf32>
    %250 = arith.negf %249 : vector<2x128xf32>
    %251 = math.exp %250 : vector<2x128xf32>
    %cst_90 = arith.constant 1.000000e+00 : f32
    %252 = vector.broadcast %cst_90 : f32 to vector<2x128xf32>
    %253 = arith.addf %252, %251 : vector<2x128xf32>
    %254 = arith.divf %252, %253 : vector<2x128xf32>
    %255 = vector.extract_strided_slice %246 {offsets = [0, 128], sizes = [2, 128], strides = [1, 1]} : vector<2x384xf32> to vector<2x128xf32>
    %256 = vector.extract_strided_slice %242 {offsets = [0, 128], sizes = [2, 128], strides = [1, 1]} : vector<2x384xf32> to vector<2x128xf32>
    %257 = arith.addf %255, %256 : vector<2x128xf32>
    %258 = arith.negf %257 : vector<2x128xf32>
    %259 = math.exp %258 : vector<2x128xf32>
    %cst_91 = arith.constant 1.000000e+00 : f32
    %260 = vector.broadcast %cst_91 : f32 to vector<2x128xf32>
    %261 = arith.addf %260, %259 : vector<2x128xf32>
    %262 = arith.divf %260, %261 : vector<2x128xf32>
    %263 = vector.extract_strided_slice %246 {offsets = [0, 256], sizes = [2, 128], strides = [1, 1]} : vector<2x384xf32> to vector<2x128xf32>
    %264 = vector.extract_strided_slice %242 {offsets = [0, 256], sizes = [2, 128], strides = [1, 1]} : vector<2x384xf32> to vector<2x128xf32>
    %265 = arith.mulf %254, %264 : vector<2x128xf32>
    %266 = arith.addf %263, %265 : vector<2x128xf32>
    %267 = math.tanh %266 : vector<2x128xf32>
    %cst_92 = arith.constant 1.000000e+00 : f32
    %268 = vector.broadcast %cst_92 : f32 to vector<2x128xf32>
    %269 = arith.subf %268, %262 : vector<2x128xf32>
    %270 = arith.mulf %269, %267 : vector<2x128xf32>
    %271 = arith.mulf %262, %198 : vector<2x128xf32>
    %272 = arith.addf %270, %271 : vector<2x128xf32>
    %273 = arith.truncf %272 : vector<2x128xf32> to vector<2x128xbf16>
    %c0_93 = arith.constant 0 : index
    %c0_94 = arith.constant 0 : index
    %274 = vector.load %arg6[%c0_93, %c0_94] : memref<128x384xbf16, #tpu.memory_space<vmem>>, vector<128x384xbf16>
    %cst_95 = arith.constant dense<0.000000e+00> : vector<2x384xf32>
    %275 = tpu.matmul %273, %274, %cst_95 {dimension_numbers = #tpu.dot_dimension_numbers<[1], [0], [0], [1], [0, 0, 1, 1], [], []>} : vector<2x128xbf16>, vector<128x384xbf16>, vector<2x384xf32> -> vector<2x384xf32>
    %c0_96 = arith.constant 0 : index
    %c0_97 = arith.constant 0 : index
    %276 = vector.load %arg7[%c0_96, %c0_97] : memref<1x384xf32, #tpu.memory_space<vmem>>, vector<1x384xf32>
    %277 = vector.broadcast %276 : vector<1x384xf32> to vector<2x384xf32>
    %278 = arith.addf %275, %277 : vector<2x384xf32>
    %279 = vector.extract_strided_slice %278 {offsets = [0, 0], sizes = [2, 128], strides = [1, 1]} : vector<2x384xf32> to vector<2x128xf32>
    %280 = vector.extract_strided_slice %236 {offsets = [0, 0], sizes = [2, 128], strides = [1, 1]} : vector<2x384xf32> to vector<2x128xf32>
    %281 = arith.addf %279, %280 : vector<2x128xf32>
    %282 = arith.negf %281 : vector<2x128xf32>
    %283 = math.exp %282 : vector<2x128xf32>
    %cst_98 = arith.constant 1.000000e+00 : f32
    %284 = vector.broadcast %cst_98 : f32 to vector<2x128xf32>
    %285 = arith.addf %284, %283 : vector<2x128xf32>
    %286 = arith.divf %284, %285 : vector<2x128xf32>
    %287 = vector.extract_strided_slice %278 {offsets = [0, 128], sizes = [2, 128], strides = [1, 1]} : vector<2x384xf32> to vector<2x128xf32>
    %288 = vector.extract_strided_slice %236 {offsets = [0, 128], sizes = [2, 128], strides = [1, 1]} : vector<2x384xf32> to vector<2x128xf32>
    %289 = arith.addf %287, %288 : vector<2x128xf32>
    %290 = arith.negf %289 : vector<2x128xf32>
    %291 = math.exp %290 : vector<2x128xf32>
    %cst_99 = arith.constant 1.000000e+00 : f32
    %292 = vector.broadcast %cst_99 : f32 to vector<2x128xf32>
    %293 = arith.addf %292, %291 : vector<2x128xf32>
    %294 = arith.divf %292, %293 : vector<2x128xf32>
    %295 = vector.extract_strided_slice %278 {offsets = [0, 256], sizes = [2, 128], strides = [1, 1]} : vector<2x384xf32> to vector<2x128xf32>
    %296 = vector.extract_strided_slice %236 {offsets = [0, 256], sizes = [2, 128], strides = [1, 1]} : vector<2x384xf32> to vector<2x128xf32>
    %297 = arith.mulf %286, %296 : vector<2x128xf32>
    %298 = arith.addf %295, %297 : vector<2x128xf32>
    %299 = math.tanh %298 : vector<2x128xf32>
    %cst_100 = arith.constant 1.000000e+00 : f32
    %300 = vector.broadcast %cst_100 : f32 to vector<2x128xf32>
    %301 = arith.subf %300, %294 : vector<2x128xf32>
    %302 = arith.mulf %301, %299 : vector<2x128xf32>
    %303 = arith.mulf %294, %230 : vector<2x128xf32>
    %304 = arith.addf %302, %303 : vector<2x128xf32>
    %c4_i32 = arith.constant 4 : i32
    %305 = arith.truncf %304 : vector<2x128xf32> to vector<2x128xbf16>
    %c0_101 = arith.constant 0 : index
    %c0_102 = arith.constant 0 : index
    %306 = vector.load %arg8[%c0_101, %c0_102] : memref<128x384xbf16, #tpu.memory_space<vmem>>, vector<128x384xbf16>
    %cst_103 = arith.constant dense<0.000000e+00> : vector<2x384xf32>
    %307 = tpu.matmul %305, %306, %cst_103 {dimension_numbers = #tpu.dot_dimension_numbers<[1], [0], [0], [1], [0, 0, 1, 1], [], []>} : vector<2x128xbf16>, vector<128x384xbf16>, vector<2x384xf32> -> vector<2x384xf32>
    %c0_104 = arith.constant 0 : index
    %c0_105 = arith.constant 0 : index
    %308 = vector.load %arg9[%c0_104, %c0_105] : memref<1x384xf32, #tpu.memory_space<vmem>>, vector<1x384xf32>
    %309 = vector.broadcast %308 : vector<1x384xf32> to vector<2x384xf32>
    %310 = arith.addf %307, %309 : vector<2x384xf32>
    %311 = arith.truncf %272 : vector<2x128xf32> to vector<2x128xbf16>
    %c0_106 = arith.constant 0 : index
    %c0_107 = arith.constant 0 : index
    %312 = vector.load %arg4[%c0_106, %c0_107] : memref<128x384xbf16, #tpu.memory_space<vmem>>, vector<128x384xbf16>
    %cst_108 = arith.constant dense<0.000000e+00> : vector<2x384xf32>
    %313 = tpu.matmul %311, %312, %cst_108 {dimension_numbers = #tpu.dot_dimension_numbers<[1], [0], [0], [1], [0, 0, 1, 1], [], []>} : vector<2x128xbf16>, vector<128x384xbf16>, vector<2x384xf32> -> vector<2x384xf32>
    %c0_109 = arith.constant 0 : index
    %c0_110 = arith.constant 0 : index
    %314 = vector.load %arg5[%c0_109, %c0_110] : memref<1x384xf32, #tpu.memory_space<vmem>>, vector<1x384xf32>
    %315 = vector.broadcast %314 : vector<1x384xf32> to vector<2x384xf32>
    %316 = arith.addf %313, %315 : vector<2x384xf32>
    %317 = arith.index_cast %c4_i32 : i32 to index
    %c0_111 = arith.constant 0 : index
    %c0_112 = arith.constant 0 : index
    %318 = vector.load %arg13[%317, %c0_111, %c0_112] : memref<8x8x384xf32, #tpu.memory_space<vmem>>, vector<1x8x384xf32>
    %319 = vector.shape_cast %318 : vector<1x8x384xf32> to vector<8x384xf32>
    %320 = vector.extract_strided_slice %319 {offsets = [0, 0], sizes = [2, 384], strides = [1, 1]} : vector<8x384xf32> to vector<2x384xf32>
    %321 = vector.extract_strided_slice %320 {offsets = [0, 0], sizes = [2, 128], strides = [1, 1]} : vector<2x384xf32> to vector<2x128xf32>
    %322 = vector.extract_strided_slice %316 {offsets = [0, 0], sizes = [2, 128], strides = [1, 1]} : vector<2x384xf32> to vector<2x128xf32>
    %323 = arith.addf %321, %322 : vector<2x128xf32>
    %324 = arith.negf %323 : vector<2x128xf32>
    %325 = math.exp %324 : vector<2x128xf32>
    %cst_113 = arith.constant 1.000000e+00 : f32
    %326 = vector.broadcast %cst_113 : f32 to vector<2x128xf32>
    %327 = arith.addf %326, %325 : vector<2x128xf32>
    %328 = arith.divf %326, %327 : vector<2x128xf32>
    %329 = vector.extract_strided_slice %320 {offsets = [0, 128], sizes = [2, 128], strides = [1, 1]} : vector<2x384xf32> to vector<2x128xf32>
    %330 = vector.extract_strided_slice %316 {offsets = [0, 128], sizes = [2, 128], strides = [1, 1]} : vector<2x384xf32> to vector<2x128xf32>
    %331 = arith.addf %329, %330 : vector<2x128xf32>
    %332 = arith.negf %331 : vector<2x128xf32>
    %333 = math.exp %332 : vector<2x128xf32>
    %cst_114 = arith.constant 1.000000e+00 : f32
    %334 = vector.broadcast %cst_114 : f32 to vector<2x128xf32>
    %335 = arith.addf %334, %333 : vector<2x128xf32>
    %336 = arith.divf %334, %335 : vector<2x128xf32>
    %337 = vector.extract_strided_slice %320 {offsets = [0, 256], sizes = [2, 128], strides = [1, 1]} : vector<2x384xf32> to vector<2x128xf32>
    %338 = vector.extract_strided_slice %316 {offsets = [0, 256], sizes = [2, 128], strides = [1, 1]} : vector<2x384xf32> to vector<2x128xf32>
    %339 = arith.mulf %328, %338 : vector<2x128xf32>
    %340 = arith.addf %337, %339 : vector<2x128xf32>
    %341 = math.tanh %340 : vector<2x128xf32>
    %cst_115 = arith.constant 1.000000e+00 : f32
    %342 = vector.broadcast %cst_115 : f32 to vector<2x128xf32>
    %343 = arith.subf %342, %336 : vector<2x128xf32>
    %344 = arith.mulf %343, %341 : vector<2x128xf32>
    %345 = arith.mulf %336, %272 : vector<2x128xf32>
    %346 = arith.addf %344, %345 : vector<2x128xf32>
    %347 = arith.truncf %346 : vector<2x128xf32> to vector<2x128xbf16>
    %c0_116 = arith.constant 0 : index
    %c0_117 = arith.constant 0 : index
    %348 = vector.load %arg6[%c0_116, %c0_117] : memref<128x384xbf16, #tpu.memory_space<vmem>>, vector<128x384xbf16>
    %cst_118 = arith.constant dense<0.000000e+00> : vector<2x384xf32>
    %349 = tpu.matmul %347, %348, %cst_118 {dimension_numbers = #tpu.dot_dimension_numbers<[1], [0], [0], [1], [0, 0, 1, 1], [], []>} : vector<2x128xbf16>, vector<128x384xbf16>, vector<2x384xf32> -> vector<2x384xf32>
    %c0_119 = arith.constant 0 : index
    %c0_120 = arith.constant 0 : index
    %350 = vector.load %arg7[%c0_119, %c0_120] : memref<1x384xf32, #tpu.memory_space<vmem>>, vector<1x384xf32>
    %351 = vector.broadcast %350 : vector<1x384xf32> to vector<2x384xf32>
    %352 = arith.addf %349, %351 : vector<2x384xf32>
    %353 = vector.extract_strided_slice %352 {offsets = [0, 0], sizes = [2, 128], strides = [1, 1]} : vector<2x384xf32> to vector<2x128xf32>
    %354 = vector.extract_strided_slice %310 {offsets = [0, 0], sizes = [2, 128], strides = [1, 1]} : vector<2x384xf32> to vector<2x128xf32>
    %355 = arith.addf %353, %354 : vector<2x128xf32>
    %356 = arith.negf %355 : vector<2x128xf32>
    %357 = math.exp %356 : vector<2x128xf32>
    %cst_121 = arith.constant 1.000000e+00 : f32
    %358 = vector.broadcast %cst_121 : f32 to vector<2x128xf32>
    %359 = arith.addf %358, %357 : vector<2x128xf32>
    %360 = arith.divf %358, %359 : vector<2x128xf32>
    %361 = vector.extract_strided_slice %352 {offsets = [0, 128], sizes = [2, 128], strides = [1, 1]} : vector<2x384xf32> to vector<2x128xf32>
    %362 = vector.extract_strided_slice %310 {offsets = [0, 128], sizes = [2, 128], strides = [1, 1]} : vector<2x384xf32> to vector<2x128xf32>
    %363 = arith.addf %361, %362 : vector<2x128xf32>
    %364 = arith.negf %363 : vector<2x128xf32>
    %365 = math.exp %364 : vector<2x128xf32>
    %cst_122 = arith.constant 1.000000e+00 : f32
    %366 = vector.broadcast %cst_122 : f32 to vector<2x128xf32>
    %367 = arith.addf %366, %365 : vector<2x128xf32>
    %368 = arith.divf %366, %367 : vector<2x128xf32>
    %369 = vector.extract_strided_slice %352 {offsets = [0, 256], sizes = [2, 128], strides = [1, 1]} : vector<2x384xf32> to vector<2x128xf32>
    %370 = vector.extract_strided_slice %310 {offsets = [0, 256], sizes = [2, 128], strides = [1, 1]} : vector<2x384xf32> to vector<2x128xf32>
    %371 = arith.mulf %360, %370 : vector<2x128xf32>
    %372 = arith.addf %369, %371 : vector<2x128xf32>
    %373 = math.tanh %372 : vector<2x128xf32>
    %cst_123 = arith.constant 1.000000e+00 : f32
    %374 = vector.broadcast %cst_123 : f32 to vector<2x128xf32>
    %375 = arith.subf %374, %368 : vector<2x128xf32>
    %376 = arith.mulf %375, %373 : vector<2x128xf32>
    %377 = arith.mulf %368, %304 : vector<2x128xf32>
    %378 = arith.addf %376, %377 : vector<2x128xf32>
    %c5_i32 = arith.constant 5 : i32
    %379 = arith.truncf %378 : vector<2x128xf32> to vector<2x128xbf16>
    %c0_124 = arith.constant 0 : index
    %c0_125 = arith.constant 0 : index
    %380 = vector.load %arg8[%c0_124, %c0_125] : memref<128x384xbf16, #tpu.memory_space<vmem>>, vector<128x384xbf16>
    %cst_126 = arith.constant dense<0.000000e+00> : vector<2x384xf32>
    %381 = tpu.matmul %379, %380, %cst_126 {dimension_numbers = #tpu.dot_dimension_numbers<[1], [0], [0], [1], [0, 0, 1, 1], [], []>} : vector<2x128xbf16>, vector<128x384xbf16>, vector<2x384xf32> -> vector<2x384xf32>
    %c0_127 = arith.constant 0 : index
    %c0_128 = arith.constant 0 : index
    %382 = vector.load %arg9[%c0_127, %c0_128] : memref<1x384xf32, #tpu.memory_space<vmem>>, vector<1x384xf32>
    %383 = vector.broadcast %382 : vector<1x384xf32> to vector<2x384xf32>
    %384 = arith.addf %381, %383 : vector<2x384xf32>
    %385 = arith.truncf %346 : vector<2x128xf32> to vector<2x128xbf16>
    %c0_129 = arith.constant 0 : index
    %c0_130 = arith.constant 0 : index
    %386 = vector.load %arg4[%c0_129, %c0_130] : memref<128x384xbf16, #tpu.memory_space<vmem>>, vector<128x384xbf16>
    %cst_131 = arith.constant dense<0.000000e+00> : vector<2x384xf32>
    %387 = tpu.matmul %385, %386, %cst_131 {dimension_numbers = #tpu.dot_dimension_numbers<[1], [0], [0], [1], [0, 0, 1, 1], [], []>} : vector<2x128xbf16>, vector<128x384xbf16>, vector<2x384xf32> -> vector<2x384xf32>
    %c0_132 = arith.constant 0 : index
    %c0_133 = arith.constant 0 : index
    %388 = vector.load %arg5[%c0_132, %c0_133] : memref<1x384xf32, #tpu.memory_space<vmem>>, vector<1x384xf32>
    %389 = vector.broadcast %388 : vector<1x384xf32> to vector<2x384xf32>
    %390 = arith.addf %387, %389 : vector<2x384xf32>
    %391 = arith.index_cast %c5_i32 : i32 to index
    %c0_134 = arith.constant 0 : index
    %c0_135 = arith.constant 0 : index
    %392 = vector.load %arg13[%391, %c0_134, %c0_135] : memref<8x8x384xf32, #tpu.memory_space<vmem>>, vector<1x8x384xf32>
    %393 = vector.shape_cast %392 : vector<1x8x384xf32> to vector<8x384xf32>
    %394 = vector.extract_strided_slice %393 {offsets = [0, 0], sizes = [2, 384], strides = [1, 1]} : vector<8x384xf32> to vector<2x384xf32>
    %395 = vector.extract_strided_slice %394 {offsets = [0, 0], sizes = [2, 128], strides = [1, 1]} : vector<2x384xf32> to vector<2x128xf32>
    %396 = vector.extract_strided_slice %390 {offsets = [0, 0], sizes = [2, 128], strides = [1, 1]} : vector<2x384xf32> to vector<2x128xf32>
    %397 = arith.addf %395, %396 : vector<2x128xf32>
    %398 = arith.negf %397 : vector<2x128xf32>
    %399 = math.exp %398 : vector<2x128xf32>
    %cst_136 = arith.constant 1.000000e+00 : f32
    %400 = vector.broadcast %cst_136 : f32 to vector<2x128xf32>
    %401 = arith.addf %400, %399 : vector<2x128xf32>
    %402 = arith.divf %400, %401 : vector<2x128xf32>
    %403 = vector.extract_strided_slice %394 {offsets = [0, 128], sizes = [2, 128], strides = [1, 1]} : vector<2x384xf32> to vector<2x128xf32>
    %404 = vector.extract_strided_slice %390 {offsets = [0, 128], sizes = [2, 128], strides = [1, 1]} : vector<2x384xf32> to vector<2x128xf32>
    %405 = arith.addf %403, %404 : vector<2x128xf32>
    %406 = arith.negf %405 : vector<2x128xf32>
    %407 = math.exp %406 : vector<2x128xf32>
    %cst_137 = arith.constant 1.000000e+00 : f32
    %408 = vector.broadcast %cst_137 : f32 to vector<2x128xf32>
    %409 = arith.addf %408, %407 : vector<2x128xf32>
    %410 = arith.divf %408, %409 : vector<2x128xf32>
    %411 = vector.extract_strided_slice %394 {offsets = [0, 256], sizes = [2, 128], strides = [1, 1]} : vector<2x384xf32> to vector<2x128xf32>
    %412 = vector.extract_strided_slice %390 {offsets = [0, 256], sizes = [2, 128], strides = [1, 1]} : vector<2x384xf32> to vector<2x128xf32>
    %413 = arith.mulf %402, %412 : vector<2x128xf32>
    %414 = arith.addf %411, %413 : vector<2x128xf32>
    %415 = math.tanh %414 : vector<2x128xf32>
    %cst_138 = arith.constant 1.000000e+00 : f32
    %416 = vector.broadcast %cst_138 : f32 to vector<2x128xf32>
    %417 = arith.subf %416, %410 : vector<2x128xf32>
    %418 = arith.mulf %417, %415 : vector<2x128xf32>
    %419 = arith.mulf %410, %346 : vector<2x128xf32>
    %420 = arith.addf %418, %419 : vector<2x128xf32>
    %421 = arith.truncf %420 : vector<2x128xf32> to vector<2x128xbf16>
    %c0_139 = arith.constant 0 : index
    %c0_140 = arith.constant 0 : index
    %422 = vector.load %arg6[%c0_139, %c0_140] : memref<128x384xbf16, #tpu.memory_space<vmem>>, vector<128x384xbf16>
    %cst_141 = arith.constant dense<0.000000e+00> : vector<2x384xf32>
    %423 = tpu.matmul %421, %422, %cst_141 {dimension_numbers = #tpu.dot_dimension_numbers<[1], [0], [0], [1], [0, 0, 1, 1], [], []>} : vector<2x128xbf16>, vector<128x384xbf16>, vector<2x384xf32> -> vector<2x384xf32>
    %c0_142 = arith.constant 0 : index
    %c0_143 = arith.constant 0 : index
    %424 = vector.load %arg7[%c0_142, %c0_143] : memref<1x384xf32, #tpu.memory_space<vmem>>, vector<1x384xf32>
    %425 = vector.broadcast %424 : vector<1x384xf32> to vector<2x384xf32>
    %426 = arith.addf %423, %425 : vector<2x384xf32>
    %427 = vector.extract_strided_slice %426 {offsets = [0, 0], sizes = [2, 128], strides = [1, 1]} : vector<2x384xf32> to vector<2x128xf32>
    %428 = vector.extract_strided_slice %384 {offsets = [0, 0], sizes = [2, 128], strides = [1, 1]} : vector<2x384xf32> to vector<2x128xf32>
    %429 = arith.addf %427, %428 : vector<2x128xf32>
    %430 = arith.negf %429 : vector<2x128xf32>
    %431 = math.exp %430 : vector<2x128xf32>
    %cst_144 = arith.constant 1.000000e+00 : f32
    %432 = vector.broadcast %cst_144 : f32 to vector<2x128xf32>
    %433 = arith.addf %432, %431 : vector<2x128xf32>
    %434 = arith.divf %432, %433 : vector<2x128xf32>
    %435 = vector.extract_strided_slice %426 {offsets = [0, 128], sizes = [2, 128], strides = [1, 1]} : vector<2x384xf32> to vector<2x128xf32>
    %436 = vector.extract_strided_slice %384 {offsets = [0, 128], sizes = [2, 128], strides = [1, 1]} : vector<2x384xf32> to vector<2x128xf32>
    %437 = arith.addf %435, %436 : vector<2x128xf32>
    %438 = arith.negf %437 : vector<2x128xf32>
    %439 = math.exp %438 : vector<2x128xf32>
    %cst_145 = arith.constant 1.000000e+00 : f32
    %440 = vector.broadcast %cst_145 : f32 to vector<2x128xf32>
    %441 = arith.addf %440, %439 : vector<2x128xf32>
    %442 = arith.divf %440, %441 : vector<2x128xf32>
    %443 = vector.extract_strided_slice %426 {offsets = [0, 256], sizes = [2, 128], strides = [1, 1]} : vector<2x384xf32> to vector<2x128xf32>
    %444 = vector.extract_strided_slice %384 {offsets = [0, 256], sizes = [2, 128], strides = [1, 1]} : vector<2x384xf32> to vector<2x128xf32>
    %445 = arith.mulf %434, %444 : vector<2x128xf32>
    %446 = arith.addf %443, %445 : vector<2x128xf32>
    %447 = math.tanh %446 : vector<2x128xf32>
    %cst_146 = arith.constant 1.000000e+00 : f32
    %448 = vector.broadcast %cst_146 : f32 to vector<2x128xf32>
    %449 = arith.subf %448, %442 : vector<2x128xf32>
    %450 = arith.mulf %449, %447 : vector<2x128xf32>
    %451 = arith.mulf %442, %378 : vector<2x128xf32>
    %452 = arith.addf %450, %451 : vector<2x128xf32>
    %c6_i32 = arith.constant 6 : i32
    %453 = arith.truncf %452 : vector<2x128xf32> to vector<2x128xbf16>
    %c0_147 = arith.constant 0 : index
    %c0_148 = arith.constant 0 : index
    %454 = vector.load %arg8[%c0_147, %c0_148] : memref<128x384xbf16, #tpu.memory_space<vmem>>, vector<128x384xbf16>
    %cst_149 = arith.constant dense<0.000000e+00> : vector<2x384xf32>
    %455 = tpu.matmul %453, %454, %cst_149 {dimension_numbers = #tpu.dot_dimension_numbers<[1], [0], [0], [1], [0, 0, 1, 1], [], []>} : vector<2x128xbf16>, vector<128x384xbf16>, vector<2x384xf32> -> vector<2x384xf32>
    %c0_150 = arith.constant 0 : index
    %c0_151 = arith.constant 0 : index
    %456 = vector.load %arg9[%c0_150, %c0_151] : memref<1x384xf32, #tpu.memory_space<vmem>>, vector<1x384xf32>
    %457 = vector.broadcast %456 : vector<1x384xf32> to vector<2x384xf32>
    %458 = arith.addf %455, %457 : vector<2x384xf32>
    %459 = arith.truncf %420 : vector<2x128xf32> to vector<2x128xbf16>
    %c0_152 = arith.constant 0 : index
    %c0_153 = arith.constant 0 : index
    %460 = vector.load %arg4[%c0_152, %c0_153] : memref<128x384xbf16, #tpu.memory_space<vmem>>, vector<128x384xbf16>
    %cst_154 = arith.constant dense<0.000000e+00> : vector<2x384xf32>
    %461 = tpu.matmul %459, %460, %cst_154 {dimension_numbers = #tpu.dot_dimension_numbers<[1], [0], [0], [1], [0, 0, 1, 1], [], []>} : vector<2x128xbf16>, vector<128x384xbf16>, vector<2x384xf32> -> vector<2x384xf32>
    %c0_155 = arith.constant 0 : index
    %c0_156 = arith.constant 0 : index
    %462 = vector.load %arg5[%c0_155, %c0_156] : memref<1x384xf32, #tpu.memory_space<vmem>>, vector<1x384xf32>
    %463 = vector.broadcast %462 : vector<1x384xf32> to vector<2x384xf32>
    %464 = arith.addf %461, %463 : vector<2x384xf32>
    %465 = arith.index_cast %c6_i32 : i32 to index
    %c0_157 = arith.constant 0 : index
    %c0_158 = arith.constant 0 : index
    %466 = vector.load %arg13[%465, %c0_157, %c0_158] : memref<8x8x384xf32, #tpu.memory_space<vmem>>, vector<1x8x384xf32>
    %467 = vector.shape_cast %466 : vector<1x8x384xf32> to vector<8x384xf32>
    %468 = vector.extract_strided_slice %467 {offsets = [0, 0], sizes = [2, 384], strides = [1, 1]} : vector<8x384xf32> to vector<2x384xf32>
    %469 = vector.extract_strided_slice %468 {offsets = [0, 0], sizes = [2, 128], strides = [1, 1]} : vector<2x384xf32> to vector<2x128xf32>
    %470 = vector.extract_strided_slice %464 {offsets = [0, 0], sizes = [2, 128], strides = [1, 1]} : vector<2x384xf32> to vector<2x128xf32>
    %471 = arith.addf %469, %470 : vector<2x128xf32>
    %472 = arith.negf %471 : vector<2x128xf32>
    %473 = math.exp %472 : vector<2x128xf32>
    %cst_159 = arith.constant 1.000000e+00 : f32
    %474 = vector.broadcast %cst_159 : f32 to vector<2x128xf32>
    %475 = arith.addf %474, %473 : vector<2x128xf32>
    %476 = arith.divf %474, %475 : vector<2x128xf32>
    %477 = vector.extract_strided_slice %468 {offsets = [0, 128], sizes = [2, 128], strides = [1, 1]} : vector<2x384xf32> to vector<2x128xf32>
    %478 = vector.extract_strided_slice %464 {offsets = [0, 128], sizes = [2, 128], strides = [1, 1]} : vector<2x384xf32> to vector<2x128xf32>
    %479 = arith.addf %477, %478 : vector<2x128xf32>
    %480 = arith.negf %479 : vector<2x128xf32>
    %481 = math.exp %480 : vector<2x128xf32>
    %cst_160 = arith.constant 1.000000e+00 : f32
    %482 = vector.broadcast %cst_160 : f32 to vector<2x128xf32>
    %483 = arith.addf %482, %481 : vector<2x128xf32>
    %484 = arith.divf %482, %483 : vector<2x128xf32>
    %485 = vector.extract_strided_slice %468 {offsets = [0, 256], sizes = [2, 128], strides = [1, 1]} : vector<2x384xf32> to vector<2x128xf32>
    %486 = vector.extract_strided_slice %464 {offsets = [0, 256], sizes = [2, 128], strides = [1, 1]} : vector<2x384xf32> to vector<2x128xf32>
    %487 = arith.mulf %476, %486 : vector<2x128xf32>
    %488 = arith.addf %485, %487 : vector<2x128xf32>
    %489 = math.tanh %488 : vector<2x128xf32>
    %cst_161 = arith.constant 1.000000e+00 : f32
    %490 = vector.broadcast %cst_161 : f32 to vector<2x128xf32>
    %491 = arith.subf %490, %484 : vector<2x128xf32>
    %492 = arith.mulf %491, %489 : vector<2x128xf32>
    %493 = arith.mulf %484, %420 : vector<2x128xf32>
    %494 = arith.addf %492, %493 : vector<2x128xf32>
    %495 = arith.truncf %494 : vector<2x128xf32> to vector<2x128xbf16>
    %c0_162 = arith.constant 0 : index
    %c0_163 = arith.constant 0 : index
    %496 = vector.load %arg6[%c0_162, %c0_163] : memref<128x384xbf16, #tpu.memory_space<vmem>>, vector<128x384xbf16>
    %cst_164 = arith.constant dense<0.000000e+00> : vector<2x384xf32>
    %497 = tpu.matmul %495, %496, %cst_164 {dimension_numbers = #tpu.dot_dimension_numbers<[1], [0], [0], [1], [0, 0, 1, 1], [], []>} : vector<2x128xbf16>, vector<128x384xbf16>, vector<2x384xf32> -> vector<2x384xf32>
    %c0_165 = arith.constant 0 : index
    %c0_166 = arith.constant 0 : index
    %498 = vector.load %arg7[%c0_165, %c0_166] : memref<1x384xf32, #tpu.memory_space<vmem>>, vector<1x384xf32>
    %499 = vector.broadcast %498 : vector<1x384xf32> to vector<2x384xf32>
    %500 = arith.addf %497, %499 : vector<2x384xf32>
    %501 = vector.extract_strided_slice %500 {offsets = [0, 0], sizes = [2, 128], strides = [1, 1]} : vector<2x384xf32> to vector<2x128xf32>
    %502 = vector.extract_strided_slice %458 {offsets = [0, 0], sizes = [2, 128], strides = [1, 1]} : vector<2x384xf32> to vector<2x128xf32>
    %503 = arith.addf %501, %502 : vector<2x128xf32>
    %504 = arith.negf %503 : vector<2x128xf32>
    %505 = math.exp %504 : vector<2x128xf32>
    %cst_167 = arith.constant 1.000000e+00 : f32
    %506 = vector.broadcast %cst_167 : f32 to vector<2x128xf32>
    %507 = arith.addf %506, %505 : vector<2x128xf32>
    %508 = arith.divf %506, %507 : vector<2x128xf32>
    %509 = vector.extract_strided_slice %500 {offsets = [0, 128], sizes = [2, 128], strides = [1, 1]} : vector<2x384xf32> to vector<2x128xf32>
    %510 = vector.extract_strided_slice %458 {offsets = [0, 128], sizes = [2, 128], strides = [1, 1]} : vector<2x384xf32> to vector<2x128xf32>
    %511 = arith.addf %509, %510 : vector<2x128xf32>
    %512 = arith.negf %511 : vector<2x128xf32>
    %513 = math.exp %512 : vector<2x128xf32>
    %cst_168 = arith.constant 1.000000e+00 : f32
    %514 = vector.broadcast %cst_168 : f32 to vector<2x128xf32>
    %515 = arith.addf %514, %513 : vector<2x128xf32>
    %516 = arith.divf %514, %515 : vector<2x128xf32>
    %517 = vector.extract_strided_slice %500 {offsets = [0, 256], sizes = [2, 128], strides = [1, 1]} : vector<2x384xf32> to vector<2x128xf32>
    %518 = vector.extract_strided_slice %458 {offsets = [0, 256], sizes = [2, 128], strides = [1, 1]} : vector<2x384xf32> to vector<2x128xf32>
    %519 = arith.mulf %508, %518 : vector<2x128xf32>
    %520 = arith.addf %517, %519 : vector<2x128xf32>
    %521 = math.tanh %520 : vector<2x128xf32>
    %cst_169 = arith.constant 1.000000e+00 : f32
    %522 = vector.broadcast %cst_169 : f32 to vector<2x128xf32>
    %523 = arith.subf %522, %516 : vector<2x128xf32>
    %524 = arith.mulf %523, %521 : vector<2x128xf32>
    %525 = arith.mulf %516, %452 : vector<2x128xf32>
    %526 = arith.addf %524, %525 : vector<2x128xf32>
    %c7_i32 = arith.constant 7 : i32
    %527 = arith.truncf %526 : vector<2x128xf32> to vector<2x128xbf16>
    %c0_170 = arith.constant 0 : index
    %c0_171 = arith.constant 0 : index
    %528 = vector.load %arg8[%c0_170, %c0_171] : memref<128x384xbf16, #tpu.memory_space<vmem>>, vector<128x384xbf16>
    %cst_172 = arith.constant dense<0.000000e+00> : vector<2x384xf32>
    %529 = tpu.matmul %527, %528, %cst_172 {dimension_numbers = #tpu.dot_dimension_numbers<[1], [0], [0], [1], [0, 0, 1, 1], [], []>} : vector<2x128xbf16>, vector<128x384xbf16>, vector<2x384xf32> -> vector<2x384xf32>
    %c0_173 = arith.constant 0 : index
    %c0_174 = arith.constant 0 : index
    %530 = vector.load %arg9[%c0_173, %c0_174] : memref<1x384xf32, #tpu.memory_space<vmem>>, vector<1x384xf32>
    %531 = vector.broadcast %530 : vector<1x384xf32> to vector<2x384xf32>
    %532 = arith.addf %529, %531 : vector<2x384xf32>
    %533 = arith.truncf %494 : vector<2x128xf32> to vector<2x128xbf16>
    %c0_175 = arith.constant 0 : index
    %c0_176 = arith.constant 0 : index
    %534 = vector.load %arg4[%c0_175, %c0_176] : memref<128x384xbf16, #tpu.memory_space<vmem>>, vector<128x384xbf16>
    %cst_177 = arith.constant dense<0.000000e+00> : vector<2x384xf32>
    %535 = tpu.matmul %533, %534, %cst_177 {dimension_numbers = #tpu.dot_dimension_numbers<[1], [0], [0], [1], [0, 0, 1, 1], [], []>} : vector<2x128xbf16>, vector<128x384xbf16>, vector<2x384xf32> -> vector<2x384xf32>
    %c0_178 = arith.constant 0 : index
    %c0_179 = arith.constant 0 : index
    %536 = vector.load %arg5[%c0_178, %c0_179] : memref<1x384xf32, #tpu.memory_space<vmem>>, vector<1x384xf32>
    %537 = vector.broadcast %536 : vector<1x384xf32> to vector<2x384xf32>
    %538 = arith.addf %535, %537 : vector<2x384xf32>
    %539 = arith.index_cast %c7_i32 : i32 to index
    %c0_180 = arith.constant 0 : index
    %c0_181 = arith.constant 0 : index
    %540 = vector.load %arg13[%539, %c0_180, %c0_181] : memref<8x8x384xf32, #tpu.memory_space<vmem>>, vector<1x8x384xf32>
    %541 = vector.shape_cast %540 : vector<1x8x384xf32> to vector<8x384xf32>
    %542 = vector.extract_strided_slice %541 {offsets = [0, 0], sizes = [2, 384], strides = [1, 1]} : vector<8x384xf32> to vector<2x384xf32>
    %543 = vector.extract_strided_slice %542 {offsets = [0, 0], sizes = [2, 128], strides = [1, 1]} : vector<2x384xf32> to vector<2x128xf32>
    %544 = vector.extract_strided_slice %538 {offsets = [0, 0], sizes = [2, 128], strides = [1, 1]} : vector<2x384xf32> to vector<2x128xf32>
    %545 = arith.addf %543, %544 : vector<2x128xf32>
    %546 = arith.negf %545 : vector<2x128xf32>
    %547 = math.exp %546 : vector<2x128xf32>
    %cst_182 = arith.constant 1.000000e+00 : f32
    %548 = vector.broadcast %cst_182 : f32 to vector<2x128xf32>
    %549 = arith.addf %548, %547 : vector<2x128xf32>
    %550 = arith.divf %548, %549 : vector<2x128xf32>
    %551 = vector.extract_strided_slice %542 {offsets = [0, 128], sizes = [2, 128], strides = [1, 1]} : vector<2x384xf32> to vector<2x128xf32>
    %552 = vector.extract_strided_slice %538 {offsets = [0, 128], sizes = [2, 128], strides = [1, 1]} : vector<2x384xf32> to vector<2x128xf32>
    %553 = arith.addf %551, %552 : vector<2x128xf32>
    %554 = arith.negf %553 : vector<2x128xf32>
    %555 = math.exp %554 : vector<2x128xf32>
    %cst_183 = arith.constant 1.000000e+00 : f32
    %556 = vector.broadcast %cst_183 : f32 to vector<2x128xf32>
    %557 = arith.addf %556, %555 : vector<2x128xf32>
    %558 = arith.divf %556, %557 : vector<2x128xf32>
    %559 = vector.extract_strided_slice %542 {offsets = [0, 256], sizes = [2, 128], strides = [1, 1]} : vector<2x384xf32> to vector<2x128xf32>
    %560 = vector.extract_strided_slice %538 {offsets = [0, 256], sizes = [2, 128], strides = [1, 1]} : vector<2x384xf32> to vector<2x128xf32>
    %561 = arith.mulf %550, %560 : vector<2x128xf32>
    %562 = arith.addf %559, %561 : vector<2x128xf32>
    %563 = math.tanh %562 : vector<2x128xf32>
    %cst_184 = arith.constant 1.000000e+00 : f32
    %564 = vector.broadcast %cst_184 : f32 to vector<2x128xf32>
    %565 = arith.subf %564, %558 : vector<2x128xf32>
    %566 = arith.mulf %565, %563 : vector<2x128xf32>
    %567 = arith.mulf %558, %494 : vector<2x128xf32>
    %568 = arith.addf %566, %567 : vector<2x128xf32>
    %569 = arith.truncf %568 : vector<2x128xf32> to vector<2x128xbf16>
    %c0_185 = arith.constant 0 : index
    %c0_186 = arith.constant 0 : index
    %570 = vector.load %arg6[%c0_185, %c0_186] : memref<128x384xbf16, #tpu.memory_space<vmem>>, vector<128x384xbf16>
    %cst_187 = arith.constant dense<0.000000e+00> : vector<2x384xf32>
    %571 = tpu.matmul %569, %570, %cst_187 {dimension_numbers = #tpu.dot_dimension_numbers<[1], [0], [0], [1], [0, 0, 1, 1], [], []>} : vector<2x128xbf16>, vector<128x384xbf16>, vector<2x384xf32> -> vector<2x384xf32>
    %c0_188 = arith.constant 0 : index
    %c0_189 = arith.constant 0 : index
    %572 = vector.load %arg7[%c0_188, %c0_189] : memref<1x384xf32, #tpu.memory_space<vmem>>, vector<1x384xf32>
    %573 = vector.broadcast %572 : vector<1x384xf32> to vector<2x384xf32>
    %574 = arith.addf %571, %573 : vector<2x384xf32>
    %575 = vector.extract_strided_slice %574 {offsets = [0, 0], sizes = [2, 128], strides = [1, 1]} : vector<2x384xf32> to vector<2x128xf32>
    %576 = vector.extract_strided_slice %532 {offsets = [0, 0], sizes = [2, 128], strides = [1, 1]} : vector<2x384xf32> to vector<2x128xf32>
    %577 = arith.addf %575, %576 : vector<2x128xf32>
    %578 = arith.negf %577 : vector<2x128xf32>
    %579 = math.exp %578 : vector<2x128xf32>
    %cst_190 = arith.constant 1.000000e+00 : f32
    %580 = vector.broadcast %cst_190 : f32 to vector<2x128xf32>
    %581 = arith.addf %580, %579 : vector<2x128xf32>
    %582 = arith.divf %580, %581 : vector<2x128xf32>
    %583 = vector.extract_strided_slice %574 {offsets = [0, 128], sizes = [2, 128], strides = [1, 1]} : vector<2x384xf32> to vector<2x128xf32>
    %584 = vector.extract_strided_slice %532 {offsets = [0, 128], sizes = [2, 128], strides = [1, 1]} : vector<2x384xf32> to vector<2x128xf32>
    %585 = arith.addf %583, %584 : vector<2x128xf32>
    %586 = arith.negf %585 : vector<2x128xf32>
    %587 = math.exp %586 : vector<2x128xf32>
    %cst_191 = arith.constant 1.000000e+00 : f32
    %588 = vector.broadcast %cst_191 : f32 to vector<2x128xf32>
    %589 = arith.addf %588, %587 : vector<2x128xf32>
    %590 = arith.divf %588, %589 : vector<2x128xf32>
    %591 = vector.extract_strided_slice %574 {offsets = [0, 256], sizes = [2, 128], strides = [1, 1]} : vector<2x384xf32> to vector<2x128xf32>
    %592 = vector.extract_strided_slice %532 {offsets = [0, 256], sizes = [2, 128], strides = [1, 1]} : vector<2x384xf32> to vector<2x128xf32>
    %593 = arith.mulf %582, %592 : vector<2x128xf32>
    %594 = arith.addf %591, %593 : vector<2x128xf32>
    %595 = math.tanh %594 : vector<2x128xf32>
    %cst_192 = arith.constant 1.000000e+00 : f32
    %596 = vector.broadcast %cst_192 : f32 to vector<2x128xf32>
    %597 = arith.subf %596, %590 : vector<2x128xf32>
    %598 = arith.mulf %597, %595 : vector<2x128xf32>
    %599 = arith.mulf %590, %526 : vector<2x128xf32>
    %600 = arith.addf %598, %599 : vector<2x128xf32>
    %c8_i32 = arith.constant 8 : i32
    %601 = arith.truncf %600 : vector<2x128xf32> to vector<2x128xbf16>
    %c0_193 = arith.constant 0 : index
    %c0_194 = arith.constant 0 : index
    %602 = vector.load %arg10[%c0_193, %c0_194] : memref<128x128xbf16, #tpu.memory_space<vmem>>, vector<128x128xbf16>
    %cst_195 = arith.constant dense<0.000000e+00> : vector<2x128xf32>
    %603 = tpu.matmul %601, %602, %cst_195 {dimension_numbers = #tpu.dot_dimension_numbers<[1], [0], [0], [1], [0, 0, 1, 1], [], []>} : vector<2x128xbf16>, vector<128x128xbf16>, vector<2x128xf32> -> vector<2x128xf32>
    %c0_196 = arith.constant 0 : index
    %c0_197 = arith.constant 0 : index
    %604 = vector.load %arg11[%c0_196, %c0_197] : memref<1x128xf32, #tpu.memory_space<vmem>>, vector<1x128xf32>
    %605 = vector.broadcast %604 : vector<1x128xf32> to vector<2x128xf32>
    %606 = arith.addf %603, %605 : vector<2x128xf32>
    %c0_198 = arith.constant 0 : index
    %c0_199 = arith.constant 0 : index
    %607 = vector.load %arg12[%c0_198, %c0_199] : memref<2x128xf32, #tpu.memory_space<vmem>>, vector<2x128xf32>
    tpu.vector_store %arg12[%c0_198, %c0_199], %606 {strides = array<i32>} : memref<2x128xf32, #tpu.memory_space<vmem>>, vector<2x128xf32>,
    return
  }
  func.func @transform_0(%arg0: i32) -> (i32, i32) {
    %c0_i32 = arith.constant 0 : i32
    %c0_i32_0 = arith.constant 0 : i32
    %c0_i32_1 = arith.constant 0 : i32
    return %c0_i32, %c0_i32_0 : i32, i32
  }
  func.func @transform_1(%arg0: i32) -> (i32, i32) {
    %c0_i32 = arith.constant 0 : i32
    %c0_i32_0 = arith.constant 0 : i32
    %c0_i32_1 = arith.constant 0 : i32
    return %c0_i32, %c0_i32_0 : i32, i32
  }
  func.func @transform_2(%arg0: i32) -> (i32, i32) {
    %c0_i32 = arith.constant 0 : i32
    %c0_i32_0 = arith.constant 0 : i32
    %c0_i32_1 = arith.constant 0 : i32
    return %c0_i32, %c0_i32_0 : i32, i32
  }
  func.func @transform_3(%arg0: i32) -> (i32, i32) {
    %c0_i32 = arith.constant 0 : i32
    %c0_i32_0 = arith.constant 0 : i32
    %c0_i32_1 = arith.constant 0 : i32
    return %c0_i32, %c0_i32_0 : i32, i32
  }
  func.func @transform_4(%arg0: i32) -> (i32, i32) {
    %c0_i32 = arith.constant 0 : i32
    %c0_i32_0 = arith.constant 0 : i32
    %c0_i32_1 = arith.constant 0 : i32
    return %c0_i32, %c0_i32_0 : i32, i32
  }
  func.func @transform_5(%arg0: i32) -> (i32, i32) {
    %c0_i32 = arith.constant 0 : i32
    %c0_i32_0 = arith.constant 0 : i32
    %c0_i32_1 = arith.constant 0 : i32
    return %c0_i32, %c0_i32_0 : i32, i32
  }
  func.func @transform_6(%arg0: i32) -> (i32, i32) {
    %c0_i32 = arith.constant 0 : i32
    %c0_i32_0 = arith.constant 0 : i32
    %c0_i32_1 = arith.constant 0 : i32
    return %c0_i32, %c0_i32_0 : i32, i32
  }
  func.func @transform_7(%arg0: i32) -> (i32, i32) {
    %c0_i32 = arith.constant 0 : i32
    %c0_i32_0 = arith.constant 0 : i32
    %c0_i32_1 = arith.constant 0 : i32
    return %c0_i32, %c0_i32_0 : i32, i32
  }
  func.func @transform_8(%arg0: i32) -> (i32, i32) {
    %c0_i32 = arith.constant 0 : i32
    %c0_i32_0 = arith.constant 0 : i32
    %c0_i32_1 = arith.constant 0 : i32
    return %c0_i32, %c0_i32_0 : i32, i32
  }
  func.func @transform_9(%arg0: i32) -> (i32, i32) {
    %c0_i32 = arith.constant 0 : i32
    %c0_i32_0 = arith.constant 0 : i32
    %c0_i32_1 = arith.constant 0 : i32
    return %c0_i32, %c0_i32_0 : i32, i32
  }
  func.func @transform_10(%arg0: i32) -> (i32, i32) {
    %c0_i32 = arith.constant 0 : i32
    %c0_i32_0 = arith.constant 0 : i32
    %c0_i32_1 = arith.constant 0 : i32
    return %c0_i32, %c0_i32_0 : i32, i32
  }
  func.func @transform_11(%arg0: i32) -> (i32, i32) {
    %c0_i32 = arith.constant 0 : i32
    %c0_i32_0 = arith.constant 0 : i32
    %c0_i32_1 = arith.constant 0 : i32
    return %c0_i32, %c0_i32_0 : i32, i32
  }
}

</mosaic_0001>

<llo_original>
// kernel: gru_forward.1
$region0: #{gru_forward.1}
  #allocation0 [shape = 'u32[]', space=smem, size = 0x4, offset = 0x4, fixed_abs, tag = 'smem constant byte address 0x4 - core index']
  #allocation1 [shape = 'u32[144,128]{1,0:T(1,128)}', space=vmem, size = 0x12000, scoped, tag = 'internal scratch']
  #allocation2 [shape = 'f32[8,8,384]{2,1,0:T(8,128)}', space=vmem, size = 0x18000, scoped, tag = 'scratch operand']
  %s0 = inlined_call_operand.vmem [shape: bf16[64,128], index: 0, kind: input, shape index: {}]
  %s1 = inlined_call_operand.vmem [shape: bf16[128,384], index: 1, kind: input, shape index: {}]
  %s2 = inlined_call_operand.vmem [shape: f32[1,384], index: 2, kind: input, shape index: {}]
  %s3 = inlined_call_operand.vmem [shape: bf16[128,384], index: 3, kind: input, shape index: {}]
  %s4 = inlined_call_operand.vmem [shape: f32[1,384], index: 4, kind: input, shape index: {}]
  %s5 = inlined_call_operand.vmem [shape: bf16[128,384], index: 5, kind: input, shape index: {}]
  %s6 = inlined_call_operand.vmem [shape: f32[1,384], index: 6, kind: input, shape index: {}]
  %s7 = inlined_call_operand.vmem [shape: bf16[128,384], index: 7, kind: input, shape index: {}]
  %s8 = inlined_call_operand.vmem [shape: f32[1,384], index: 8, kind: input, shape index: {}]
  %s9 = inlined_call_operand.vmem [shape: bf16[128,128], index: 9, kind: input, shape index: {}]
  %s10 = inlined_call_operand.vmem [shape: f32[1,128], index: 10, kind: input, shape index: {}]
  %s11 = inlined_call_operand.vmem [shape: f32[2,128], index: 11, kind: output, shape index: {}]
  %s12 = sld [smem:[#allocation0]]
  $region54: #{gru_forward.1} parent=0
    _
  %s14 = ssub.s32 1, %s12
  %s15 = scalar_select 0, %s14, %s12
  // Predicated region
  $region2: #{gru_forward.1} parent=0 // pred_check
    _
  $region3: #{gru_forward.1} parent=0 // pred_check_branch
    %17 = sbr.rel (0) target = $region5
  $region4: #{gru_forward.1} parent=0 // pred_region
    _
  $region5: #{gru_forward.1} parent=0 // pred_fallthru
    _
  // Predicated region
  $region6: #{gru_forward.1} parent=0 // pred_check
    _
  $region7: #{gru_forward.1} parent=0 // pred_check_branch
    %19 = sbr.rel (0) target = $region9
  $region8: #{gru_forward.1} parent=0 // pred_region
    _
  $region9: #{gru_forward.1} parent=0 // pred_fallthru
    _
  // Predicated region
  $region10: #{gru_forward.1} parent=0 // pred_check
    _
  $region11: #{gru_forward.1} parent=0 // pred_check_branch
    %21 = sbr.rel (0) target = $region13
  $region12: #{gru_forward.1} parent=0 // pred_region
    _
  $region13: #{gru_forward.1} parent=0 // pred_fallthru
    _
  // Predicated region
  $region14: #{gru_forward.1} parent=0 // pred_check
    _
  $region15: #{gru_forward.1} parent=0 // pred_check_branch
    %23 = sbr.rel (0) target = $region17
  $region16: #{gru_forward.1} parent=0 // pred_region
    _
  $region17: #{gru_forward.1} parent=0 // pred_fallthru
    _
  // Predicated region
  $region18: #{gru_forward.1} parent=0 // pred_check
    _
  $region19: #{gru_forward.1} parent=0 // pred_check_branch
    %25 = sbr.rel (0) target = $region21
  $region20: #{gru_forward.1} parent=0 // pred_region
    _
  $region21: #{gru_forward.1} parent=0 // pred_fallthru
    _
  // Predicated region
  $region22: #{gru_forward.1} parent=0 // pred_check
    _
  $region23: #{gru_forward.1} parent=0 // pred_check_branch
    %27 = sbr.rel (0) target = $region25
  $region24: #{gru_forward.1} parent=0 // pred_region
    _
  $region25: #{gru_forward.1} parent=0 // pred_fallthru
    _
  // Predicated region
  $region26: #{gru_forward.1} parent=0 // pred_check
    _
  $region27: #{gru_forward.1} parent=0 // pred_check_branch
    %29 = sbr.rel (0) target = $region29
  $region28: #{gru_forward.1} parent=0 // pred_region
    _
  $region29: #{gru_forward.1} parent=0 // pred_fallthru
    _
  // Predicated region
  $region30: #{gru_forward.1} parent=0 // pred_check
    _
  $region31: #{gru_forward.1} parent=0 // pred_check_branch
    %31 = sbr.rel (0) target = $region33
  $region32: #{gru_forward.1} parent=0 // pred_region
    _
  $region33: #{gru_forward.1} parent=0 // pred_fallthru
    _
  // Predicated region
  $region34: #{gru_forward.1} parent=0 // pred_check
    _
  $region35: #{gru_forward.1} parent=0 // pred_check_branch
    %33 = sbr.rel (0) target = $region37
  $region36: #{gru_forward.1} parent=0 // pred_region
    _
  $region37: #{gru_forward.1} parent=0 // pred_fallthru
    _
  // Predicated region
  $region38: #{gru_forward.1} parent=0 // pred_check
    _
  $region39: #{gru_forward.1} parent=0 // pred_check_branch
    %35 = sbr.rel (0) target = $region41
  $region40: #{gru_forward.1} parent=0 // pred_region
    _
  $region41: #{gru_forward.1} parent=0 // pred_fallthru
    _
  // Predicated region
  $region42: #{gru_forward.1} parent=0 // pred_check
    _
  $region43: #{gru_forward.1} parent=0 // pred_check_branch
    %37 = sbr.rel (0) target = $region45
  $region44: #{gru_forward.1} parent=0 // pred_region
    _
  $region45: #{gru_forward.1} parent=0 // pred_fallthru
    _
  %v39 = vld [vmem:[%s0] sm:$0xf]
  %v40 = vld [vmem:[%s0 + $0x4] sm:$0xf]
  %v41 = vld [vmem:[%s0 + $0x8] sm:$0xf]
  %v42 = vld [vmem:[%s0 + $0xc] sm:$0xf]
  %v43 = vld [vmem:[%s0 + $0x10] sm:$0xf]
  %v44 = vld [vmem:[%s0 + $0x14] sm:$0xf]
  %v45 = vld [vmem:[%s0 + $0x18] sm:$0xf]
  %v46 = vld [vmem:[%s0 + $0x1c] sm:$0xf]
  %v47 = vld [vmem:[%s1] sm:$0xff]
  %v48 = vld [vmem:[%s1 + $0x8] sm:$0xf]
  %v49 = vld [vmem:[%s1 + $0xc] sm:$0xff]
  %v50 = vld [vmem:[%s1 + $0x14] sm:$0xf]
  %v51 = vld [vmem:[%s1 + $0x18] sm:$0xff]
  %v52 = vld [vmem:[%s1 + $0x20] sm:$0xf]
  %v53 = vld [vmem:[%s1 + $0x24] sm:$0xff]
  %v54 = vld [vmem:[%s1 + $0x2c] sm:$0xf]
  %v55 = vld [vmem:[%s1 + $0x30] sm:$0xff]
  %v56 = vld [vmem:[%s1 + $0x38] sm:$0xf]
  %v57 = vld [vmem:[%s1 + $0x3c] sm:$0xff]
  %v58 = vld [vmem:[%s1 + $0x44] sm:$0xf]
  %v59 = vld [vmem:[%s1 + $0x48] sm:$0xff]
  %v60 = vld [vmem:[%s1 + $0x50] sm:$0xf]
  %v61 = vld [vmem:[%s1 + $0x54] sm:$0xff]
  %v62 = vld [vmem:[%s1 + $0x5c] sm:$0xf]
  %v63 = vld [vmem:[%s1 + $0x60] sm:$0xff]
  %v64 = vld [vmem:[%s1 + $0x68] sm:$0xf]
  %v65 = vld [vmem:[%s1 + $0x6c] sm:$0xff]
  %v66 = vld [vmem:[%s1 + $0x74] sm:$0xf]
  %v67 = vld [vmem:[%s1 + $0x78] sm:$0xff]
  %v68 = vld [vmem:[%s1 + $0x80] sm:$0xf]
  %v69 = vld [vmem:[%s1 + $0x84] sm:$0xff]
  %v70 = vld [vmem:[%s1 + $0x8c] sm:$0xf]
  %v71 = vld [vmem:[%s1 + $0x90] sm:$0xff]
  %v72 = vld [vmem:[%s1 + $0x98] sm:$0xf]
  %v73 = vld [vmem:[%s1 + $0x9c] sm:$0xff]
  %v74 = vld [vmem:[%s1 + $0xa4] sm:$0xf]
  %v75 = vld [vmem:[%s1 + $0xa8] sm:$0xff]
  %v76 = vld [vmem:[%s1 + $0xb0] sm:$0xf]
  %v77 = vld [vmem:[%s1 + $0xb4] sm:$0xff]
  %v78 = vld [vmem:[%s1 + $0xbc] sm:$0xf]
  %v79 = vld [vmem:[%s2] sm:$0x7]
  %v81 = vlaneseq
  %v82 = vshrl.u32 %v81, 7
  %v83 = vsub.s32 0, %v82
  %v84 = vrot.slane %v79, %v83
  %v85 = vlaneseq
  %v86 = vshrl.u32 %v85, 7
  %v87 = vsub.s32 1, %v86
  %v88 = vrot.slane %v79, %v87
  %v89 = vlaneseq
  %v90 = vshrl.u32 %v89, 7
  %v91 = vsub.s32 2, %v90
  %v92 = vrot.slane %v79, %v91
  %v104 = vunpack.c.l.b16 %v39
  %v105 = vunpack.c.l.b16 %v40
  %v106 = vunpack.c.l.b16 %v41
  %v107 = vunpack.c.l.b16 %v42
  %v108 = vunpack.c.l.b16 %v43
  %v109 = vunpack.c.l.b16 %v44
  %v110 = vunpack.c.l.b16 %v45
  %v111 = vunpack.c.l.b16 %v46
  %v112 = vpack.c.b16 %v105, %v104
  %v113 = vpack.c.b16 %v107, %v106
  %v114 = vpack.c.b16 %v109, %v108
  %v115 = vpack.c.b16 %v111, %v110
  %v152 = vunpack.c.l.b16 %v47
  %v153 = vunpack.c.h.b16 %v47
  %v154 = vunpack.c.l.b16 %v48
  %v155 = vunpack.c.l.b16 %v49
  %v156 = vunpack.c.h.b16 %v49
  %v157 = vunpack.c.l.b16 %v50
  %v158 = vunpack.c.l.b16 %v51
  %v159 = vunpack.c.h.b16 %v51
  %v160 = vunpack.c.l.b16 %v52
  %v161 = vunpack.c.l.b16 %v53
  %v162 = vunpack.c.h.b16 %v53
  %v163 = vunpack.c.l.b16 %v54
  %v164 = vunpack.c.l.b16 %v55
  %v165 = vunpack.c.h.b16 %v55
  %v166 = vunpack.c.l.b16 %v56
  %v167 = vunpack.c.l.b16 %v57
  %v168 = vunpack.c.h.b16 %v57
  %v169 = vunpack.c.l.b16 %v58
  %v170 = vunpack.c.l.b16 %v59
  %v171 = vunpack.c.h.b16 %v59
  %v172 = vunpack.c.l.b16 %v60
  %v173 = vunpack.c.l.b16 %v61
  %v174 = vunpack.c.h.b16 %v61
  %v175 = vunpack.c.l.b16 %v62
  %v176 = vunpack.c.l.b16 %v63
  %v177 = vunpack.c.h.b16 %v63
  %v178 = vunpack.c.l.b16 %v64
  %v179 = vunpack.c.l.b16 %v65
  %v180 = vunpack.c.h.b16 %v65
  %v181 = vunpack.c.l.b16 %v66
  %v182 = vunpack.c.l.b16 %v67
  %v183 = vunpack.c.h.b16 %v67
  %v184 = vunpack.c.l.b16 %v68
  %v185 = vunpack.c.l.b16 %v69
  %v186 = vunpack.c.h.b16 %v69
  %v187 = vunpack.c.l.b16 %v70
  %v188 = vunpack.c.l.b16 %v71
  %v189 = vunpack.c.h.b16 %v71
  %v190 = vunpack.c.l.b16 %v72
  %v191 = vunpack.c.l.b16 %v73
  %v192 = vunpack.c.h.b16 %v73
  %v193 = vunpack.c.l.b16 %v74
  %v194 = vunpack.c.l.b16 %v75
  %v195 = vunpack.c.h.b16 %v75
  %v196 = vunpack.c.l.b16 %v76
  %v197 = vunpack.c.l.b16 %v77
  %v198 = vunpack.c.h.b16 %v77
  %v199 = vunpack.c.l.b16 %v78
  %v200 = vpack.c.b16 %v155, %v152
  %v201 = vpack.c.b16 %v156, %v153
  %v202 = vpack.c.b16 %v157, %v154
  %v203 = vpack.c.b16 %v161, %v158
  %v204 = vpack.c.b16 %v162, %v159
  %v205 = vpack.c.b16 %v163, %v160
  %v206 = vpack.c.b16 %v167, %v164
  %v207 = vpack.c.b16 %v168, %v165
  %v208 = vpack.c.b16 %v169, %v166
  %v209 = vpack.c.b16 %v173, %v170
  %v210 = vpack.c.b16 %v174, %v171
  %v211 = vpack.c.b16 %v175, %v172
  %v212 = vpack.c.b16 %v179, %v176
  %v213 = vpack.c.b16 %v180, %v177
  %v214 = vpack.c.b16 %v181, %v178
  %v215 = vpack.c.b16 %v185, %v182
  %v216 = vpack.c.b16 %v186, %v183
  %v217 = vpack.c.b16 %v187, %v184
  %v218 = vpack.c.b16 %v191, %v188
  %v219 = vpack.c.b16 %v192, %v189
  %v220 = vpack.c.b16 %v193, %v190
  %v221 = vpack.c.b16 %v197, %v194
  %v222 = vpack.c.b16 %v198, %v195
  %v223 = vpack.c.b16 %v199, %v196
  %248 = vmatprep.subr.bf16.mxu0 %v201
  %249 = vmatpush1.bf16.msra.mxu0 %v200
  %250 = vmatprep.subr.bf16.mxu0 %v204
  %251 = vmatpush1.bf16.msra.mxu0 %v203
  %252 = vmatprep.subr.bf16.mxu0 %v207
  %253 = vmatpush1.bf16.msra.mxu0 %v206
  %254 = vmatprep.subr.bf16.mxu0 %v210
  %255 = vmatpush1.bf16.msra.mxu0 %v209
  %256 = vmatprep.subr.bf16.mxu0 %v213
  %257 = vmatpush1.bf16.msra.mxu0 %v212
  %258 = vmatprep.subr.bf16.mxu0 %v216
  %259 = vmatpush1.bf16.msra.mxu0 %v215
  %260 = vmatprep.subr.bf16.mxu0 %v219
  %261 = vmatpush1.bf16.msra.mxu0 %v218
  %262 = vmatprep.subr.bf16.mxu0 %v222
  %263 = vmatpush1.bf16.msra.mxu0 %v221
  %264 = vmatprep.subr.bf16.mxu0 0
  %265 = vmatpush1.bf16.msra.mxu0 0
  %266 = vmatprep.subr.bf16.mxu0 0
  %267 = vmatpush1.bf16.msra.mxu0 0
  %268 = vmatprep.subr.bf16.mxu0 0
  %269 = vmatpush1.bf16.msra.mxu0 0
  %270 = vmatprep.subr.bf16.mxu0 0
  %271 = vmatpush1.bf16.msra.mxu0 0
  %272 = vmatprep.subr.bf16.mxu0 0
  %273 = vmatpush1.bf16.msra.mxu0 0
  %274 = vmatprep.subr.bf16.mxu0 0
  %275 = vmatpush1.bf16.msra.mxu0 0
  %276 = vmatprep.subr.bf16.mxu0 0
  %277 = vmatpush1.bf16.msra.mxu0 0
  %278 = vmatprep.subr.bf16.mxu0 0
  %279 = vmatpush1.bf16.msra.mxu0 0
  %280 = vmatprep.mubr.bf16.mxu0 0
  %281 = vmatmul.mubr.bf16.gmra.mrb[0].mxu0 %v112
  %v282 = vpop.f32.mrb[0].mxu0
  %v283 = vadd.f32 %v84, %v282
  %v284 = vpop.f32.mrb[0].mxu0
  %v285 = vadd.f32 %v88, %v284
  %v286 = vpop.f32.mrb[0].mxu0
  %v287 = vadd.f32 %v84, %v286
  %v288 = vpop.f32.mrb[0].mxu0
  %v289 = vadd.f32 %v88, %v288
  %290 = vmatprep.mubr.bf16.mxu0 0
  %291 = vmatmul.mubr.bf16.gmra.mrb[0].mxu0 %v113
  %v292 = vpop.f32.mrb[0].mxu0
  %v293 = vadd.f32 %v84, %v292
  %v294 = vpop.f32.mrb[0].mxu0
  %v295 = vadd.f32 %v88, %v294
  %v296 = vpop.f32.mrb[0].mxu0
  %v297 = vadd.f32 %v84, %v296
  %v298 = vpop.f32.mrb[0].mxu0
  %v299 = vadd.f32 %v88, %v298
  %300 = vmatprep.mubr.bf16.mxu0 0
  %301 = vmatmul.mubr.bf16.gmra.mrb[0].mxu0 %v114
  %v302 = vpop.f32.mrb[0].mxu0
  %v303 = vadd.f32 %v84, %v302
  %v304 = vpop.f32.mrb[0].mxu0
  %v305 = vadd.f32 %v88, %v304
  %v306 = vpop.f32.mrb[0].mxu0
  %v307 = vadd.f32 %v84, %v306
  %v308 = vpop.f32.mrb[0].mxu0
  %v309 = vadd.f32 %v88, %v308
  %310 = vmatprep.mubr.bf16.mxu0 0
  %311 = vmatmul.mubr.bf16.gmra.mrb[0].mxu0 %v115
  %v312 = vpop.f32.mrb[0].mxu0
  %v313 = vadd.f32 %v84, %v312
  %v314 = vpop.f32.mrb[0].mxu0
  %v315 = vadd.f32 %v88, %v314
  %v316 = vpop.f32.mrb[0].mxu0
  %v317 = vadd.f32 %v84, %v316
  %v318 = vpop.f32.mrb[0].mxu0
  %v319 = vadd.f32 %v88, %v318
  %320 = vdwg.mxu0
  %321 = vmatprep.subr.bf16.mxu0 0
  %322 = vmatpush1.bf16.msra.mxu0 %v202
  %323 = vmatprep.subr.bf16.mxu0 0
  %324 = vmatpush1.bf16.msra.mxu0 %v205
  %325 = vmatprep.subr.bf16.mxu0 0
  %326 = vmatpush1.bf16.msra.mxu0 %v208
  %327 = vmatprep.subr.bf16.mxu0 0
  %328 = vmatpush1.bf16.msra.mxu0 %v211
  %329 = vmatprep.subr.bf16.mxu0 0
  %330 = vmatpush1.bf16.msra.mxu0 %v214
  %331 = vmatprep.subr.bf16.mxu0 0
  %332 = vmatpush1.bf16.msra.mxu0 %v217
  %333 = vmatprep.subr.bf16.mxu0 0
  %334 = vmatpush1.bf16.msra.mxu0 %v220
  %335 = vmatprep.subr.bf16.mxu0 0
  %336 = vmatpush1.bf16.msra.mxu0 %v223
  %337 = vmatprep.subr.bf16.mxu0 0
  %338 = vmatpush1.bf16.msra.mxu0 0
  %339 = vmatprep.subr.bf16.mxu0 0
  %340 = vmatpush1.bf16.msra.mxu0 0
  %341 = vmatprep.subr.bf16.mxu0 0
  %342 = vmatpush1.bf16.msra.mxu0 0
  %343 = vmatprep.subr.bf16.mxu0 0
  %344 = vmatpush1.bf16.msra.mxu0 0
  %345 = vmatprep.subr.bf16.mxu0 0
  %346 = vmatpush1.bf16.msra.mxu0 0
  %347 = vmatprep.subr.bf16.mxu0 0
  %348 = vmatpush1.bf16.msra.mxu0 0
  %349 = vmatprep.subr.bf16.mxu0 0
  %350 = vmatpush1.bf16.msra.mxu0 0
  %351 = vmatprep.subr.bf16.mxu0 0
  %352 = vmatpush1.bf16.msra.mxu0 0
  %353 = vmatprep.mubr.bf16.mxu0 0
  %354 = vmatmul.mubr.bf16.gmra.mrb[0].mxu0 %v112
  %v355 = vpop.f32.mrb[0].mxu0
  %v356 = vadd.f32 %v92, %v355
  %v357 = vpop.f32.mrb[0].mxu0
  %v358 = vpop.f32.mrb[0].mxu0
  %v359 = vadd.f32 %v92, %v358
  %v360 = vpop.f32.mrb[0].mxu0
  %361 = vmatprep.mubr.bf16.mxu0 0
  %362 = vmatmul.mubr.bf16.gmra.mrb[0].mxu0 %v113
  %v363 = vpop.f32.mrb[0].mxu0
  %v364 = vadd.f32 %v92, %v363
  %v365 = vpop.f32.mrb[0].mxu0
  %v366 = vpop.f32.mrb[0].mxu0
  %v367 = vadd.f32 %v92, %v366
  %v368 = vpop.f32.mrb[0].mxu0
  %369 = vmatprep.mubr.bf16.mxu0 0
  %370 = vmatmul.mubr.bf16.gmra.mrb[0].mxu0 %v114
  %v371 = vpop.f32.mrb[0].mxu0
  %v372 = vadd.f32 %v92, %v371
  %v373 = vpop.f32.mrb[0].mxu0
  %v374 = vpop.f32.mrb[0].mxu0
  %v375 = vadd.f32 %v92, %v374
  %v376 = vpop.f32.mrb[0].mxu0
  %377 = vmatprep.mubr.bf16.mxu0 0
  %378 = vmatmul.mubr.bf16.gmra.mrb[0].mxu0 %v115
  %v379 = vpop.f32.mrb[0].mxu0
  %v380 = vadd.f32 %v92, %v379
  %v381 = vpop.f32.mrb[0].mxu0
  %v382 = vpop.f32.mrb[0].mxu0
  %v383 = vadd.f32 %v92, %v382
  %v384 = vpop.f32.mrb[0].mxu0
  %385 = vdwg.mxu0
  %386 = vst [vmem:[#allocation2] sm:$0xff] %v283
  %387 = vst [vmem:[#allocation2 + $0x8] sm:$0xff] %v285
  %388 = vst [vmem:[#allocation2 + $0x10] sm:$0xff] %v356
  %389 = vst [vmem:[#allocation2 + $0x18] sm:$0xff] %v287
  %390 = vst [vmem:[#allocation2 + $0x20] sm:$0xff] %v289
  %391 = vst [vmem:[#allocation2 + $0x28] sm:$0xff] %v359
  %392 = vst [vmem:[#allocation2 + $0x30] sm:$0xff] %v293
  %393 = vst [vmem:[#allocation2 + $0x38] sm:$0xff] %v295
  %394 = vst [vmem:[#allocation2 + $0x40] sm:$0xff] %v364
  %395 = vst [vmem:[#allocation2 + $0x48] sm:$0xff] %v297
  %396 = vst [vmem:[#allocation2 + $0x50] sm:$0xff] %v299
  %397 = vst [vmem:[#allocation2 + $0x58] sm:$0xff] %v367
  %398 = vst [vmem:[#allocation2 + $0x60] sm:$0xff] %v303
  %399 = vst [vmem:[#allocation2 + $0x68] sm:$0xff] %v305
  %400 = vst [vmem:[#allocation2 + $0x70] sm:$0xff] %v372
  %401 = vst [vmem:[#allocation2 + $0x78] sm:$0xff] %v307
  %402 = vst [vmem:[#allocation2 + $0x80] sm:$0xff] %v309
  %403 = vst [vmem:[#allocation2 + $0x88] sm:$0xff] %v375
  %404 = vst [vmem:[#allocation2 + $0x90] sm:$0xff] %v313
  %405 = vst [vmem:[#allocation2 + $0x98] sm:$0xff] %v315
  %406 = vst [vmem:[#allocation2 + $0xa0] sm:$0xff] %v380
  %407 = vst [vmem:[#allocation2 + $0xa8] sm:$0xff] %v317
  %408 = vst [vmem:[#allocation2 + $0xb0] sm:$0xff] %v319
  %409 = vst [vmem:[#allocation2 + $0xb8] sm:$0xff] %v383
  %v410 = vld [vmem:[%s7] sm:$0xff]
  %v411 = vld [vmem:[%s7 + $0x8] sm:$0xf]
  %v412 = vld [vmem:[%s7 + $0xc] sm:$0xff]
  %v413 = vld [vmem:[%s7 + $0x14] sm:$0xf]
  %v414 = vld [vmem:[%s7 + $0x18] sm:$0xff]
  %v415 = vld [vmem:[%s7 + $0x20] sm:$0xf]
  %v416 = vld [vmem:[%s7 + $0x24] sm:$0xff]
  %v417 = vld [vmem:[%s7 + $0x2c] sm:$0xf]
  %v418 = vld [vmem:[%s7 + $0x30] sm:$0xff]
  %v419 = vld [vmem:[%s7 + $0x38] sm:$0xf]
  %v420 = vld [vmem:[%s7 + $0x3c] sm:$0xff]
  %v421 = vld [vmem:[%s7 + $0x44] sm:$0xf]
  %v422 = vld [vmem:[%s7 + $0x48] sm:$0xff]
  %v423 = vld [vmem:[%s7 + $0x50] sm:$0xf]
  %v424 = vld [vmem:[%s7 + $0x54] sm:$0xff]
  %v425 = vld [vmem:[%s7 + $0x5c] sm:$0xf]
  %v426 = vld [vmem:[%s7 + $0x60] sm:$0xff]
  %v427 = vld [vmem:[%s7 + $0x68] sm:$0xf]
  %v428 = vld [vmem:[%s7 + $0x6c] sm:$0xff]
  %v429 = vld [vmem:[%s7 + $0x74] sm:$0xf]
  %v430 = vld [vmem:[%s7 + $0x78] sm:$0xff]
  %v431 = vld [vmem:[%s7 + $0x80] sm:$0xf]
  %v432 = vld [vmem:[%s7 + $0x84] sm:$0xff]
  %v433 = vld [vmem:[%s7 + $0x8c] sm:$0xf]
  %v434 = vld [vmem:[%s7 + $0x90] sm:$0xff]
  %v435 = vld [vmem:[%s7 + $0x98] sm:$0xf]
  %v436 = vld [vmem:[%s7 + $0x9c] sm:$0xff]
  %v437 = vld [vmem:[%s7 + $0xa4] sm:$0xf]
  %v438 = vld [vmem:[%s7 + $0xa8] sm:$0xff]
  %v439 = vld [vmem:[%s7 + $0xb0] sm:$0xf]
  %v440 = vld [vmem:[%s7 + $0xb4] sm:$0xff]
  %v441 = vld [vmem:[%s7 + $0xbc] sm:$0xf]
  %v442 = vld [vmem:[%s8] sm:$0x7]
  %v444 = vlaneseq
  %v445 = vshrl.u32 %v444, 7
  %v446 = vsub.s32 0, %v445
  %v447 = vrot.slane %v442, %v446
  %v448 = vlaneseq
  %v449 = vshrl.u32 %v448, 7
  %v450 = vsub.s32 1, %v449
  %v451 = vrot.slane %v442, %v450
  %v452 = vlaneseq
  %v453 = vshrl.u32 %v452, 7
  %v454 = vsub.s32 2, %v453
  %v455 = vrot.slane %v442, %v454
  %v491 = vunpack.c.l.b16 %v410
  %v492 = vunpack.c.h.b16 %v410
  %v493 = vunpack.c.l.b16 %v411
  %v494 = vunpack.c.l.b16 %v412
  %v495 = vunpack.c.h.b16 %v412
  %v496 = vunpack.c.l.b16 %v413
  %v497 = vunpack.c.l.b16 %v414
  %v498 = vunpack.c.h.b16 %v414
  %v499 = vunpack.c.l.b16 %v415
  %v500 = vunpack.c.l.b16 %v416
  %v501 = vunpack.c.h.b16 %v416
  %v502 = vunpack.c.l.b16 %v417
  %v503 = vunpack.c.l.b16 %v418
  %v504 = vunpack.c.h.b16 %v418
  %v505 = vunpack.c.l.b16 %v419
  %v506 = vunpack.c.l.b16 %v420
  %v507 = vunpack.c.h.b16 %v420
  %v508 = vunpack.c.l.b16 %v421
  %v509 = vunpack.c.l.b16 %v422
  %v510 = vunpack.c.h.b16 %v422
  %v511 = vunpack.c.l.b16 %v423
  %v512 = vunpack.c.l.b16 %v424
  %v513 = vunpack.c.h.b16 %v424
  %v514 = vunpack.c.l.b16 %v425
  %v515 = vunpack.c.l.b16 %v426
  %v516 = vunpack.c.h.b16 %v426
  %v517 = vunpack.c.l.b16 %v427
  %v518 = vunpack.c.l.b16 %v428
  %v519 = vunpack.c.h.b16 %v428
  %v520 = vunpack.c.l.b16 %v429
  %v521 = vunpack.c.l.b16 %v430
  %v522 = vunpack.c.h.b16 %v430
  %v523 = vunpack.c.l.b16 %v431
  %v524 = vunpack.c.l.b16 %v432
  %v525 = vunpack.c.h.b16 %v432
  %v526 = vunpack.c.l.b16 %v433
  %v527 = vunpack.c.l.b16 %v434
  %v528 = vunpack.c.h.b16 %v434
  %v529 = vunpack.c.l.b16 %v435
  %v530 = vunpack.c.l.b16 %v436
  %v531 = vunpack.c.h.b16 %v436
  %v532 = vunpack.c.l.b16 %v437
  %v533 = vunpack.c.l.b16 %v438
  %v534 = vunpack.c.h.b16 %v438
  %v535 = vunpack.c.l.b16 %v439
  %v536 = vunpack.c.l.b16 %v440
  %v537 = vunpack.c.h.b16 %v440
  %v538 = vunpack.c.l.b16 %v441
  %v539 = vpack.c.b16 %v494, %v491
  %v540 = vpack.c.b16 %v495, %v492
  %v541 = vpack.c.b16 %v496, %v493
  %v542 = vpack.c.b16 %v500, %v497
  %v543 = vpack.c.b16 %v501, %v498
  %v544 = vpack.c.b16 %v502, %v499
  %v545 = vpack.c.b16 %v506, %v503
  %v546 = vpack.c.b16 %v507, %v504
  %v547 = vpack.c.b16 %v508, %v505
  %v548 = vpack.c.b16 %v512, %v509
  %v549 = vpack.c.b16 %v513, %v510
  %v550 = vpack.c.b16 %v514, %v511
  %v551 = vpack.c.b16 %v518, %v515
  %v552 = vpack.c.b16 %v519, %v516
  %v553 = vpack.c.b16 %v520, %v517
  %v554 = vpack.c.b16 %v524, %v521
  %v555 = vpack.c.b16 %v525, %v522
  %v556 = vpack.c.b16 %v526, %v523
  %v557 = vpack.c.b16 %v530, %v527
  %v558 = vpack.c.b16 %v531, %v528
  %v559 = vpack.c.b16 %v532, %v529
  %v560 = vpack.c.b16 %v536, %v533
  %v561 = vpack.c.b16 %v537, %v534
  %v562 = vpack.c.b16 %v538, %v535
  %587 = vmatprep.subr.bf16.mxu0 %v540
  %588 = vmatpush1.bf16.msra.mxu0 %v539
  %589 = vmatprep.subr.bf16.mxu0 %v543
  %590 = vmatpush1.bf16.msra.mxu0 %v542
  %591 = vmatprep.subr.bf16.mxu0 %v546
  %592 = vmatpush1.bf16.msra.mxu0 %v545
  %593 = vmatprep.subr.bf16.mxu0 %v549
  %594 = vmatpush1.bf16.msra.mxu0 %v548
  %595 = vmatprep.subr.bf16.mxu0 %v552
  %596 = vmatpush1.bf16.msra.mxu0 %v551
  %597 = vmatprep.subr.bf16.mxu0 %v555
  %598 = vmatpush1.bf16.msra.mxu0 %v554
  %599 = vmatprep.subr.bf16.mxu0 %v558
  %600 = vmatpush1.bf16.msra.mxu0 %v557
  %601 = vmatprep.subr.bf16.mxu0 %v561
  %602 = vmatpush1.bf16.msra.mxu0 %v560
  %603 = vmatprep.subr.bf16.mxu0 0
  %604 = vmatpush1.bf16.msra.mxu0 0
  %605 = vmatprep.subr.bf16.mxu0 0
  %606 = vmatpush1.bf16.msra.mxu0 0
  %607 = vmatprep.subr.bf16.mxu0 0
  %608 = vmatpush1.bf16.msra.mxu0 0
  %609 = vmatprep.subr.bf16.mxu0 0
  %610 = vmatpush1.bf16.msra.mxu0 0
  %611 = vmatprep.subr.bf16.mxu0 0
  %612 = vmatpush1.bf16.msra.mxu0 0
  %613 = vmatprep.subr.bf16.mxu0 0
  %614 = vmatpush1.bf16.msra.mxu0 0
  %615 = vmatprep.subr.bf16.mxu0 0
  %616 = vmatpush1.bf16.msra.mxu0 0
  %617 = vmatprep.subr.bf16.mxu0 0
  %618 = vmatpush1.bf16.msra.mxu0 0
  %619 = vmatprep.mubr.bf16.mxu0 0
  %620 = vmatmul.mubr.bf16.gmra.mrb[0].mxu0 0
  %v621 = vpop.f32.mrb[0].mxu0
  %v622 = vadd.f32 %v447, %v621
  %v623 = vpop.f32.mrb[0].mxu0
  %v624 = vadd.f32 %v451, %v623
  %v625 = vpop.f32.mrb[0].mxu0
  %v626 = vpop.f32.mrb[0].mxu0
  %627 = vdwg.mxu0
  %628 = vmatprep.subr.bf16.mxu0 0
  %629 = vmatpush1.bf16.msra.mxu0 %v541
  %630 = vmatprep.subr.bf16.mxu0 0
  %631 = vmatpush1.bf16.msra.mxu0 %v544
  %632 = vmatprep.subr.bf16.mxu0 0
  %633 = vmatpush1.bf16.msra.mxu0 %v547
  %634 = vmatprep.subr.bf16.mxu0 0
  %635 = vmatpush1.bf16.msra.mxu0 %v550
  %636 = vmatprep.subr.bf16.mxu0 0
  %637 = vmatpush1.bf16.msra.mxu0 %v553
  %638 = vmatprep.subr.bf16.mxu0 0
  %639 = vmatpush1.bf16.msra.mxu0 %v556
  %640 = vmatprep.subr.bf16.mxu0 0
  %641 = vmatpush1.bf16.msra.mxu0 %v559
  %642 = vmatprep.subr.bf16.mxu0 0
  %643 = vmatpush1.bf16.msra.mxu0 %v562
  %644 = vmatprep.subr.bf16.mxu0 0
  %645 = vmatpush1.bf16.msra.mxu0 0
  %646 = vmatprep.subr.bf16.mxu0 0
  %647 = vmatpush1.bf16.msra.mxu0 0
  %648 = vmatprep.subr.bf16.mxu0 0
  %649 = vmatpush1.bf16.msra.mxu0 0
  %650 = vmatprep.subr.bf16.mxu0 0
  %651 = vmatpush1.bf16.msra.mxu0 0
  %652 = vmatprep.subr.bf16.mxu0 0
  %653 = vmatpush1.bf16.msra.mxu0 0
  %654 = vmatprep.subr.bf16.mxu0 0
  %655 = vmatpush1.bf16.msra.mxu0 0
  %656 = vmatprep.subr.bf16.mxu0 0
  %657 = vmatpush1.bf16.msra.mxu0 0
  %658 = vmatprep.subr.bf16.mxu0 0
  %659 = vmatpush1.bf16.msra.mxu0 0
  %660 = vmatprep.mubr.bf16.mxu0 0
  %661 = vmatmul.mubr.bf16.gmra.mrb[0].mxu0 0
  %v662 = vpop.f32.mrb[0].mxu0
  %v663 = vadd.f32 %v455, %v662
  %v664 = vpop.f32.mrb[0].mxu0
  %v665 = vpop.f32.mrb[0].mxu0
  %v666 = vpop.f32.mrb[0].mxu0
  %667 = vdwg.mxu0
  %v668 = vld [vmem:[%s3] sm:$0xff]
  %v669 = vld [vmem:[%s3 + $0x8] sm:$0xf]
  %v670 = vld [vmem:[%s3 + $0xc] sm:$0xff]
  %v671 = vld [vmem:[%s3 + $0x14] sm:$0xf]
  %v672 = vld [vmem:[%s3 + $0x18] sm:$0xff]
  %v673 = vld [vmem:[%s3 + $0x20] sm:$0xf]
  %v674 = vld [vmem:[%s3 + $0x24] sm:$0xff]
  %v675 = vld [vmem:[%s3 + $0x2c] sm:$0xf]
  %v676 = vld [vmem:[%s3 + $0x30] sm:$0xff]
  %v677 = vld [vmem:[%s3 + $0x38] sm:$0xf]
  %v678 = vld [vmem:[%s3 + $0x3c] sm:$0xff]
  %v679 = vld [vmem:[%s3 + $0x44] sm:$0xf]
  %v680 = vld [vmem:[%s3 + $0x48] sm:$0xff]
  %v681 = vld [vmem:[%s3 + $0x50] sm:$0xf]
  %v682 = vld [vmem:[%s3 + $0x54] sm:$0xff]
  %v683 = vld [vmem:[%s3 + $0x5c] sm:$0xf]
  %v684 = vld [vmem:[%s3 + $0x60] sm:$0xff]
  %v685 = vld [vmem:[%s3 + $0x68] sm:$0xf]
  %v686 = vld [vmem:[%s3 + $0x6c] sm:$0xff]
  %v687 = vld [vmem:[%s3 + $0x74] sm:$0xf]
  %v688 = vld [vmem:[%s3 + $0x78] sm:$0xff]
  %v689 = vld [vmem:[%s3 + $0x80] sm:$0xf]
  %v690 = vld [vmem:[%s3 + $0x84] sm:$0xff]
  %v691 = vld [vmem:[%s3 + $0x8c] sm:$0xf]
  %v692 = vld [vmem:[%s3 + $0x90] sm:$0xff]
  %v693 = vld [vmem:[%s3 + $0x98] sm:$0xf]
  %v694 = vld [vmem:[%s3 + $0x9c] sm:$0xff]
  %v695 = vld [vmem:[%s3 + $0xa4] sm:$0xf]
  %v696 = vld [vmem:[%s3 + $0xa8] sm:$0xff]
  %v697 = vld [vmem:[%s3 + $0xb0] sm:$0xf]
  %v698 = vld [vmem:[%s3 + $0xb4] sm:$0xff]
  %v699 = vld [vmem:[%s3 + $0xbc] sm:$0xf]
  %v700 = vld [vmem:[%s4] sm:$0x7]
  %v702 = vlaneseq
  %v703 = vshrl.u32 %v702, 7
  %v704 = vsub.s32 0, %v703
  %v705 = vrot.slane %v700, %v704
  %v706 = vlaneseq
  %v707 = vshrl.u32 %v706, 7
  %v708 = vsub.s32 1, %v707
  %v709 = vrot.slane %v700, %v708
  %v710 = vlaneseq
  %v711 = vshrl.u32 %v710, 7
  %v712 = vsub.s32 2, %v711
  %v713 = vrot.slane %v700, %v712
  %v749 = vunpack.c.l.b16 %v668
  %v750 = vunpack.c.h.b16 %v668
  %v751 = vunpack.c.l.b16 %v669
  %v752 = vunpack.c.l.b16 %v670
  %v753 = vunpack.c.h.b16 %v670
  %v754 = vunpack.c.l.b16 %v671
  %v755 = vunpack.c.l.b16 %v672
  %v756 = vunpack.c.h.b16 %v672
  %v757 = vunpack.c.l.b16 %v673
  %v758 = vunpack.c.l.b16 %v674
  %v759 = vunpack.c.h.b16 %v674
  %v760 = vunpack.c.l.b16 %v675
  %v761 = vunpack.c.l.b16 %v676
  %v762 = vunpack.c.h.b16 %v676
  %v763 = vunpack.c.l.b16 %v677
  %v764 = vunpack.c.l.b16 %v678
  %v765 = vunpack.c.h.b16 %v678
  %v766 = vunpack.c.l.b16 %v679
  %v767 = vunpack.c.l.b16 %v680
  %v768 = vunpack.c.h.b16 %v680
  %v769 = vunpack.c.l.b16 %v681
  %v770 = vunpack.c.l.b16 %v682
  %v771 = vunpack.c.h.b16 %v682
  %v772 = vunpack.c.l.b16 %v683
  %v773 = vunpack.c.l.b16 %v684
  %v774 = vunpack.c.h.b16 %v684
  %v775 = vunpack.c.l.b16 %v685
  %v776 = vunpack.c.l.b16 %v686
  %v777 = vunpack.c.h.b16 %v686
  %v778 = vunpack.c.l.b16 %v687
  %v779 = vunpack.c.l.b16 %v688
  %v780 = vunpack.c.h.b16 %v688
  %v781 = vunpack.c.l.b16 %v689
  %v782 = vunpack.c.l.b16 %v690
  %v783 = vunpack.c.h.b16 %v690
  %v784 = vunpack.c.l.b16 %v691
  %v785 = vunpack.c.l.b16 %v692
  %v786 = vunpack.c.h.b16 %v692
  %v787 = vunpack.c.l.b16 %v693
  %v788 = vunpack.c.l.b16 %v694
  %v789 = vunpack.c.h.b16 %v694
  %v790 = vunpack.c.l.b16 %v695
  %v791 = vunpack.c.l.b16 %v696
  %v792 = vunpack.c.h.b16 %v696
  %v793 = vunpack.c.l.b16 %v697
  %v794 = vunpack.c.l.b16 %v698
  %v795 = vunpack.c.h.b16 %v698
  %v796 = vunpack.c.l.b16 %v699
  %v797 = vpack.c.b16 %v752, %v749
  %v798 = vpack.c.b16 %v753, %v750
  %v799 = vpack.c.b16 %v754, %v751
  %v800 = vpack.c.b16 %v758, %v755
  %v801 = vpack.c.b16 %v759, %v756
  %v802 = vpack.c.b16 %v760, %v757
  %v803 = vpack.c.b16 %v764, %v761
  %v804 = vpack.c.b16 %v765, %v762
  %v805 = vpack.c.b16 %v766, %v763
  %v806 = vpack.c.b16 %v770, %v767
  %v807 = vpack.c.b16 %v771, %v768
  %v808 = vpack.c.b16 %v772, %v769
  %v809 = vpack.c.b16 %v776, %v773
  %v810 = vpack.c.b16 %v777, %v774
  %v811 = vpack.c.b16 %v778, %v775
  %v812 = vpack.c.b16 %v782, %v779
  %v813 = vpack.c.b16 %v783, %v780
  %v814 = vpack.c.b16 %v784, %v781
  %v815 = vpack.c.b16 %v788, %v785
  %v816 = vpack.c.b16 %v789, %v786
  %v817 = vpack.c.b16 %v790, %v787
  %v818 = vpack.c.b16 %v794, %v791
  %v819 = vpack.c.b16 %v795, %v792
  %v820 = vpack.c.b16 %v796, %v793
  %845 = vmatprep.subr.bf16.mxu0 %v798
  %846 = vmatpush1.bf16.msra.mxu0 %v797
  %847 = vmatprep.subr.bf16.mxu0 %v801
  %848 = vmatpush1.bf16.msra.mxu0 %v800
  %849 = vmatprep.subr.bf16.mxu0 %v804
  %850 = vmatpush1.bf16.msra.mxu0 %v803
  %851 = vmatprep.subr.bf16.mxu0 %v807
  %852 = vmatpush1.bf16.msra.mxu0 %v806
  %853 = vmatprep.subr.bf16.mxu0 %v810
  %854 = vmatpush1.bf16.msra.mxu0 %v809
  %855 = vmatprep.subr.bf16.mxu0 %v813
  %856 = vmatpush1.bf16.msra.mxu0 %v812
  %857 = vmatprep.subr.bf16.mxu0 %v816
  %858 = vmatpush1.bf16.msra.mxu0 %v815
  %859 = vmatprep.subr.bf16.mxu0 %v819
  %860 = vmatpush1.bf16.msra.mxu0 %v818
  %861 = vmatprep.subr.bf16.mxu0 0
  %862 = vmatpush1.bf16.msra.mxu0 0
  %863 = vmatprep.subr.bf16.mxu0 0
  %864 = vmatpush1.bf16.msra.mxu0 0
  %865 = vmatprep.subr.bf16.mxu0 0
  %866 = vmatpush1.bf16.msra.mxu0 0
  %867 = vmatprep.subr.bf16.mxu0 0
  %868 = vmatpush1.bf16.msra.mxu0 0
  %869 = vmatprep.subr.bf16.mxu0 0
  %870 = vmatpush1.bf16.msra.mxu0 0
  %871 = vmatprep.subr.bf16.mxu0 0
  %872 = vmatpush1.bf16.msra.mxu0 0
  %873 = vmatprep.subr.bf16.mxu0 0
  %874 = vmatpush1.bf16.msra.mxu0 0
  %875 = vmatprep.subr.bf16.mxu0 0
  %876 = vmatpush1.bf16.msra.mxu0 0
  %877 = vmatprep.mubr.bf16.mxu0 0
  %878 = vmatmul.mubr.bf16.gmra.mrb[0].mxu0 0
  %v879 = vpop.f32.mrb[0].mxu0
  %v880 = vadd.f32 %v705, %v879
  %v881 = vpop.f32.mrb[0].mxu0
  %v882 = vadd.f32 %v709, %v881
  %v883 = vpop.f32.mrb[0].mxu0
  %v884 = vpop.f32.mrb[0].mxu0
  %885 = vdwg.mxu0
  %886 = vmatprep.subr.bf16.mxu0 0
  %887 = vmatpush1.bf16.msra.mxu0 %v799
  %888 = vmatprep.subr.bf16.mxu0 0
  %889 = vmatpush1.bf16.msra.mxu0 %v802
  %890 = vmatprep.subr.bf16.mxu0 0
  %891 = vmatpush1.bf16.msra.mxu0 %v805
  %892 = vmatprep.subr.bf16.mxu0 0
  %893 = vmatpush1.bf16.msra.mxu0 %v808
  %894 = vmatprep.subr.bf16.mxu0 0
  %895 = vmatpush1.bf16.msra.mxu0 %v811
  %896 = vmatprep.subr.bf16.mxu0 0
  %897 = vmatpush1.bf16.msra.mxu0 %v814
  %898 = vmatprep.subr.bf16.mxu0 0
  %899 = vmatpush1.bf16.msra.mxu0 %v817
  %900 = vmatprep.subr.bf16.mxu0 0
  %901 = vmatpush1.bf16.msra.mxu0 %v820
  %902 = vmatprep.subr.bf16.mxu0 0
  %903 = vmatpush1.bf16.msra.mxu0 0
  %904 = vmatprep.subr.bf16.mxu0 0
  %905 = vmatpush1.bf16.msra.mxu0 0
  %906 = vmatprep.subr.bf16.mxu0 0
  %907 = vmatpush1.bf16.msra.mxu0 0
  %908 = vmatprep.subr.bf16.mxu0 0
  %909 = vmatpush1.bf16.msra.mxu0 0
  %910 = vmatprep.subr.bf16.mxu0 0
  %911 = vmatpush1.bf16.msra.mxu0 0
  %912 = vmatprep.subr.bf16.mxu0 0
  %913 = vmatpush1.bf16.msra.mxu0 0
  %914 = vmatprep.subr.bf16.mxu0 0
  %915 = vmatpush1.bf16.msra.mxu0 0
  %916 = vmatprep.subr.bf16.mxu0 0
  %917 = vmatpush1.bf16.msra.mxu0 0
  %918 = vmatprep.mubr.bf16.mxu0 0
  %919 = vmatmul.mubr.bf16.gmra.mrb[0].mxu0 0
  %v920 = vpop.f32.mrb[0].mxu0
  %v921 = vadd.f32 %v713, %v920
  %v922 = vpop.f32.mrb[0].mxu0
  %v923 = vpop.f32.mrb[0].mxu0
  %v924 = vpop.f32.mrb[0].mxu0
  %925 = vdwg.mxu0
  %v926 = vld [vmem:[#allocation2] sm:$0xff]
  %v927 = vld [vmem:[#allocation2 + $0x8] sm:$0xff]
  %v928 = vld [vmem:[#allocation2 + $0x10] sm:$0xff]
  %v929 = vadd.f32 %v926, %v880
  %v930 = vxor.u32 %v929, 2147483648
  %v931 = vmul.f32 %v930, 1.442695
  %v932 = vpow.pop %v931
  %v933 = vadd.f32 %v932, 1.0
  %v934 = vrcp.pop %v933
  %v935 = vmul.f32 1.0, %v934
  %v936 = vadd.f32 %v927, %v882
  %v937 = vxor.u32 %v936, 2147483648
  %v938 = vmul.f32 %v937, 1.442695
  %v939 = vpow.pop %v938
  %v940 = vadd.f32 %v939, 1.0
  %v941 = vrcp.pop %v940
  %v942 = vmul.f32 1.0, %v941
  %v943 = vmul.f32 %v935, %v921
  %v944 = vadd.f32 %v928, %v943
  %v945 = vtanh.pop %v944
  %v946 = vsub.f32 1.0, %v942
  %v947 = vmul.f32 %v946, %v945
  %v948 = vmul.f32 %v942, 0.0
  %v949 = vadd.f32 %v947, %v948
  %v950 = vpack.c.bf16 %v949, %v949
  %v951 = vld [vmem:[%s5] sm:$0xff]
  %v952 = vld [vmem:[%s5 + $0x8] sm:$0xf]
  %v953 = vld [vmem:[%s5 + $0xc] sm:$0xff]
  %v954 = vld [vmem:[%s5 + $0x14] sm:$0xf]
  %v955 = vld [vmem:[%s5 + $0x18] sm:$0xff]
  %v956 = vld [vmem:[%s5 + $0x20] sm:$0xf]
  %v957 = vld [vmem:[%s5 + $0x24] sm:$0xff]
  %v958 = vld [vmem:[%s5 + $0x2c] sm:$0xf]
  %v959 = vld [vmem:[%s5 + $0x30] sm:$0xff]
  %v960 = vld [vmem:[%s5 + $0x38] sm:$0xf]
  %v961 = vld [vmem:[%s5 + $0x3c] sm:$0xff]
  %v962 = vld [vmem:[%s5 + $0x44] sm:$0xf]
  %v963 = vld [vmem:[%s5 + $0x48] sm:$0xff]
  %v964 = vld [vmem:[%s5 + $0x50] sm:$0xf]
  %v965 = vld [vmem:[%s5 + $0x54] sm:$0xff]
  %v966 = vld [vmem:[%s5 + $0x5c] sm:$0xf]
  %v967 = vld [vmem:[%s5 + $0x60] sm:$0xff]
  %v968 = vld [vmem:[%s5 + $0x68] sm:$0xf]
  %v969 = vld [vmem:[%s5 + $0x6c] sm:$0xff]
  %v970 = vld [vmem:[%s5 + $0x74] sm:$0xf]
  %v971 = vld [vmem:[%s5 + $0x78] sm:$0xff]
  %v972 = vld [vmem:[%s5 + $0x80] sm:$0xf]
  %v973 = vld [vmem:[%s5 + $0x84] sm:$0xff]
  %v974 = vld [vmem:[%s5 + $0x8c] sm:$0xf]
  %v975 = vld [vmem:[%s5 + $0x90] sm:$0xff]
  %v976 = vld [vmem:[%s5 + $0x98] sm:$0xf]
  %v977 = vld [vmem:[%s5 + $0x9c] sm:$0xff]
  %v978 = vld [vmem:[%s5 + $0xa4] sm:$0xf]
  %v979 = vld [vmem:[%s5 + $0xa8] sm:$0xff]
  %v980 = vld [vmem:[%s5 + $0xb0] sm:$0xf]
  %v981 = vld [vmem:[%s5 + $0xb4] sm:$0xff]
  %v982 = vld [vmem:[%s5 + $0xbc] sm:$0xf]
  %v983 = vld [vmem:[%s6] sm:$0x7]
  %v985 = vlaneseq
  %v986 = vshrl.u32 %v985, 7
  %v987 = vsub.s32 0, %v986
  %v988 = vrot.slane %v983, %v987
  %v989 = vlaneseq
  %v990 = vshrl.u32 %v989, 7
  %v991 = vsub.s32 1, %v990
  %v992 = vrot.slane %v983, %v991
  %v993 = vlaneseq
  %v994 = vshrl.u32 %v993, 7
  %v995 = vsub.s32 2, %v994
  %v996 = vrot.slane %v983, %v995
  %v1032 = vunpack.c.l.b16 %v951
  %v1033 = vunpack.c.h.b16 %v951
  %v1034 = vunpack.c.l.b16 %v952
  %v1035 = vunpack.c.l.b16 %v953
  %v1036 = vunpack.c.h.b16 %v953
  %v1037 = vunpack.c.l.b16 %v954
  %v1038 = vunpack.c.l.b16 %v955
  %v1039 = vunpack.c.h.b16 %v955
  %v1040 = vunpack.c.l.b16 %v956
  %v1041 = vunpack.c.l.b16 %v957
  %v1042 = vunpack.c.h.b16 %v957
  %v1043 = vunpack.c.l.b16 %v958
  %v1044 = vunpack.c.l.b16 %v959
  %v1045 = vunpack.c.h.b16 %v959
  %v1046 = vunpack.c.l.b16 %v960
  %v1047 = vunpack.c.l.b16 %v961
  %v1048 = vunpack.c.h.b16 %v961
  %v1049 = vunpack.c.l.b16 %v962
  %v1050 = vunpack.c.l.b16 %v963
  %v1051 = vunpack.c.h.b16 %v963
  %v1052 = vunpack.c.l.b16 %v964
  %v1053 = vunpack.c.l.b16 %v965
  %v1054 = vunpack.c.h.b16 %v965
  %v1055 = vunpack.c.l.b16 %v966
  %v1056 = vunpack.c.l.b16 %v967
  %v1057 = vunpack.c.h.b16 %v967
  %v1058 = vunpack.c.l.b16 %v968
  %v1059 = vunpack.c.l.b16 %v969
  %v1060 = vunpack.c.h.b16 %v969
  %v1061 = vunpack.c.l.b16 %v970
  %v1062 = vunpack.c.l.b16 %v971
  %v1063 = vunpack.c.h.b16 %v971
  %v1064 = vunpack.c.l.b16 %v972
  %v1065 = vunpack.c.l.b16 %v973
  %v1066 = vunpack.c.h.b16 %v973
  %v1067 = vunpack.c.l.b16 %v974
  %v1068 = vunpack.c.l.b16 %v975
  %v1069 = vunpack.c.h.b16 %v975
  %v1070 = vunpack.c.l.b16 %v976
  %v1071 = vunpack.c.l.b16 %v977
  %v1072 = vunpack.c.h.b16 %v977
  %v1073 = vunpack.c.l.b16 %v978
  %v1074 = vunpack.c.l.b16 %v979
  %v1075 = vunpack.c.h.b16 %v979
  %v1076 = vunpack.c.l.b16 %v980
  %v1077 = vunpack.c.l.b16 %v981
  %v1078 = vunpack.c.h.b16 %v981
  %v1079 = vunpack.c.l.b16 %v982
  %v1080 = vpack.c.b16 %v1035, %v1032
  %v1081 = vpack.c.b16 %v1036, %v1033
  %v1082 = vpack.c.b16 %v1037, %v1034
  %v1083 = vpack.c.b16 %v1041, %v1038
  %v1084 = vpack.c.b16 %v1042, %v1039
  %v1085 = vpack.c.b16 %v1043, %v1040
  %v1086 = vpack.c.b16 %v1047, %v1044
  %v1087 = vpack.c.b16 %v1048, %v1045
  %v1088 = vpack.c.b16 %v1049, %v1046
  %v1089 = vpack.c.b16 %v1053, %v1050
  %v1090 = vpack.c.b16 %v1054, %v1051
  %v1091 = vpack.c.b16 %v1055, %v1052
  %v1092 = vpack.c.b16 %v1059, %v1056
  %v1093 = vpack.c.b16 %v1060, %v1057
  %v1094 = vpack.c.b16 %v1061, %v1058
  %v1095 = vpack.c.b16 %v1065, %v1062
  %v1096 = vpack.c.b16 %v1066, %v1063
  %v1097 = vpack.c.b16 %v1067, %v1064
  %v1098 = vpack.c.b16 %v1071, %v1068
  %v1099 = vpack.c.b16 %v1072, %v1069
  %v1100 = vpack.c.b16 %v1073, %v1070
  %v1101 = vpack.c.b16 %v1077, %v1074
  %v1102 = vpack.c.b16 %v1078, %v1075
  %v1103 = vpack.c.b16 %v1079, %v1076
  %1128 = vmatprep.subr.bf16.mxu0 %v1081
  %1129 = vmatpush1.bf16.msra.mxu0 %v1080
  %1130 = vmatprep.subr.bf16.mxu0 %v1084
  %1131 = vmatpush1.bf16.msra.mxu0 %v1083
  %1132 = vmatprep.subr.bf16.mxu0 %v1087
  %1133 = vmatpush1.bf16.msra.mxu0 %v1086
  %1134 = vmatprep.subr.bf16.mxu0 %v1090
  %1135 = vmatpush1.bf16.msra.mxu0 %v1089
  %1136 = vmatprep.subr.bf16.mxu0 %v1093
  %1137 = vmatpush1.bf16.msra.mxu0 %v1092
  %1138 = vmatprep.subr.bf16.mxu0 %v1096
  %1139 = vmatpush1.bf16.msra.mxu0 %v1095
  %1140 = vmatprep.subr.bf16.mxu0 %v1099
  %1141 = vmatpush1.bf16.msra.mxu0 %v1098
  %1142 = vmatprep.subr.bf16.mxu0 %v1102
  %1143 = vmatpush1.bf16.msra.mxu0 %v1101
  %1144 = vmatprep.subr.bf16.mxu0 0
  %1145 = vmatpush1.bf16.msra.mxu0 0
  %1146 = vmatprep.subr.bf16.mxu0 0
  %1147 = vmatpush1.bf16.msra.mxu0 0
  %1148 = vmatprep.subr.bf16.mxu0 0
  %1149 = vmatpush1.bf16.msra.mxu0 0
  %1150 = vmatprep.subr.bf16.mxu0 0
  %1151 = vmatpush1.bf16.msra.mxu0 0
  %1152 = vmatprep.subr.bf16.mxu0 0
  %1153 = vmatpush1.bf16.msra.mxu0 0
  %1154 = vmatprep.subr.bf16.mxu0 0
  %1155 = vmatpush1.bf16.msra.mxu0 0
  %1156 = vmatprep.subr.bf16.mxu0 0
  %1157 = vmatpush1.bf16.msra.mxu0 0
  %1158 = vmatprep.subr.bf16.mxu0 0
  %1159 = vmatpush1.bf16.msra.mxu0 0
  %1160 = vmatprep.mubr.bf16.mxu0 0
  %1161 = vmatmul.mubr.bf16.gmra.mrb[0].mxu0 %v950
  %v1162 = vpop.f32.mrb[0].mxu0
  %v1163 = vadd.f32 %v988, %v1162
  %v1164 = vpop.f32.mrb[0].mxu0
  %v1165 = vadd.f32 %v992, %v1164
  %v1166 = vpop.f32.mrb[0].mxu0
  %v1167 = vpop.f32.mrb[0].mxu0
  %1168 = vdwg.mxu0
  %1169 = vmatprep.subr.bf16.mxu0 0
  %1170 = vmatpush1.bf16.msra.mxu0 %v1082
  %1171 = vmatprep.subr.bf16.mxu0 0
  %1172 = vmatpush1.bf16.msra.mxu0 %v1085
  %1173 = vmatprep.subr.bf16.mxu0 0
  %1174 = vmatpush1.bf16.msra.mxu0 %v1088
  %1175 = vmatprep.subr.bf16.mxu0 0
  %1176 = vmatpush1.bf16.msra.mxu0 %v1091
  %1177 = vmatprep.subr.bf16.mxu0 0
  %1178 = vmatpush1.bf16.msra.mxu0 %v1094
  %1179 = vmatprep.subr.bf16.mxu0 0
  %1180 = vmatpush1.bf16.msra.mxu0 %v1097
  %1181 = vmatprep.subr.bf16.mxu0 0
  %1182 = vmatpush1.bf16.msra.mxu0 %v1100
  %1183 = vmatprep.subr.bf16.mxu0 0
  %1184 = vmatpush1.bf16.msra.mxu0 %v1103
  %1185 = vmatprep.subr.bf16.mxu0 0
  %1186 = vmatpush1.bf16.msra.mxu0 0
  %1187 = vmatprep.subr.bf16.mxu0 0
  %1188 = vmatpush1.bf16.msra.mxu0 0
  %1189 = vmatprep.subr.bf16.mxu0 0
  %1190 = vmatpush1.bf16.msra.mxu0 0
  %1191 = vmatprep.subr.bf16.mxu0 0
  %1192 = vmatpush1.bf16.msra.mxu0 0
  %1193 = vmatprep.subr.bf16.mxu0 0
  %1194 = vmatpush1.bf16.msra.mxu0 0
  %1195 = vmatprep.subr.bf16.mxu0 0
  %1196 = vmatpush1.bf16.msra.mxu0 0
  %1197 = vmatprep.subr.bf16.mxu0 0
  %1198 = vmatpush1.bf16.msra.mxu0 0
  %1199 = vmatprep.subr.bf16.mxu0 0
  %1200 = vmatpush1.bf16.msra.mxu0 0
  %1201 = vmatprep.mubr.bf16.mxu0 0
  %1202 = vmatmul.mubr.bf16.gmra.mrb[0].mxu0 %v950
  %v1203 = vpop.f32.mrb[0].mxu0
  %v1204 = vadd.f32 %v996, %v1203
  %v1205 = vpop.f32.mrb[0].mxu0
  %v1206 = vpop.f32.mrb[0].mxu0
  %v1207 = vpop.f32.mrb[0].mxu0
  %1208 = vdwg.mxu0
  %v1209 = vadd.f32 %v1163, %v622
  %v1210 = vxor.u32 %v1209, 2147483648
  %v1211 = vmul.f32 %v1210, 1.442695
  %v1212 = vpow.pop %v1211
  %v1213 = vadd.f32 %v1212, 1.0
  %v1214 = vrcp.pop %v1213
  %v1215 = vmul.f32 1.0, %v1214
  %v1216 = vadd.f32 %v1165, %v624
  %v1217 = vxor.u32 %v1216, 2147483648
  %v1218 = vmul.f32 %v1217, 1.442695
  %v1219 = vpow.pop %v1218
  %v1220 = vadd.f32 %v1219, 1.0
  %v1221 = vrcp.pop %v1220
  %v1222 = vmul.f32 1.0, %v1221
  %v1223 = vmul.f32 %v1215, %v663
  %v1224 = vadd.f32 %v1204, %v1223
  %v1225 = vtanh.pop %v1224
  %v1226 = vsub.f32 1.0, %v1222
  %v1227 = vmul.f32 %v1226, %v1225
  %v1228 = vmul.f32 %v1222, 0.0
  %v1229 = vadd.f32 %v1227, %v1228
  %v1230 = vpack.c.bf16 %v1229, %v1229
  %1231 = vmatprep.subr.bf16.mxu0 %v540
  %1232 = vmatpush1.bf16.msra.mxu0 %v539
  %1233 = vmatprep.subr.bf16.mxu0 %v543
  %1234 = vmatpush1.bf16.msra.mxu0 %v542
  %1235 = vmatprep.subr.bf16.mxu0 %v546
  %1236 = vmatpush1.bf16.msra.mxu0 %v545
  %1237 = vmatprep.subr.bf16.mxu0 %v549
  %1238 = vmatpush1.bf16.msra.mxu0 %v548
  %1239 = vmatprep.subr.bf16.mxu0 %v552
  %1240 = vmatpush1.bf16.msra.mxu0 %v551
  %1241 = vmatprep.subr.bf16.mxu0 %v555
  %1242 = vmatpush1.bf16.msra.mxu0 %v554
  %1243 = vmatprep.subr.bf16.mxu0 %v558
  %1244 = vmatpush1.bf16.msra.mxu0 %v557
  %1245 = vmatprep.subr.bf16.mxu0 %v561
  %1246 = vmatpush1.bf16.msra.mxu0 %v560
  %1247 = vmatprep.subr.bf16.mxu0 0
  %1248 = vmatpush1.bf16.msra.mxu0 0
  %1249 = vmatprep.subr.bf16.mxu0 0
  %1250 = vmatpush1.bf16.msra.mxu0 0
  %1251 = vmatprep.subr.bf16.mxu0 0
  %1252 = vmatpush1.bf16.msra.mxu0 0
  %1253 = vmatprep.subr.bf16.mxu0 0
  %1254 = vmatpush1.bf16.msra.mxu0 0
  %1255 = vmatprep.subr.bf16.mxu0 0
  %1256 = vmatpush1.bf16.msra.mxu0 0
  %1257 = vmatprep.subr.bf16.mxu0 0
  %1258 = vmatpush1.bf16.msra.mxu0 0
  %1259 = vmatprep.subr.bf16.mxu0 0
  %1260 = vmatpush1.bf16.msra.mxu0 0
  %1261 = vmatprep.subr.bf16.mxu0 0
  %1262 = vmatpush1.bf16.msra.mxu0 0
  %1263 = vmatprep.mubr.bf16.mxu0 0
  %1264 = vmatmul.mubr.bf16.gmra.mrb[0].mxu0 %v1230
  %v1265 = vpop.f32.mrb[0].mxu0
  %v1266 = vadd.f32 %v447, %v1265
  %v1267 = vpop.f32.mrb[0].mxu0
  %v1268 = vadd.f32 %v451, %v1267
  %v1269 = vpop.f32.mrb[0].mxu0
  %v1270 = vpop.f32.mrb[0].mxu0
  %1271 = vdwg.mxu0
  %1272 = vmatprep.subr.bf16.mxu0 0
  %1273 = vmatpush1.bf16.msra.mxu0 %v541
  %1274 = vmatprep.subr.bf16.mxu0 0
  %1275 = vmatpush1.bf16.msra.mxu0 %v544
  %1276 = vmatprep.subr.bf16.mxu0 0
  %1277 = vmatpush1.bf16.msra.mxu0 %v547
  %1278 = vmatprep.subr.bf16.mxu0 0
  %1279 = vmatpush1.bf16.msra.mxu0 %v550
  %1280 = vmatprep.subr.bf16.mxu0 0
  %1281 = vmatpush1.bf16.msra.mxu0 %v553
  %1282 = vmatprep.subr.bf16.mxu0 0
  %1283 = vmatpush1.bf16.msra.mxu0 %v556
  %1284 = vmatprep.subr.bf16.mxu0 0
  %1285 = vmatpush1.bf16.msra.mxu0 %v559
  %1286 = vmatprep.subr.bf16.mxu0 0
  %1287 = vmatpush1.bf16.msra.mxu0 %v562
  %1288 = vmatprep.subr.bf16.mxu0 0
  %1289 = vmatpush1.bf16.msra.mxu0 0
  %1290 = vmatprep.subr.bf16.mxu0 0
  %1291 = vmatpush1.bf16.msra.mxu0 0
  %1292 = vmatprep.subr.bf16.mxu0 0
  %1293 = vmatpush1.bf16.msra.mxu0 0
  %1294 = vmatprep.subr.bf16.mxu0 0
  %1295 = vmatpush1.bf16.msra.mxu0 0
  %1296 = vmatprep.subr.bf16.mxu0 0
  %1297 = vmatpush1.bf16.msra.mxu0 0
  %1298 = vmatprep.subr.bf16.mxu0 0
  %1299 = vmatpush1.bf16.msra.mxu0 0
  %1300 = vmatprep.subr.bf16.mxu0 0
  %1301 = vmatpush1.bf16.msra.mxu0 0
  %1302 = vmatprep.subr.bf16.mxu0 0
  %1303 = vmatpush1.bf16.msra.mxu0 0
  %1304 = vmatprep.mubr.bf16.mxu0 0
  %1305 = vmatmul.mubr.bf16.gmra.mrb[0].mxu0 %v1230
  %v1306 = vpop.f32.mrb[0].mxu0
  %v1307 = vadd.f32 %v455, %v1306
  %v1308 = vpop.f32.mrb[0].mxu0
  %v1309 = vpop.f32.mrb[0].mxu0
  %v1310 = vpop.f32.mrb[0].mxu0
  %1311 = vdwg.mxu0
  %1312 = vmatprep.subr.bf16.mxu0 %v798
  %1313 = vmatpush1.bf16.msra.mxu0 %v797
  %1314 = vmatprep.subr.bf16.mxu0 %v801
  %1315 = vmatpush1.bf16.msra.mxu0 %v800
  %1316 = vmatprep.subr.bf16.mxu0 %v804
  %1317 = vmatpush1.bf16.msra.mxu0 %v803
  %1318 = vmatprep.subr.bf16.mxu0 %v807
  %1319 = vmatpush1.bf16.msra.mxu0 %v806
  %1320 = vmatprep.subr.bf16.mxu0 %v810
  %1321 = vmatpush1.bf16.msra.mxu0 %v809
  %1322 = vmatprep.subr.bf16.mxu0 %v813
  %1323 = vmatpush1.bf16.msra.mxu0 %v812
  %1324 = vmatprep.subr.bf16.mxu0 %v816
  %1325 = vmatpush1.bf16.msra.mxu0 %v815
  %1326 = vmatprep.subr.bf16.mxu0 %v819
  %1327 = vmatpush1.bf16.msra.mxu0 %v818
  %1328 = vmatprep.subr.bf16.mxu0 0
  %1329 = vmatpush1.bf16.msra.mxu0 0
  %1330 = vmatprep.subr.bf16.mxu0 0
  %1331 = vmatpush1.bf16.msra.mxu0 0
  %1332 = vmatprep.subr.bf16.mxu0 0
  %1333 = vmatpush1.bf16.msra.mxu0 0
  %1334 = vmatprep.subr.bf16.mxu0 0
  %1335 = vmatpush1.bf16.msra.mxu0 0
  %1336 = vmatprep.subr.bf16.mxu0 0
  %1337 = vmatpush1.bf16.msra.mxu0 0
  %1338 = vmatprep.subr.bf16.mxu0 0
  %1339 = vmatpush1.bf16.msra.mxu0 0
  %1340 = vmatprep.subr.bf16.mxu0 0
  %1341 = vmatpush1.bf16.msra.mxu0 0
  %1342 = vmatprep.subr.bf16.mxu0 0
  %1343 = vmatpush1.bf16.msra.mxu0 0
  %1344 = vmatprep.mubr.bf16.mxu0 0
  %1345 = vmatmul.mubr.bf16.gmra.mrb[0].mxu0 %v950
  %v1346 = vpop.f32.mrb[0].mxu0
  %v1347 = vadd.f32 %v705, %v1346
  %v1348 = vpop.f32.mrb[0].mxu0
  %v1349 = vadd.f32 %v709, %v1348
  %v1350 = vpop.f32.mrb[0].mxu0
  %v1351 = vpop.f32.mrb[0].mxu0
  %1352 = vdwg.mxu0
  %1353 = vmatprep.subr.bf16.mxu0 0
  %1354 = vmatpush1.bf16.msra.mxu0 %v799
  %1355 = vmatprep.subr.bf16.mxu0 0
  %1356 = vmatpush1.bf16.msra.mxu0 %v802
  %1357 = vmatprep.subr.bf16.mxu0 0
  %1358 = vmatpush1.bf16.msra.mxu0 %v805
  %1359 = vmatprep.subr.bf16.mxu0 0
  %1360 = vmatpush1.bf16.msra.mxu0 %v808
  %1361 = vmatprep.subr.bf16.mxu0 0
  %1362 = vmatpush1.bf16.msra.mxu0 %v811
  %1363 = vmatprep.subr.bf16.mxu0 0
  %1364 = vmatpush1.bf16.msra.mxu0 %v814
  %1365 = vmatprep.subr.bf16.mxu0 0
  %1366 = vmatpush1.bf16.msra.mxu0 %v817
  %1367 = vmatprep.subr.bf16.mxu0 0
  %1368 = vmatpush1.bf16.msra.mxu0 %v820
  %1369 = vmatprep.subr.bf16.mxu0 0
  %1370 = vmatpush1.bf16.msra.mxu0 0
  %1371 = vmatprep.subr.bf16.mxu0 0
  %1372 = vmatpush1.bf16.msra.mxu0 0
  %1373 = vmatprep.subr.bf16.mxu0 0
  %1374 = vmatpush1.bf16.msra.mxu0 0
  %1375 = vmatprep.subr.bf16.mxu0 0
  %1376 = vmatpush1.bf16.msra.mxu0 0
  %1377 = vmatprep.subr.bf16.mxu0 0
  %1378 = vmatpush1.bf16.msra.mxu0 0
  %1379 = vmatprep.subr.bf16.mxu0 0
  %1380 = vmatpush1.bf16.msra.mxu0 0
  %1381 = vmatprep.subr.bf16.mxu0 0
  %1382 = vmatpush1.bf16.msra.mxu0 0
  %1383 = vmatprep.subr.bf16.mxu0 0
  %1384 = vmatpush1.bf16.msra.mxu0 0
  %1385 = vmatprep.mubr.bf16.mxu0 0
  %1386 = vmatmul.mubr.bf16.gmra.mrb[0].mxu0 %v950
  %v1387 = vpop.f32.mrb[0].mxu0
  %v1388 = vadd.f32 %v713, %v1387
  %v1389 = vpop.f32.mrb[0].mxu0
  %v1390 = vpop.f32.mrb[0].mxu0
  %v1391 = vpop.f32.mrb[0].mxu0
  %1392 = vdwg.mxu0
  %s1393 = scalar_lea.vmem [#allocation2], 24
  %v1394 = vld [vmem:[%s1393] sm:$0xff]
  %v1395 = vld [vmem:[%s1393 + $0x8] sm:$0xff]
  %v1396 = vld [vmem:[%s1393 + $0x10] sm:$0xff]
  %v1397 = vadd.f32 %v1394, %v1347
  %v1398 = vxor.u32 %v1397, 2147483648
  %v1399 = vmul.f32 %v1398, 1.442695
  %v1400 = vpow.pop %v1399
  %v1401 = vadd.f32 %v1400, 1.0
  %v1402 = vrcp.pop %v1401
  %v1403 = vmul.f32 1.0, %v1402
  %v1404 = vadd.f32 %v1395, %v1349
  %v1405 = vxor.u32 %v1404, 2147483648
  %v1406 = vmul.f32 %v1405, 1.442695
  %v1407 = vpow.pop %v1406
  %v1408 = vadd.f32 %v1407, 1.0
  %v1409 = vrcp.pop %v1408
  %v1410 = vmul.f32 1.0, %v1409
  %v1411 = vmul.f32 %v1403, %v1388
  %v1412 = vadd.f32 %v1396, %v1411
  %v1413 = vtanh.pop %v1412
  %v1414 = vsub.f32 1.0, %v1410
  %v1415 = vmul.f32 %v1414, %v1413
  %v1416 = vmul.f32 %v1410, %v949
  %v1417 = vadd.f32 %v1415, %v1416
  %v1418 = vpack.c.bf16 %v1417, %v1417
  %1419 = vmatprep.subr.bf16.mxu0 %v1081
  %1420 = vmatpush1.bf16.msra.mxu0 %v1080
  %1421 = vmatprep.subr.bf16.mxu0 %v1084
  %1422 = vmatpush1.bf16.msra.mxu0 %v1083
  %1423 = vmatprep.subr.bf16.mxu0 %v1087
  %1424 = vmatpush1.bf16.msra.mxu0 %v1086
  %1425 = vmatprep.subr.bf16.mxu0 %v1090
  %1426 = vmatpush1.bf16.msra.mxu0 %v1089
  %1427 = vmatprep.subr.bf16.mxu0 %v1093
  %1428 = vmatpush1.bf16.msra.mxu0 %v1092
  %1429 = vmatprep.subr.bf16.mxu0 %v1096
  %1430 = vmatpush1.bf16.msra.mxu0 %v1095
  %1431 = vmatprep.subr.bf16.mxu0 %v1099
  %1432 = vmatpush1.bf16.msra.mxu0 %v1098
  %1433 = vmatprep.subr.bf16.mxu0 %v1102
  %1434 = vmatpush1.bf16.msra.mxu0 %v1101
  %1435 = vmatprep.subr.bf16.mxu0 0
  %1436 = vmatpush1.bf16.msra.mxu0 0
  %1437 = vmatprep.subr.bf16.mxu0 0
  %1438 = vmatpush1.bf16.msra.mxu0 0
  %1439 = vmatprep.subr.bf16.mxu0 0
  %1440 = vmatpush1.bf16.msra.mxu0 0
  %1441 = vmatprep.subr.bf16.mxu0 0
  %1442 = vmatpush1.bf16.msra.mxu0 0
  %1443 = vmatprep.subr.bf16.mxu0 0
  %1444 = vmatpush1.bf16.msra.mxu0 0
  %1445 = vmatprep.subr.bf16.mxu0 0
  %1446 = vmatpush1.bf16.msra.mxu0 0
  %1447 = vmatprep.subr.bf16.mxu0 0
  %1448 = vmatpush1.bf16.msra.mxu0 0
  %1449 = vmatprep.subr.bf16.mxu0 0
  %1450 = vmatpush1.bf16.msra.mxu0 0
  %1451 = vmatprep.mubr.bf16.mxu0 0
  %1452 = vmatmul.mubr.bf16.gmra.mrb[0].mxu0 %v1418
  %v1453 = vpop.f32.mrb[0].mxu0
  %v1454 = vadd.f32 %v988, %v1453
  %v1455 = vpop.f32.mrb[0].mxu0
  %v1456 = vadd.f32 %v992, %v1455
  %v1457 = vpop.f32.mrb[0].mxu0
  %v1458 = vpop.f32.mrb[0].mxu0
  %1459 = vdwg.mxu0
  %1460 = vmatprep.subr.bf16.mxu0 0
  %1461 = vmatpush1.bf16.msra.mxu0 %v1082
  %1462 = vmatprep.subr.bf16.mxu0 0
  %1463 = vmatpush1.bf16.msra.mxu0 %v1085
  %1464 = vmatprep.subr.bf16.mxu0 0
  %1465 = vmatpush1.bf16.msra.mxu0 %v1088
  %1466 = vmatprep.subr.bf16.mxu0 0
  %1467 = vmatpush1.bf16.msra.mxu0 %v1091
  %1468 = vmatprep.subr.bf16.mxu0 0
  %1469 = vmatpush1.bf16.msra.mxu0 %v1094
  %1470 = vmatprep.subr.bf16.mxu0 0
  %1471 = vmatpush1.bf16.msra.mxu0 %v1097
  %1472 = vmatprep.subr.bf16.mxu0 0
  %1473 = vmatpush1.bf16.msra.mxu0 %v1100
  %1474 = vmatprep.subr.bf16.mxu0 0
  %1475 = vmatpush1.bf16.msra.mxu0 %v1103
  %1476 = vmatprep.subr.bf16.mxu0 0
  %1477 = vmatpush1.bf16.msra.mxu0 0
  %1478 = vmatprep.subr.bf16.mxu0 0
  %1479 = vmatpush1.bf16.msra.mxu0 0
  %1480 = vmatprep.subr.bf16.mxu0 0
  %1481 = vmatpush1.bf16.msra.mxu0 0
  %1482 = vmatprep.subr.bf16.mxu0 0
  %1483 = vmatpush1.bf16.msra.mxu0 0
  %1484 = vmatprep.subr.bf16.mxu0 0
  %1485 = vmatpush1.bf16.msra.mxu0 0
  %1486 = vmatprep.subr.bf16.mxu0 0
  %1487 = vmatpush1.bf16.msra.mxu0 0
  %1488 = vmatprep.subr.bf16.mxu0 0
  %1489 = vmatpush1.bf16.msra.mxu0 0
  %1490 = vmatprep.subr.bf16.mxu0 0
  %1491 = vmatpush1.bf16.msra.mxu0 0
  %1492 = vmatprep.mubr.bf16.mxu0 0
  %1493 = vmatmul.mubr.bf16.gmra.mrb[0].mxu0 %v1418
  %v1494 = vpop.f32.mrb[0].mxu0
  %v1495 = vadd.f32 %v996, %v1494
  %v1496 = vpop.f32.mrb[0].mxu0
  %v1497 = vpop.f32.mrb[0].mxu0
  %v1498 = vpop.f32.mrb[0].mxu0
  %1499 = vdwg.mxu0
  %v1500 = vadd.f32 %v1454, %v1266
  %v1501 = vxor.u32 %v1500, 2147483648
  %v1502 = vmul.f32 %v1501, 1.442695
  %v1503 = vpow.pop %v1502
  %v1504 = vadd.f32 %v1503, 1.0
  %v1505 = vrcp.pop %v1504
  %v1506 = vmul.f32 1.0, %v1505
  %v1507 = vadd.f32 %v1456, %v1268
  %v1508 = vxor.u32 %v1507, 2147483648
  %v1509 = vmul.f32 %v1508, 1.442695
  %v1510 = vpow.pop %v1509
  %v1511 = vadd.f32 %v1510, 1.0
  %v1512 = vrcp.pop %v1511
  %v1513 = vmul.f32 1.0, %v1512
  %v1514 = vmul.f32 %v1506, %v1307
  %v1515 = vadd.f32 %v1495, %v1514
  %v1516 = vtanh.pop %v1515
  %v1517 = vsub.f32 1.0, %v1513
  %v1518 = vmul.f32 %v1517, %v1516
  %v1519 = vmul.f32 %v1513, %v1229
  %v1520 = vadd.f32 %v1518, %v1519
  %v1521 = vpack.c.bf16 %v1520, %v1520
  %1522 = vmatprep.subr.bf16.mxu0 %v540
  %1523 = vmatpush1.bf16.msra.mxu0 %v539
  %1524 = vmatprep.subr.bf16.mxu0 %v543
  %1525 = vmatpush1.bf16.msra.mxu0 %v542
  %1526 = vmatprep.subr.bf16.mxu0 %v546
  %1527 = vmatpush1.bf16.msra.mxu0 %v545
  %1528 = vmatprep.subr.bf16.mxu0 %v549
  %1529 = vmatpush1.bf16.msra.mxu0 %v548
  %1530 = vmatprep.subr.bf16.mxu0 %v552
  %1531 = vmatpush1.bf16.msra.mxu0 %v551
  %1532 = vmatprep.subr.bf16.mxu0 %v555
  %1533 = vmatpush1.bf16.msra.mxu0 %v554
  %1534 = vmatprep.subr.bf16.mxu0 %v558
  %1535 = vmatpush1.bf16.msra.mxu0 %v557
  %1536 = vmatprep.subr.bf16.mxu0 %v561
  %1537 = vmatpush1.bf16.msra.mxu0 %v560
  %1538 = vmatprep.subr.bf16.mxu0 0
  %1539 = vmatpush1.bf16.msra.mxu0 0
  %1540 = vmatprep.subr.bf16.mxu0 0
  %1541 = vmatpush1.bf16.msra.mxu0 0
  %1542 = vmatprep.subr.bf16.mxu0 0
  %1543 = vmatpush1.bf16.msra.mxu0 0
  %1544 = vmatprep.subr.bf16.mxu0 0
  %1545 = vmatpush1.bf16.msra.mxu0 0
  %1546 = vmatprep.subr.bf16.mxu0 0
  %1547 = vmatpush1.bf16.msra.mxu0 0
  %1548 = vmatprep.subr.bf16.mxu0 0
  %1549 = vmatpush1.bf16.msra.mxu0 0
  %1550 = vmatprep.subr.bf16.mxu0 0
  %1551 = vmatpush1.bf16.msra.mxu0 0
  %1552 = vmatprep.subr.bf16.mxu0 0
  %1553 = vmatpush1.bf16.msra.mxu0 0
  %1554 = vmatprep.mubr.bf16.mxu0 0
  %1555 = vmatmul.mubr.bf16.gmra.mrb[0].mxu0 %v1521
  %v1556 = vpop.f32.mrb[0].mxu0
  %v1557 = vadd.f32 %v447, %v1556
  %v1558 = vpop.f32.mrb[0].mxu0
  %v1559 = vadd.f32 %v451, %v1558
  %v1560 = vpop.f32.mrb[0].mxu0
  %v1561 = vpop.f32.mrb[0].mxu0
  %1562 = vdwg.mxu0
  %1563 = vmatprep.subr.bf16.mxu0 0
  %1564 = vmatpush1.bf16.msra.mxu0 %v541
  %1565 = vmatprep.subr.bf16.mxu0 0
  %1566 = vmatpush1.bf16.msra.mxu0 %v544
  %1567 = vmatprep.subr.bf16.mxu0 0
  %1568 = vmatpush1.bf16.msra.mxu0 %v547
  %1569 = vmatprep.subr.bf16.mxu0 0
  %1570 = vmatpush1.bf16.msra.mxu0 %v550
  %1571 = vmatprep.subr.bf16.mxu0 0
  %1572 = vmatpush1.bf16.msra.mxu0 %v553
  %1573 = vmatprep.subr.bf16.mxu0 0
  %1574 = vmatpush1.bf16.msra.mxu0 %v556
  %1575 = vmatprep.subr.bf16.mxu0 0
  %1576 = vmatpush1.bf16.msra.mxu0 %v559
  %1577 = vmatprep.subr.bf16.mxu0 0
  %1578 = vmatpush1.bf16.msra.mxu0 %v562
  %1579 = vmatprep.subr.bf16.mxu0 0
  %1580 = vmatpush1.bf16.msra.mxu0 0
  %1581 = vmatprep.subr.bf16.mxu0 0
  %1582 = vmatpush1.bf16.msra.mxu0 0
  %1583 = vmatprep.subr.bf16.mxu0 0
  %1584 = vmatpush1.bf16.msra.mxu0 0
  %1585 = vmatprep.subr.bf16.mxu0 0
  %1586 = vmatpush1.bf16.msra.mxu0 0
  %1587 = vmatprep.subr.bf16.mxu0 0
  %1588 = vmatpush1.bf16.msra.mxu0 0
  %1589 = vmatprep.subr.bf16.mxu0 0
  %1590 = vmatpush1.bf16.msra.mxu0 0
  %1591 = vmatprep.subr.bf16.mxu0 0
  %1592 = vmatpush1.bf16.msra.mxu0 0
  %1593 = vmatprep.subr.bf16.mxu0 0
  %1594 = vmatpush1.bf16.msra.mxu0 0
  %1595 = vmatprep.mubr.bf16.mxu0 0
  %1596 = vmatmul.mubr.bf16.gmra.mrb[0].mxu0 %v1521
  %v1597 = vpop.f32.mrb[0].mxu0
  %v1598 = vadd.f32 %v455, %v1597
  %v1599 = vpop.f32.mrb[0].mxu0
  %v1600 = vpop.f32.mrb[0].mxu0
  %v1601 = vpop.f32.mrb[0].mxu0
  %1602 = vdwg.mxu0
  %1603 = vmatprep.subr.bf16.mxu0 %v798
  %1604 = vmatpush1.bf16.msra.mxu0 %v797
  %1605 = vmatprep.subr.bf16.mxu0 %v801
  %1606 = vmatpush1.bf16.msra.mxu0 %v800
  %1607 = vmatprep.subr.bf16.mxu0 %v804
  %1608 = vmatpush1.bf16.msra.mxu0 %v803
  %1609 = vmatprep.subr.bf16.mxu0 %v807
  %1610 = vmatpush1.bf16.msra.mxu0 %v806
  %1611 = vmatprep.subr.bf16.mxu0 %v810
  %1612 = vmatpush1.bf16.msra.mxu0 %v809
  %1613 = vmatprep.subr.bf16.mxu0 %v813
  %1614 = vmatpush1.bf16.msra.mxu0 %v812
  %1615 = vmatprep.subr.bf16.mxu0 %v816
  %1616 = vmatpush1.bf16.msra.mxu0 %v815
  %1617 = vmatprep.subr.bf16.mxu0 %v819
  %1618 = vmatpush1.bf16.msra.mxu0 %v818
  %1619 = vmatprep.subr.bf16.mxu0 0
  %1620 = vmatpush1.bf16.msra.mxu0 0
  %1621 = vmatprep.subr.bf16.mxu0 0
  %1622 = vmatpush1.bf16.msra.mxu0 0
  %1623 = vmatprep.subr.bf16.mxu0 0
  %1624 = vmatpush1.bf16.msra.mxu0 0
  %1625 = vmatprep.subr.bf16.mxu0 0
  %1626 = vmatpush1.bf16.msra.mxu0 0
  %1627 = vmatprep.subr.bf16.mxu0 0
  %1628 = vmatpush1.bf16.msra.mxu0 0
  %1629 = vmatprep.subr.bf16.mxu0 0
  %1630 = vmatpush1.bf16.msra.mxu0 0
  %1631 = vmatprep.subr.bf16.mxu0 0
  %1632 = vmatpush1.bf16.msra.mxu0 0
  %1633 = vmatprep.subr.bf16.mxu0 0
  %1634 = vmatpush1.bf16.msra.mxu0 0
  %1635 = vmatprep.mubr.bf16.mxu0 0
  %1636 = vmatmul.mubr.bf16.gmra.mrb[0].mxu0 %v1418
  %v1637 = vpop.f32.mrb[0].mxu0
  %v1638 = vadd.f32 %v705, %v1637
  %v1639 = vpop.f32.mrb[0].mxu0
  %v1640 = vadd.f32 %v709, %v1639
  %v1641 = vpop.f32.mrb[0].mxu0
  %v1642 = vpop.f32.mrb[0].mxu0
  %1643 = vdwg.mxu0
  %1644 = vmatprep.subr.bf16.mxu0 0
  %1645 = vmatpush1.bf16.msra.mxu0 %v799
  %1646 = vmatprep.subr.bf16.mxu0 0
  %1647 = vmatpush1.bf16.msra.mxu0 %v802
  %1648 = vmatprep.subr.bf16.mxu0 0
  %1649 = vmatpush1.bf16.msra.mxu0 %v805
  %1650 = vmatprep.subr.bf16.mxu0 0
  %1651 = vmatpush1.bf16.msra.mxu0 %v808
  %1652 = vmatprep.subr.bf16.mxu0 0
  %1653 = vmatpush1.bf16.msra.mxu0 %v811
  %1654 = vmatprep.subr.bf16.mxu0 0
  %1655 = vmatpush1.bf16.msra.mxu0 %v814
  %1656 = vmatprep.subr.bf16.mxu0 0
  %1657 = vmatpush1.bf16.msra.mxu0 %v817
  %1658 = vmatprep.subr.bf16.mxu0 0
  %1659 = vmatpush1.bf16.msra.mxu0 %v820
  %1660 = vmatprep.subr.bf16.mxu0 0
  %1661 = vmatpush1.bf16.msra.mxu0 0
  %1662 = vmatprep.subr.bf16.mxu0 0
  %1663 = vmatpush1.bf16.msra.mxu0 0
  %1664 = vmatprep.subr.bf16.mxu0 0
  %1665 = vmatpush1.bf16.msra.mxu0 0
  %1666 = vmatprep.subr.bf16.mxu0 0
  %1667 = vmatpush1.bf16.msra.mxu0 0
  %1668 = vmatprep.subr.bf16.mxu0 0
  %1669 = vmatpush1.bf16.msra.mxu0 0
  %1670 = vmatprep.subr.bf16.mxu0 0
  %1671 = vmatpush1.bf16.msra.mxu0 0
  %1672 = vmatprep.subr.bf16.mxu0 0
  %1673 = vmatpush1.bf16.msra.mxu0 0
  %1674 = vmatprep.subr.bf16.mxu0 0
  %1675 = vmatpush1.bf16.msra.mxu0 0
  %1676 = vmatprep.mubr.bf16.mxu0 0
  %1677 = vmatmul.mubr.bf16.gmra.mrb[0].mxu0 %v1418
  %v1678 = vpop.f32.mrb[0].mxu0
  %v1679 = vadd.f32 %v713, %v1678
  %v1680 = vpop.f32.mrb[0].mxu0
  %v1681 = vpop.f32.mrb[0].mxu0
  %v1682 = vpop.f32.mrb[0].mxu0
  %1683 = vdwg.mxu0
  %s1684 = scalar_lea.vmem [#allocation2], 48
  %v1685 = vld [vmem:[%s1684] sm:$0xff]
  %v1686 = vld [vmem:[%s1684 + $0x8] sm:$0xff]
  %v1687 = vld [vmem:[%s1684 + $0x10] sm:$0xff]
  %v1688 = vadd.f32 %v1685, %v1638
  %v1689 = vxor.u32 %v1688, 2147483648
  %v1690 = vmul.f32 %v1689, 1.442695
  %v1691 = vpow.pop %v1690
  %v1692 = vadd.f32 %v1691, 1.0
  %v1693 = vrcp.pop %v1692
  %v1694 = vmul.f32 1.0, %v1693
  %v1695 = vadd.f32 %v1686, %v1640
  %v1696 = vxor.u32 %v1695, 2147483648
  %v1697 = vmul.f32 %v1696, 1.442695
  %v1698 = vpow.pop %v1697
  %v1699 = vadd.f32 %v1698, 1.0
  %v1700 = vrcp.pop %v1699
  %v1701 = vmul.f32 1.0, %v1700
  %v1702 = vmul.f32 %v1694, %v1679
  %v1703 = vadd.f32 %v1687, %v1702
  %v1704 = vtanh.pop %v1703
  %v1705 = vsub.f32 1.0, %v1701
  %v1706 = vmul.f32 %v1705, %v1704
  %v1707 = vmul.f32 %v1701, %v1417
  %v1708 = vadd.f32 %v1706, %v1707
  %v1709 = vpack.c.bf16 %v1708, %v1708
  %1710 = vmatprep.subr.bf16.mxu0 %v1081
  %1711 = vmatpush1.bf16.msra.mxu0 %v1080
  %1712 = vmatprep.subr.bf16.mxu0 %v1084
  %1713 = vmatpush1.bf16.msra.mxu0 %v1083
  %1714 = vmatprep.subr.bf16.mxu0 %v1087
  %1715 = vmatpush1.bf16.msra.mxu0 %v1086
  %1716 = vmatprep.subr.bf16.mxu0 %v1090
  %1717 = vmatpush1.bf16.msra.mxu0 %v1089
  %1718 = vmatprep.subr.bf16.mxu0 %v1093
  %1719 = vmatpush1.bf16.msra.mxu0 %v1092
  %1720 = vmatprep.subr.bf16.mxu0 %v1096
  %1721 = vmatpush1.bf16.msra.mxu0 %v1095
  %1722 = vmatprep.subr.bf16.mxu0 %v1099
  %1723 = vmatpush1.bf16.msra.mxu0 %v1098
  %1724 = vmatprep.subr.bf16.mxu0 %v1102
  %1725 = vmatpush1.bf16.msra.mxu0 %v1101
  %1726 = vmatprep.subr.bf16.mxu0 0
  %1727 = vmatpush1.bf16.msra.mxu0 0
  %1728 = vmatprep.subr.bf16.mxu0 0
  %1729 = vmatpush1.bf16.msra.mxu0 0
  %1730 = vmatprep.subr.bf16.mxu0 0
  %1731 = vmatpush1.bf16.msra.mxu0 0
  %1732 = vmatprep.subr.bf16.mxu0 0
  %1733 = vmatpush1.bf16.msra.mxu0 0
  %1734 = vmatprep.subr.bf16.mxu0 0
  %1735 = vmatpush1.bf16.msra.mxu0 0
  %1736 = vmatprep.subr.bf16.mxu0 0
  %1737 = vmatpush1.bf16.msra.mxu0 0
  %1738 = vmatprep.subr.bf16.mxu0 0
  %1739 = vmatpush1.bf16.msra.mxu0 0
  %1740 = vmatprep.subr.bf16.mxu0 0
  %1741 = vmatpush1.bf16.msra.mxu0 0
  %1742 = vmatprep.mubr.bf16.mxu0 0
  %1743 = vmatmul.mubr.bf16.gmra.mrb[0].mxu0 %v1709
  %v1744 = vpop.f32.mrb[0].mxu0
  %v1745 = vadd.f32 %v988, %v1744
  %v1746 = vpop.f32.mrb[0].mxu0
  %v1747 = vadd.f32 %v992, %v1746
  %v1748 = vpop.f32.mrb[0].mxu0
  %v1749 = vpop.f32.mrb[0].mxu0
  %1750 = vdwg.mxu0
  %1751 = vmatprep.subr.bf16.mxu0 0
  %1752 = vmatpush1.bf16.msra.mxu0 %v1082
  %1753 = vmatprep.subr.bf16.mxu0 0
  %1754 = vmatpush1.bf16.msra.mxu0 %v1085
  %1755 = vmatprep.subr.bf16.mxu0 0
  %1756 = vmatpush1.bf16.msra.mxu0 %v1088
  %1757 = vmatprep.subr.bf16.mxu0 0
  %1758 = vmatpush1.bf16.msra.mxu0 %v1091
  %1759 = vmatprep.subr.bf16.mxu0 0
  %1760 = vmatpush1.bf16.msra.mxu0 %v1094
  %1761 = vmatprep.subr.bf16.mxu0 0
  %1762 = vmatpush1.bf16.msra.mxu0 %v1097
  %1763 = vmatprep.subr.bf16.mxu0 0
  %1764 = vmatpush1.bf16.msra.mxu0 %v1100
  %1765 = vmatprep.subr.bf16.mxu0 0
  %1766 = vmatpush1.bf16.msra.mxu0 %v1103
  %1767 = vmatprep.subr.bf16.mxu0 0
  %1768 = vmatpush1.bf16.msra.mxu0 0
  %1769 = vmatprep.subr.bf16.mxu0 0
  %1770 = vmatpush1.bf16.msra.mxu0 0
  %1771 = vmatprep.subr.bf16.mxu0 0
  %1772 = vmatpush1.bf16.msra.mxu0 0
  %1773 = vmatprep.subr.bf16.mxu0 0
  %1774 = vmatpush1.bf16.msra.mxu0 0
  %1775 = vmatprep.subr.bf16.mxu0 0
  %1776 = vmatpush1.bf16.msra.mxu0 0
  %1777 = vmatprep.subr.bf16.mxu0 0
  %1778 = vmatpush1.bf16.msra.mxu0 0
  %1779 = vmatprep.subr.bf16.mxu0 0
  %1780 = vmatpush1.bf16.msra.mxu0 0
  %1781 = vmatprep.subr.bf16.mxu0 0
  %1782 = vmatpush1.bf16.msra.mxu0 0
  %1783 = vmatprep.mubr.bf16.mxu0 0
  %1784 = vmatmul.mubr.bf16.gmra.mrb[0].mxu0 %v1709
  %v1785 = vpop.f32.mrb[0].mxu0
  %v1786 = vadd.f32 %v996, %v1785
  %v1787 = vpop.f32.mrb[0].mxu0
  %v1788 = vpop.f32.mrb[0].mxu0
  %v1789 = vpop.f32.mrb[0].mxu0
  %1790 = vdwg.mxu0
  %v1791 = vadd.f32 %v1745, %v1557
  %v1792 = vxor.u32 %v1791, 2147483648
  %v1793 = vmul.f32 %v1792, 1.442695
  %v1794 = vpow.pop %v1793
  %v1795 = vadd.f32 %v1794, 1.0
  %v1796 = vrcp.pop %v1795
  %v1797 = vmul.f32 1.0, %v1796
  %v1798 = vadd.f32 %v1747, %v1559
  %v1799 = vxor.u32 %v1798, 2147483648
  %v1800 = vmul.f32 %v1799, 1.442695
  %v1801 = vpow.pop %v1800
  %v1802 = vadd.f32 %v1801, 1.0
  %v1803 = vrcp.pop %v1802
  %v1804 = vmul.f32 1.0, %v1803
  %v1805 = vmul.f32 %v1797, %v1598
  %v1806 = vadd.f32 %v1786, %v1805
  %v1807 = vtanh.pop %v1806
  %v1808 = vsub.f32 1.0, %v1804
  %v1809 = vmul.f32 %v1808, %v1807
  %v1810 = vmul.f32 %v1804, %v1520
  %v1811 = vadd.f32 %v1809, %v1810
  %v1812 = vpack.c.bf16 %v1811, %v1811
  %1813 = vmatprep.subr.bf16.mxu0 %v540
  %1814 = vmatpush1.bf16.msra.mxu0 %v539
  %1815 = vmatprep.subr.bf16.mxu0 %v543
  %1816 = vmatpush1.bf16.msra.mxu0 %v542
  %1817 = vmatprep.subr.bf16.mxu0 %v546
  %1818 = vmatpush1.bf16.msra.mxu0 %v545
  %1819 = vmatprep.subr.bf16.mxu0 %v549
  %1820 = vmatpush1.bf16.msra.mxu0 %v548
  %1821 = vmatprep.subr.bf16.mxu0 %v552
  %1822 = vmatpush1.bf16.msra.mxu0 %v551
  %1823 = vmatprep.subr.bf16.mxu0 %v555
  %1824 = vmatpush1.bf16.msra.mxu0 %v554
  %1825 = vmatprep.subr.bf16.mxu0 %v558
  %1826 = vmatpush1.bf16.msra.mxu0 %v557
  %1827 = vmatprep.subr.bf16.mxu0 %v561
  %1828 = vmatpush1.bf16.msra.mxu0 %v560
  %1829 = vmatprep.subr.bf16.mxu0 0
  %1830 = vmatpush1.bf16.msra.mxu0 0
  %1831 = vmatprep.subr.bf16.mxu0 0
  %1832 = vmatpush1.bf16.msra.mxu0 0
  %1833 = vmatprep.subr.bf16.mxu0 0
  %1834 = vmatpush1.bf16.msra.mxu0 0
  %1835 = vmatprep.subr.bf16.mxu0 0
  %1836 = vmatpush1.bf16.msra.mxu0 0
  %1837 = vmatprep.subr.bf16.mxu0 0
  %1838 = vmatpush1.bf16.msra.mxu0 0
  %1839 = vmatprep.subr.bf16.mxu0 0
  %1840 = vmatpush1.bf16.msra.mxu0 0
  %1841 = vmatprep.subr.bf16.mxu0 0
  %1842 = vmatpush1.bf16.msra.mxu0 0
  %1843 = vmatprep.subr.bf16.mxu0 0
  %1844 = vmatpush1.bf16.msra.mxu0 0
  %1845 = vmatprep.mubr.bf16.mxu0 0
  %1846 = vmatmul.mubr.bf16.gmra.mrb[0].mxu0 %v1812
  %v1847 = vpop.f32.mrb[0].mxu0
  %v1848 = vadd.f32 %v447, %v1847
  %v1849 = vpop.f32.mrb[0].mxu0
  %v1850 = vadd.f32 %v451, %v1849
  %v1851 = vpop.f32.mrb[0].mxu0
  %v1852 = vpop.f32.mrb[0].mxu0
  %1853 = vdwg.mxu0
  %1854 = vmatprep.subr.bf16.mxu0 0
  %1855 = vmatpush1.bf16.msra.mxu0 %v541
  %1856 = vmatprep.subr.bf16.mxu0 0
  %1857 = vmatpush1.bf16.msra.mxu0 %v544
  %1858 = vmatprep.subr.bf16.mxu0 0
  %1859 = vmatpush1.bf16.msra.mxu0 %v547
  %1860 = vmatprep.subr.bf16.mxu0 0
  %1861 = vmatpush1.bf16.msra.mxu0 %v550
  %1862 = vmatprep.subr.bf16.mxu0 0
  %1863 = vmatpush1.bf16.msra.mxu0 %v553
  %1864 = vmatprep.subr.bf16.mxu0 0
  %1865 = vmatpush1.bf16.msra.mxu0 %v556
  %1866 = vmatprep.subr.bf16.mxu0 0
  %1867 = vmatpush1.bf16.msra.mxu0 %v559
  %1868 = vmatprep.subr.bf16.mxu0 0
  %1869 = vmatpush1.bf16.msra.mxu0 %v562
  %1870 = vmatprep.subr.bf16.mxu0 0
  %1871 = vmatpush1.bf16.msra.mxu0 0
  %1872 = vmatprep.subr.bf16.mxu0 0
  %1873 = vmatpush1.bf16.msra.mxu0 0
  %1874 = vmatprep.subr.bf16.mxu0 0
  %1875 = vmatpush1.bf16.msra.mxu0 0
  %1876 = vmatprep.subr.bf16.mxu0 0
  %1877 = vmatpush1.bf16.msra.mxu0 0
  %1878 = vmatprep.subr.bf16.mxu0 0
  %1879 = vmatpush1.bf16.msra.mxu0 0
  %1880 = vmatprep.subr.bf16.mxu0 0
  %1881 = vmatpush1.bf16.msra.mxu0 0
  %1882 = vmatprep.subr.bf16.mxu0 0
  %1883 = vmatpush1.bf16.msra.mxu0 0
  %1884 = vmatprep.subr.bf16.mxu0 0
  %1885 = vmatpush1.bf16.msra.mxu0 0
  %1886 = vmatprep.mubr.bf16.mxu0 0
  %1887 = vmatmul.mubr.bf16.gmra.mrb[0].mxu0 %v1812
  %v1888 = vpop.f32.mrb[0].mxu0
  %v1889 = vadd.f32 %v455, %v1888
  %v1890 = vpop.f32.mrb[0].mxu0
  %v1891 = vpop.f32.mrb[0].mxu0
  %v1892 = vpop.f32.mrb[0].mxu0
  %1893 = vdwg.mxu0
  %1894 = vmatprep.subr.bf16.mxu0 %v798
  %1895 = vmatpush1.bf16.msra.mxu0 %v797
  %1896 = vmatprep.subr.bf16.mxu0 %v801
  %1897 = vmatpush1.bf16.msra.mxu0 %v800
  %1898 = vmatprep.subr.bf16.mxu0 %v804
  %1899 = vmatpush1.bf16.msra.mxu0 %v803
  %1900 = vmatprep.subr.bf16.mxu0 %v807
  %1901 = vmatpush1.bf16.msra.mxu0 %v806
  %1902 = vmatprep.subr.bf16.mxu0 %v810
  %1903 = vmatpush1.bf16.msra.mxu0 %v809
  %1904 = vmatprep.subr.bf16.mxu0 %v813
  %1905 = vmatpush1.bf16.msra.mxu0 %v812
  %1906 = vmatprep.subr.bf16.mxu0 %v816
  %1907 = vmatpush1.bf16.msra.mxu0 %v815
  %1908 = vmatprep.subr.bf16.mxu0 %v819
  %1909 = vmatpush1.bf16.msra.mxu0 %v818
  %1910 = vmatprep.subr.bf16.mxu0 0
  %1911 = vmatpush1.bf16.msra.mxu0 0
  %1912 = vmatprep.subr.bf16.mxu0 0
  %1913 = vmatpush1.bf16.msra.mxu0 0
  %1914 = vmatprep.subr.bf16.mxu0 0
  %1915 = vmatpush1.bf16.msra.mxu0 0
  %1916 = vmatprep.subr.bf16.mxu0 0
  %1917 = vmatpush1.bf16.msra.mxu0 0
  %1918 = vmatprep.subr.bf16.mxu0 0
  %1919 = vmatpush1.bf16.msra.mxu0 0
  %1920 = vmatprep.subr.bf16.mxu0 0
  %1921 = vmatpush1.bf16.msra.mxu0 0
  %1922 = vmatprep.subr.bf16.mxu0 0
  %1923 = vmatpush1.bf16.msra.mxu0 0
  %1924 = vmatprep.subr.bf16.mxu0 0
  %1925 = vmatpush1.bf16.msra.mxu0 0
  %1926 = vmatprep.mubr.bf16.mxu0 0
  %1927 = vmatmul.mubr.bf16.gmra.mrb[0].mxu0 %v1709
  %v1928 = vpop.f32.mrb[0].mxu0
  %v1929 = vadd.f32 %v705, %v1928
  %v1930 = vpop.f32.mrb[0].mxu0
  %v1931 = vadd.f32 %v709, %v1930
  %v1932 = vpop.f32.mrb[0].mxu0
  %v1933 = vpop.f32.mrb[0].mxu0
  %1934 = vdwg.mxu0
  %1935 = vmatprep.subr.bf16.mxu0 0
  %1936 = vmatpush1.bf16.msra.mxu0 %v799
  %1937 = vmatprep.subr.bf16.mxu0 0
  %1938 = vmatpush1.bf16.msra.mxu0 %v802
  %1939 = vmatprep.subr.bf16.mxu0 0
  %1940 = vmatpush1.bf16.msra.mxu0 %v805
  %1941 = vmatprep.subr.bf16.mxu0 0
  %1942 = vmatpush1.bf16.msra.mxu0 %v808
  %1943 = vmatprep.subr.bf16.mxu0 0
  %1944 = vmatpush1.bf16.msra.mxu0 %v811
  %1945 = vmatprep.subr.bf16.mxu0 0
  %1946 = vmatpush1.bf16.msra.mxu0 %v814
  %1947 = vmatprep.subr.bf16.mxu0 0
  %1948 = vmatpush1.bf16.msra.mxu0 %v817
  %1949 = vmatprep.subr.bf16.mxu0 0
  %1950 = vmatpush1.bf16.msra.mxu0 %v820
  %1951 = vmatprep.subr.bf16.mxu0 0
  %1952 = vmatpush1.bf16.msra.mxu0 0
  %1953 = vmatprep.subr.bf16.mxu0 0
  %1954 = vmatpush1.bf16.msra.mxu0 0
  %1955 = vmatprep.subr.bf16.mxu0 0
  %1956 = vmatpush1.bf16.msra.mxu0 0
  %1957 = vmatprep.subr.bf16.mxu0 0
  %1958 = vmatpush1.bf16.msra.mxu0 0
  %1959 = vmatprep.subr.bf16.mxu0 0
  %1960 = vmatpush1.bf16.msra.mxu0 0
  %1961 = vmatprep.subr.bf16.mxu0 0
  %1962 = vmatpush1.bf16.msra.mxu0 0
  %1963 = vmatprep.subr.bf16.mxu0 0
  %1964 = vmatpush1.bf16.msra.mxu0 0
  %1965 = vmatprep.subr.bf16.mxu0 0
  %1966 = vmatpush1.bf16.msra.mxu0 0
  %1967 = vmatprep.mubr.bf16.mxu0 0
  %1968 = vmatmul.mubr.bf16.gmra.mrb[0].mxu0 %v1709
  %v1969 = vpop.f32.mrb[0].mxu0
  %v1970 = vadd.f32 %v713, %v1969
  %v1971 = vpop.f32.mrb[0].mxu0
  %v1972 = vpop.f32.mrb[0].mxu0
  %v1973 = vpop.f32.mrb[0].mxu0
  %1974 = vdwg.mxu0
  %s1975 = scalar_lea.vmem [#allocation2], 72
  %v1976 = vld [vmem:[%s1975] sm:$0xff]
  %v1977 = vld [vmem:[%s1975 + $0x8] sm:$0xff]
  %v1978 = vld [vmem:[%s1975 + $0x10] sm:$0xff]
  %v1979 = vadd.f32 %v1976, %v1929
  %v1980 = vxor.u32 %v1979, 2147483648
  %v1981 = vmul.f32 %v1980, 1.442695
  %v1982 = vpow.pop %v1981
  %v1983 = vadd.f32 %v1982, 1.0
  %v1984 = vrcp.pop %v1983
  %v1985 = vmul.f32 1.0, %v1984
  %v1986 = vadd.f32 %v1977, %v1931
  %v1987 = vxor.u32 %v1986, 2147483648
  %v1988 = vmul.f32 %v1987, 1.442695
  %v1989 = vpow.pop %v1988
  %v1990 = vadd.f32 %v1989, 1.0
  %v1991 = vrcp.pop %v1990
  %v1992 = vmul.f32 1.0, %v1991
  %v1993 = vmul.f32 %v1985, %v1970
  %v1994 = vadd.f32 %v1978, %v1993
  %v1995 = vtanh.pop %v1994
  %v1996 = vsub.f32 1.0, %v1992
  %v1997 = vmul.f32 %v1996, %v1995
  %v1998 = vmul.f32 %v1992, %v1708
  %v1999 = vadd.f32 %v1997, %v1998
  %v2000 = vpack.c.bf16 %v1999, %v1999
  %2001 = vmatprep.subr.bf16.mxu0 %v1081
  %2002 = vmatpush1.bf16.msra.mxu0 %v1080
  %2003 = vmatprep.subr.bf16.mxu0 %v1084
  %2004 = vmatpush1.bf16.msra.mxu0 %v1083
  %2005 = vmatprep.subr.bf16.mxu0 %v1087
  %2006 = vmatpush1.bf16.msra.mxu0 %v1086
  %2007 = vmatprep.subr.bf16.mxu0 %v1090
  %2008 = vmatpush1.bf16.msra.mxu0 %v1089
  %2009 = vmatprep.subr.bf16.mxu0 %v1093
  %2010 = vmatpush1.bf16.msra.mxu0 %v1092
  %2011 = vmatprep.subr.bf16.mxu0 %v1096
  %2012 = vmatpush1.bf16.msra.mxu0 %v1095
  %2013 = vmatprep.subr.bf16.mxu0 %v1099
  %2014 = vmatpush1.bf16.msra.mxu0 %v1098
  %2015 = vmatprep.subr.bf16.mxu0 %v1102
  %2016 = vmatpush1.bf16.msra.mxu0 %v1101
  %2017 = vmatprep.subr.bf16.mxu0 0
  %2018 = vmatpush1.bf16.msra.mxu0 0
  %2019 = vmatprep.subr.bf16.mxu0 0
  %2020 = vmatpush1.bf16.msra.mxu0 0
  %2021 = vmatprep.subr.bf16.mxu0 0
  %2022 = vmatpush1.bf16.msra.mxu0 0
  %2023 = vmatprep.subr.bf16.mxu0 0
  %2024 = vmatpush1.bf16.msra.mxu0 0
  %2025 = vmatprep.subr.bf16.mxu0 0
  %2026 = vmatpush1.bf16.msra.mxu0 0
  %2027 = vmatprep.subr.bf16.mxu0 0
  %2028 = vmatpush1.bf16.msra.mxu0 0
  %2029 = vmatprep.subr.bf16.mxu0 0
  %2030 = vmatpush1.bf16.msra.mxu0 0
  %2031 = vmatprep.subr.bf16.mxu0 0
  %2032 = vmatpush1.bf16.msra.mxu0 0
  %2033 = vmatprep.mubr.bf16.mxu0 0
  %2034 = vmatmul.mubr.bf16.gmra.mrb[0].mxu0 %v2000
  %v2035 = vpop.f32.mrb[0].mxu0
  %v2036 = vadd.f32 %v988, %v2035
  %v2037 = vpop.f32.mrb[0].mxu0
  %v2038 = vadd.f32 %v992, %v2037
  %v2039 = vpop.f32.mrb[0].mxu0
  %v2040 = vpop.f32.mrb[0].mxu0
  %2041 = vdwg.mxu0
  %2042 = vmatprep.subr.bf16.mxu0 0
  %2043 = vmatpush1.bf16.msra.mxu0 %v1082
  %2044 = vmatprep.subr.bf16.mxu0 0
  %2045 = vmatpush1.bf16.msra.mxu0 %v1085
  %2046 = vmatprep.subr.bf16.mxu0 0
  %2047 = vmatpush1.bf16.msra.mxu0 %v1088
  %2048 = vmatprep.subr.bf16.mxu0 0
  %2049 = vmatpush1.bf16.msra.mxu0 %v1091
  %2050 = vmatprep.subr.bf16.mxu0 0
  %2051 = vmatpush1.bf16.msra.mxu0 %v1094
  %2052 = vmatprep.subr.bf16.mxu0 0
  %2053 = vmatpush1.bf16.msra.mxu0 %v1097
  %2054 = vmatprep.subr.bf16.mxu0 0
  %2055 = vmatpush1.bf16.msra.mxu0 %v1100
  %2056 = vmatprep.subr.bf16.mxu0 0
  %2057 = vmatpush1.bf16.msra.mxu0 %v1103
  %2058 = vmatprep.subr.bf16.mxu0 0
  %2059 = vmatpush1.bf16.msra.mxu0 0
  %2060 = vmatprep.subr.bf16.mxu0 0
  %2061 = vmatpush1.bf16.msra.mxu0 0
  %2062 = vmatprep.subr.bf16.mxu0 0
  %2063 = vmatpush1.bf16.msra.mxu0 0
  %2064 = vmatprep.subr.bf16.mxu0 0
  %2065 = vmatpush1.bf16.msra.mxu0 0
  %2066 = vmatprep.subr.bf16.mxu0 0
  %2067 = vmatpush1.bf16.msra.mxu0 0
  %2068 = vmatprep.subr.bf16.mxu0 0
  %2069 = vmatpush1.bf16.msra.mxu0 0
  %2070 = vmatprep.subr.bf16.mxu0 0
  %2071 = vmatpush1.bf16.msra.mxu0 0
  %2072 = vmatprep.subr.bf16.mxu0 0
  %2073 = vmatpush1.bf16.msra.mxu0 0
  %2074 = vmatprep.mubr.bf16.mxu0 0
  %2075 = vmatmul.mubr.bf16.gmra.mrb[0].mxu0 %v2000
  %v2076 = vpop.f32.mrb[0].mxu0
  %v2077 = vadd.f32 %v996, %v2076
  %v2078 = vpop.f32.mrb[0].mxu0
  %v2079 = vpop.f32.mrb[0].mxu0
  %v2080 = vpop.f32.mrb[0].mxu0
  %2081 = vdwg.mxu0
  %v2082 = vadd.f32 %v2036, %v1848
  %v2083 = vxor.u32 %v2082, 2147483648
  %v2084 = vmul.f32 %v2083, 1.442695
  %v2085 = vpow.pop %v2084
  %v2086 = vadd.f32 %v2085, 1.0
  %v2087 = vrcp.pop %v2086
  %v2088 = vmul.f32 1.0, %v2087
  %v2089 = vadd.f32 %v2038, %v1850
  %v2090 = vxor.u32 %v2089, 2147483648
  %v2091 = vmul.f32 %v2090, 1.442695
  %v2092 = vpow.pop %v2091
  %v2093 = vadd.f32 %v2092, 1.0
  %v2094 = vrcp.pop %v2093
  %v2095 = vmul.f32 1.0, %v2094
  %v2096 = vmul.f32 %v2088, %v1889
  %v2097 = vadd.f32 %v2077, %v2096
  %v2098 = vtanh.pop %v2097
  %v2099 = vsub.f32 1.0, %v2095
  %v2100 = vmul.f32 %v2099, %v2098
  %v2101 = vmul.f32 %v2095, %v1811
  %v2102 = vadd.f32 %v2100, %v2101
  %v2103 = vpack.c.bf16 %v2102, %v2102
  %2104 = vmatprep.subr.bf16.mxu0 %v540
  %2105 = vmatpush1.bf16.msra.mxu0 %v539
  %2106 = vmatprep.subr.bf16.mxu0 %v543
  %2107 = vmatpush1.bf16.msra.mxu0 %v542
  %2108 = vmatprep.subr.bf16.mxu0 %v546
  %2109 = vmatpush1.bf16.msra.mxu0 %v545
  %2110 = vmatprep.subr.bf16.mxu0 %v549
  %2111 = vmatpush1.bf16.msra.mxu0 %v548
  %2112 = vmatprep.subr.bf16.mxu0 %v552
  %2113 = vmatpush1.bf16.msra.mxu0 %v551
  %2114 = vmatprep.subr.bf16.mxu0 %v555
  %2115 = vmatpush1.bf16.msra.mxu0 %v554
  %2116 = vmatprep.subr.bf16.mxu0 %v558
  %2117 = vmatpush1.bf16.msra.mxu0 %v557
  %2118 = vmatprep.subr.bf16.mxu0 %v561
  %2119 = vmatpush1.bf16.msra.mxu0 %v560
  %2120 = vmatprep.subr.bf16.mxu0 0
  %2121 = vmatpush1.bf16.msra.mxu0 0
  %2122 = vmatprep.subr.bf16.mxu0 0
  %2123 = vmatpush1.bf16.msra.mxu0 0
  %2124 = vmatprep.subr.bf16.mxu0 0
  %2125 = vmatpush1.bf16.msra.mxu0 0
  %2126 = vmatprep.subr.bf16.mxu0 0
  %2127 = vmatpush1.bf16.msra.mxu0 0
  %2128 = vmatprep.subr.bf16.mxu0 0
  %2129 = vmatpush1.bf16.msra.mxu0 0
  %2130 = vmatprep.subr.bf16.mxu0 0
  %2131 = vmatpush1.bf16.msra.mxu0 0
  %2132 = vmatprep.subr.bf16.mxu0 0
  %2133 = vmatpush1.bf16.msra.mxu0 0
  %2134 = vmatprep.subr.bf16.mxu0 0
  %2135 = vmatpush1.bf16.msra.mxu0 0
  %2136 = vmatprep.mubr.bf16.mxu0 0
  %2137 = vmatmul.mubr.bf16.gmra.mrb[0].mxu0 %v2103
  %v2138 = vpop.f32.mrb[0].mxu0
  %v2139 = vadd.f32 %v447, %v2138
  %v2140 = vpop.f32.mrb[0].mxu0
  %v2141 = vadd.f32 %v451, %v2140
  %v2142 = vpop.f32.mrb[0].mxu0
  %v2143 = vpop.f32.mrb[0].mxu0
  %2144 = vdwg.mxu0
  %2145 = vmatprep.subr.bf16.mxu0 0
  %2146 = vmatpush1.bf16.msra.mxu0 %v541
  %2147 = vmatprep.subr.bf16.mxu0 0
  %2148 = vmatpush1.bf16.msra.mxu0 %v544
  %2149 = vmatprep.subr.bf16.mxu0 0
  %2150 = vmatpush1.bf16.msra.mxu0 %v547
  %2151 = vmatprep.subr.bf16.mxu0 0
  %2152 = vmatpush1.bf16.msra.mxu0 %v550
  %2153 = vmatprep.subr.bf16.mxu0 0
  %2154 = vmatpush1.bf16.msra.mxu0 %v553
  %2155 = vmatprep.subr.bf16.mxu0 0
  %2156 = vmatpush1.bf16.msra.mxu0 %v556
  %2157 = vmatprep.subr.bf16.mxu0 0
  %2158 = vmatpush1.bf16.msra.mxu0 %v559
  %2159 = vmatprep.subr.bf16.mxu0 0
  %2160 = vmatpush1.bf16.msra.mxu0 %v562
  %2161 = vmatprep.subr.bf16.mxu0 0
  %2162 = vmatpush1.bf16.msra.mxu0 0
  %2163 = vmatprep.subr.bf16.mxu0 0
  %2164 = vmatpush1.bf16.msra.mxu0 0
  %2165 = vmatprep.subr.bf16.mxu0 0
  %2166 = vmatpush1.bf16.msra.mxu0 0
  %2167 = vmatprep.subr.bf16.mxu0 0
  %2168 = vmatpush1.bf16.msra.mxu0 0
  %2169 = vmatprep.subr.bf16.mxu0 0
  %2170 = vmatpush1.bf16.msra.mxu0 0
  %2171 = vmatprep.subr.bf16.mxu0 0
  %2172 = vmatpush1.bf16.msra.mxu0 0
  %2173 = vmatprep.subr.bf16.mxu0 0
  %2174 = vmatpush1.bf16.msra.mxu0 0
  %2175 = vmatprep.subr.bf16.mxu0 0
  %2176 = vmatpush1.bf16.msra.mxu0 0
  %2177 = vmatprep.mubr.bf16.mxu0 0
  %2178 = vmatmul.mubr.bf16.gmra.mrb[0].mxu0 %v2103
  %v2179 = vpop.f32.mrb[0].mxu0
  %v2180 = vadd.f32 %v455, %v2179
  %v2181 = vpop.f32.mrb[0].mxu0
  %v2182 = vpop.f32.mrb[0].mxu0
  %v2183 = vpop.f32.mrb[0].mxu0
  %2184 = vdwg.mxu0
  %2185 = vmatprep.subr.bf16.mxu0 %v798
  %2186 = vmatpush1.bf16.msra.mxu0 %v797
  %2187 = vmatprep.subr.bf16.mxu0 %v801
  %2188 = vmatpush1.bf16.msra.mxu0 %v800
  %2189 = vmatprep.subr.bf16.mxu0 %v804
  %2190 = vmatpush1.bf16.msra.mxu0 %v803
  %2191 = vmatprep.subr.bf16.mxu0 %v807
  %2192 = vmatpush1.bf16.msra.mxu0 %v806
  %2193 = vmatprep.subr.bf16.mxu0 %v810
  %2194 = vmatpush1.bf16.msra.mxu0 %v809
  %2195 = vmatprep.subr.bf16.mxu0 %v813
  %2196 = vmatpush1.bf16.msra.mxu0 %v812
  %2197 = vmatprep.subr.bf16.mxu0 %v816
  %2198 = vmatpush1.bf16.msra.mxu0 %v815
  %2199 = vmatprep.subr.bf16.mxu0 %v819
  %2200 = vmatpush1.bf16.msra.mxu0 %v818
  %2201 = vmatprep.subr.bf16.mxu0 0
  %2202 = vmatpush1.bf16.msra.mxu0 0
  %2203 = vmatprep.subr.bf16.mxu0 0
  %2204 = vmatpush1.bf16.msra.mxu0 0
  %2205 = vmatprep.subr.bf16.mxu0 0
  %2206 = vmatpush1.bf16.msra.mxu0 0
  %2207 = vmatprep.subr.bf16.mxu0 0
  %2208 = vmatpush1.bf16.msra.mxu0 0
  %2209 = vmatprep.subr.bf16.mxu0 0
  %2210 = vmatpush1.bf16.msra.mxu0 0
  %2211 = vmatprep.subr.bf16.mxu0 0
  %2212 = vmatpush1.bf16.msra.mxu0 0
  %2213 = vmatprep.subr.bf16.mxu0 0
  %2214 = vmatpush1.bf16.msra.mxu0 0
  %2215 = vmatprep.subr.bf16.mxu0 0
  %2216 = vmatpush1.bf16.msra.mxu0 0
  %2217 = vmatprep.mubr.bf16.mxu0 0
  %2218 = vmatmul.mubr.bf16.gmra.mrb[0].mxu0 %v2000
  %v2219 = vpop.f32.mrb[0].mxu0
  %v2220 = vadd.f32 %v705, %v2219
  %v2221 = vpop.f32.mrb[0].mxu0
  %v2222 = vadd.f32 %v709, %v2221
  %v2223 = vpop.f32.mrb[0].mxu0
  %v2224 = vpop.f32.mrb[0].mxu0
  %2225 = vdwg.mxu0
  %2226 = vmatprep.subr.bf16.mxu0 0
  %2227 = vmatpush1.bf16.msra.mxu0 %v799
  %2228 = vmatprep.subr.bf16.mxu0 0
  %2229 = vmatpush1.bf16.msra.mxu0 %v802
  %2230 = vmatprep.subr.bf16.mxu0 0
  %2231 = vmatpush1.bf16.msra.mxu0 %v805
  %2232 = vmatprep.subr.bf16.mxu0 0
  %2233 = vmatpush1.bf16.msra.mxu0 %v808
  %2234 = vmatprep.subr.bf16.mxu0 0
  %2235 = vmatpush1.bf16.msra.mxu0 %v811
  %2236 = vmatprep.subr.bf16.mxu0 0
  %2237 = vmatpush1.bf16.msra.mxu0 %v814
  %2238 = vmatprep.subr.bf16.mxu0 0
  %2239 = vmatpush1.bf16.msra.mxu0 %v817
  %2240 = vmatprep.subr.bf16.mxu0 0
  %2241 = vmatpush1.bf16.msra.mxu0 %v820
  %2242 = vmatprep.subr.bf16.mxu0 0
  %2243 = vmatpush1.bf16.msra.mxu0 0
  %2244 = vmatprep.subr.bf16.mxu0 0
  %2245 = vmatpush1.bf16.msra.mxu0 0
  %2246 = vmatprep.subr.bf16.mxu0 0
  %2247 = vmatpush1.bf16.msra.mxu0 0
  %2248 = vmatprep.subr.bf16.mxu0 0
  %2249 = vmatpush1.bf16.msra.mxu0 0
  %2250 = vmatprep.subr.bf16.mxu0 0
  %2251 = vmatpush1.bf16.msra.mxu0 0
  %2252 = vmatprep.subr.bf16.mxu0 0
  %2253 = vmatpush1.bf16.msra.mxu0 0
  %2254 = vmatprep.subr.bf16.mxu0 0
  %2255 = vmatpush1.bf16.msra.mxu0 0
  %2256 = vmatprep.subr.bf16.mxu0 0
  %2257 = vmatpush1.bf16.msra.mxu0 0
  %2258 = vmatprep.mubr.bf16.mxu0 0
  %2259 = vmatmul.mubr.bf16.gmra.mrb[0].mxu0 %v2000
  %v2260 = vpop.f32.mrb[0].mxu0
  %v2261 = vadd.f32 %v713, %v2260
  %v2262 = vpop.f32.mrb[0].mxu0
  %v2263 = vpop.f32.mrb[0].mxu0
  %v2264 = vpop.f32.mrb[0].mxu0
  %2265 = vdwg.mxu0
  %s2266 = scalar_lea.vmem [#allocation2], 96
  %v2267 = vld [vmem:[%s2266] sm:$0xff]
  %v2268 = vld [vmem:[%s2266 + $0x8] sm:$0xff]
  %v2269 = vld [vmem:[%s2266 + $0x10] sm:$0xff]
  %v2270 = vadd.f32 %v2267, %v2220
  %v2271 = vxor.u32 %v2270, 2147483648
  %v2272 = vmul.f32 %v2271, 1.442695
  %v2273 = vpow.pop %v2272
  %v2274 = vadd.f32 %v2273, 1.0
  %v2275 = vrcp.pop %v2274
  %v2276 = vmul.f32 1.0, %v2275
  %v2277 = vadd.f32 %v2268, %v2222
  %v2278 = vxor.u32 %v2277, 2147483648
  %v2279 = vmul.f32 %v2278, 1.442695
  %v2280 = vpow.pop %v2279
  %v2281 = vadd.f32 %v2280, 1.0
  %v2282 = vrcp.pop %v2281
  %v2283 = vmul.f32 1.0, %v2282
  %v2284 = vmul.f32 %v2276, %v2261
  %v2285 = vadd.f32 %v2269, %v2284
  %v2286 = vtanh.pop %v2285
  %v2287 = vsub.f32 1.0, %v2283
  %v2288 = vmul.f32 %v2287, %v2286
  %v2289 = vmul.f32 %v2283, %v1999
  %v2290 = vadd.f32 %v2288, %v2289
  %v2291 = vpack.c.bf16 %v2290, %v2290
  %2292 = vmatprep.subr.bf16.mxu0 %v1081
  %2293 = vmatpush1.bf16.msra.mxu0 %v1080
  %2294 = vmatprep.subr.bf16.mxu0 %v1084
  %2295 = vmatpush1.bf16.msra.mxu0 %v1083
  %2296 = vmatprep.subr.bf16.mxu0 %v1087
  %2297 = vmatpush1.bf16.msra.mxu0 %v1086
  %2298 = vmatprep.subr.bf16.mxu0 %v1090
  %2299 = vmatpush1.bf16.msra.mxu0 %v1089
  %2300 = vmatprep.subr.bf16.mxu0 %v1093
  %2301 = vmatpush1.bf16.msra.mxu0 %v1092
  %2302 = vmatprep.subr.bf16.mxu0 %v1096
  %2303 = vmatpush1.bf16.msra.mxu0 %v1095
  %2304 = vmatprep.subr.bf16.mxu0 %v1099
  %2305 = vmatpush1.bf16.msra.mxu0 %v1098
  %2306 = vmatprep.subr.bf16.mxu0 %v1102
  %2307 = vmatpush1.bf16.msra.mxu0 %v1101
  %2308 = vmatprep.subr.bf16.mxu0 0
  %2309 = vmatpush1.bf16.msra.mxu0 0
  %2310 = vmatprep.subr.bf16.mxu0 0
  %2311 = vmatpush1.bf16.msra.mxu0 0
  %2312 = vmatprep.subr.bf16.mxu0 0
  %2313 = vmatpush1.bf16.msra.mxu0 0
  %2314 = vmatprep.subr.bf16.mxu0 0
  %2315 = vmatpush1.bf16.msra.mxu0 0
  %2316 = vmatprep.subr.bf16.mxu0 0
  %2317 = vmatpush1.bf16.msra.mxu0 0
  %2318 = vmatprep.subr.bf16.mxu0 0
  %2319 = vmatpush1.bf16.msra.mxu0 0
  %2320 = vmatprep.subr.bf16.mxu0 0
  %2321 = vmatpush1.bf16.msra.mxu0 0
  %2322 = vmatprep.subr.bf16.mxu0 0
  %2323 = vmatpush1.bf16.msra.mxu0 0
  %2324 = vmatprep.mubr.bf16.mxu0 0
  %2325 = vmatmul.mubr.bf16.gmra.mrb[0].mxu0 %v2291
  %v2326 = vpop.f32.mrb[0].mxu0
  %v2327 = vadd.f32 %v988, %v2326
  %v2328 = vpop.f32.mrb[0].mxu0
  %v2329 = vadd.f32 %v992, %v2328
  %v2330 = vpop.f32.mrb[0].mxu0
  %v2331 = vpop.f32.mrb[0].mxu0
  %2332 = vdwg.mxu0
  %2333 = vmatprep.subr.bf16.mxu0 0
  %2334 = vmatpush1.bf16.msra.mxu0 %v1082
  %2335 = vmatprep.subr.bf16.mxu0 0
  %2336 = vmatpush1.bf16.msra.mxu0 %v1085
  %2337 = vmatprep.subr.bf16.mxu0 0
  %2338 = vmatpush1.bf16.msra.mxu0 %v1088
  %2339 = vmatprep.subr.bf16.mxu0 0
  %2340 = vmatpush1.bf16.msra.mxu0 %v1091
  %2341 = vmatprep.subr.bf16.mxu0 0
  %2342 = vmatpush1.bf16.msra.mxu0 %v1094
  %2343 = vmatprep.subr.bf16.mxu0 0
  %2344 = vmatpush1.bf16.msra.mxu0 %v1097
  %2345 = vmatprep.subr.bf16.mxu0 0
  %2346 = vmatpush1.bf16.msra.mxu0 %v1100
  %2347 = vmatprep.subr.bf16.mxu0 0
  %2348 = vmatpush1.bf16.msra.mxu0 %v1103
  %2349 = vmatprep.subr.bf16.mxu0 0
  %2350 = vmatpush1.bf16.msra.mxu0 0
  %2351 = vmatprep.subr.bf16.mxu0 0
  %2352 = vmatpush1.bf16.msra.mxu0 0
  %2353 = vmatprep.subr.bf16.mxu0 0
  %2354 = vmatpush1.bf16.msra.mxu0 0
  %2355 = vmatprep.subr.bf16.mxu0 0
  %2356 = vmatpush1.bf16.msra.mxu0 0
  %2357 = vmatprep.subr.bf16.mxu0 0
  %2358 = vmatpush1.bf16.msra.mxu0 0
  %2359 = vmatprep.subr.bf16.mxu0 0
  %2360 = vmatpush1.bf16.msra.mxu0 0
  %2361 = vmatprep.subr.bf16.mxu0 0
  %2362 = vmatpush1.bf16.msra.mxu0 0
  %2363 = vmatprep.subr.bf16.mxu0 0
  %2364 = vmatpush1.bf16.msra.mxu0 0
  %2365 = vmatprep.mubr.bf16.mxu0 0
  %2366 = vmatmul.mubr.bf16.gmra.mrb[0].mxu0 %v2291
  %v2367 = vpop.f32.mrb[0].mxu0
  %v2368 = vadd.f32 %v996, %v2367
  %v2369 = vpop.f32.mrb[0].mxu0
  %v2370 = vpop.f32.mrb[0].mxu0
  %v2371 = vpop.f32.mrb[0].mxu0
  %2372 = vdwg.mxu0
  %v2373 = vadd.f32 %v2327, %v2139
  %v2374 = vxor.u32 %v2373, 2147483648
  %v2375 = vmul.f32 %v2374, 1.442695
  %v2376 = vpow.pop %v2375
  %v2377 = vadd.f32 %v2376, 1.0
  %v2378 = vrcp.pop %v2377
  %v2379 = vmul.f32 1.0, %v2378
  %v2380 = vadd.f32 %v2329, %v2141
  %v2381 = vxor.u32 %v2380, 2147483648
  %v2382 = vmul.f32 %v2381, 1.442695
  %v2383 = vpow.pop %v2382
  %v2384 = vadd.f32 %v2383, 1.0
  %v2385 = vrcp.pop %v2384
  %v2386 = vmul.f32 1.0, %v2385
  %v2387 = vmul.f32 %v2379, %v2180
  %v2388 = vadd.f32 %v2368, %v2387
  %v2389 = vtanh.pop %v2388
  %v2390 = vsub.f32 1.0, %v2386
  %v2391 = vmul.f32 %v2390, %v2389
  %v2392 = vmul.f32 %v2386, %v2102
  %v2393 = vadd.f32 %v2391, %v2392
  %v2394 = vpack.c.bf16 %v2393, %v2393
  %2395 = vmatprep.subr.bf16.mxu0 %v540
  %2396 = vmatpush1.bf16.msra.mxu0 %v539
  %2397 = vmatprep.subr.bf16.mxu0 %v543
  %2398 = vmatpush1.bf16.msra.mxu0 %v542
  %2399 = vmatprep.subr.bf16.mxu0 %v546
  %2400 = vmatpush1.bf16.msra.mxu0 %v545
  %2401 = vmatprep.subr.bf16.mxu0 %v549
  %2402 = vmatpush1.bf16.msra.mxu0 %v548
  %2403 = vmatprep.subr.bf16.mxu0 %v552
  %2404 = vmatpush1.bf16.msra.mxu0 %v551
  %2405 = vmatprep.subr.bf16.mxu0 %v555
  %2406 = vmatpush1.bf16.msra.mxu0 %v554
  %2407 = vmatprep.subr.bf16.mxu0 %v558
  %2408 = vmatpush1.bf16.msra.mxu0 %v557
  %2409 = vmatprep.subr.bf16.mxu0 %v561
  %2410 = vmatpush1.bf16.msra.mxu0 %v560
  %2411 = vmatprep.subr.bf16.mxu0 0
  %2412 = vmatpush1.bf16.msra.mxu0 0
  %2413 = vmatprep.subr.bf16.mxu0 0
  %2414 = vmatpush1.bf16.msra.mxu0 0
  %2415 = vmatprep.subr.bf16.mxu0 0
  %2416 = vmatpush1.bf16.msra.mxu0 0
  %2417 = vmatprep.subr.bf16.mxu0 0
  %2418 = vmatpush1.bf16.msra.mxu0 0
  %2419 = vmatprep.subr.bf16.mxu0 0
  %2420 = vmatpush1.bf16.msra.mxu0 0
  %2421 = vmatprep.subr.bf16.mxu0 0
  %2422 = vmatpush1.bf16.msra.mxu0 0
  %2423 = vmatprep.subr.bf16.mxu0 0
  %2424 = vmatpush1.bf16.msra.mxu0 0
  %2425 = vmatprep.subr.bf16.mxu0 0
  %2426 = vmatpush1.bf16.msra.mxu0 0
  %2427 = vmatprep.mubr.bf16.mxu0 0
  %2428 = vmatmul.mubr.bf16.gmra.mrb[0].mxu0 %v2394
  %v2429 = vpop.f32.mrb[0].mxu0
  %v2430 = vadd.f32 %v447, %v2429
  %v2431 = vpop.f32.mrb[0].mxu0
  %v2432 = vadd.f32 %v451, %v2431
  %v2433 = vpop.f32.mrb[0].mxu0
  %v2434 = vpop.f32.mrb[0].mxu0
  %2435 = vdwg.mxu0
  %2436 = vmatprep.subr.bf16.mxu0 0
  %2437 = vmatpush1.bf16.msra.mxu0 %v541
  %2438 = vmatprep.subr.bf16.mxu0 0
  %2439 = vmatpush1.bf16.msra.mxu0 %v544
  %2440 = vmatprep.subr.bf16.mxu0 0
  %2441 = vmatpush1.bf16.msra.mxu0 %v547
  %2442 = vmatprep.subr.bf16.mxu0 0
  %2443 = vmatpush1.bf16.msra.mxu0 %v550
  %2444 = vmatprep.subr.bf16.mxu0 0
  %2445 = vmatpush1.bf16.msra.mxu0 %v553
  %2446 = vmatprep.subr.bf16.mxu0 0
  %2447 = vmatpush1.bf16.msra.mxu0 %v556
  %2448 = vmatprep.subr.bf16.mxu0 0
  %2449 = vmatpush1.bf16.msra.mxu0 %v559
  %2450 = vmatprep.subr.bf16.mxu0 0
  %2451 = vmatpush1.bf16.msra.mxu0 %v562
  %2452 = vmatprep.subr.bf16.mxu0 0
  %2453 = vmatpush1.bf16.msra.mxu0 0
  %2454 = vmatprep.subr.bf16.mxu0 0
  %2455 = vmatpush1.bf16.msra.mxu0 0
  %2456 = vmatprep.subr.bf16.mxu0 0
  %2457 = vmatpush1.bf16.msra.mxu0 0
  %2458 = vmatprep.subr.bf16.mxu0 0
  %2459 = vmatpush1.bf16.msra.mxu0 0
  %2460 = vmatprep.subr.bf16.mxu0 0
  %2461 = vmatpush1.bf16.msra.mxu0 0
  %2462 = vmatprep.subr.bf16.mxu0 0
  %2463 = vmatpush1.bf16.msra.mxu0 0
  %2464 = vmatprep.subr.bf16.mxu0 0
  %2465 = vmatpush1.bf16.msra.mxu0 0
  %2466 = vmatprep.subr.bf16.mxu0 0
  %2467 = vmatpush1.bf16.msra.mxu0 0
  %2468 = vmatprep.mubr.bf16.mxu0 0
  %2469 = vmatmul.mubr.bf16.gmra.mrb[0].mxu0 %v2394
  %v2470 = vpop.f32.mrb[0].mxu0
  %v2471 = vadd.f32 %v455, %v2470
  %v2472 = vpop.f32.mrb[0].mxu0
  %v2473 = vpop.f32.mrb[0].mxu0
  %v2474 = vpop.f32.mrb[0].mxu0
  %2475 = vdwg.mxu0
  %2476 = vmatprep.subr.bf16.mxu0 %v798
  %2477 = vmatpush1.bf16.msra.mxu0 %v797
  %2478 = vmatprep.subr.bf16.mxu0 %v801
  %2479 = vmatpush1.bf16.msra.mxu0 %v800
  %2480 = vmatprep.subr.bf16.mxu0 %v804
  %2481 = vmatpush1.bf16.msra.mxu0 %v803
  %2482 = vmatprep.subr.bf16.mxu0 %v807
  %2483 = vmatpush1.bf16.msra.mxu0 %v806
  %2484 = vmatprep.subr.bf16.mxu0 %v810
  %2485 = vmatpush1.bf16.msra.mxu0 %v809
  %2486 = vmatprep.subr.bf16.mxu0 %v813
  %2487 = vmatpush1.bf16.msra.mxu0 %v812
  %2488 = vmatprep.subr.bf16.mxu0 %v816
  %2489 = vmatpush1.bf16.msra.mxu0 %v815
  %2490 = vmatprep.subr.bf16.mxu0 %v819
  %2491 = vmatpush1.bf16.msra.mxu0 %v818
  %2492 = vmatprep.subr.bf16.mxu0 0
  %2493 = vmatpush1.bf16.msra.mxu0 0
  %2494 = vmatprep.subr.bf16.mxu0 0
  %2495 = vmatpush1.bf16.msra.mxu0 0
  %2496 = vmatprep.subr.bf16.mxu0 0
  %2497 = vmatpush1.bf16.msra.mxu0 0
  %2498 = vmatprep.subr.bf16.mxu0 0
  %2499 = vmatpush1.bf16.msra.mxu0 0
  %2500 = vmatprep.subr.bf16.mxu0 0
  %2501 = vmatpush1.bf16.msra.mxu0 0
  %2502 = vmatprep.subr.bf16.mxu0 0
  %2503 = vmatpush1.bf16.msra.mxu0 0
  %2504 = vmatprep.subr.bf16.mxu0 0
  %2505 = vmatpush1.bf16.msra.mxu0 0
  %2506 = vmatprep.subr.bf16.mxu0 0
  %2507 = vmatpush1.bf16.msra.mxu0 0
  %2508 = vmatprep.mubr.bf16.mxu0 0
  %2509 = vmatmul.mubr.bf16.gmra.mrb[0].mxu0 %v2291
  %v2510 = vpop.f32.mrb[0].mxu0
  %v2511 = vadd.f32 %v705, %v2510
  %v2512 = vpop.f32.mrb[0].mxu0
  %v2513 = vadd.f32 %v709, %v2512
  %v2514 = vpop.f32.mrb[0].mxu0
  %v2515 = vpop.f32.mrb[0].mxu0
  %2516 = vdwg.mxu0
  %2517 = vmatprep.subr.bf16.mxu0 0
  %2518 = vmatpush1.bf16.msra.mxu0 %v799
  %2519 = vmatprep.subr.bf16.mxu0 0
  %2520 = vmatpush1.bf16.msra.mxu0 %v802
  %2521 = vmatprep.subr.bf16.mxu0 0
  %2522 = vmatpush1.bf16.msra.mxu0 %v805
  %2523 = vmatprep.subr.bf16.mxu0 0
  %2524 = vmatpush1.bf16.msra.mxu0 %v808
  %2525 = vmatprep.subr.bf16.mxu0 0
  %2526 = vmatpush1.bf16.msra.mxu0 %v811
  %2527 = vmatprep.subr.bf16.mxu0 0
  %2528 = vmatpush1.bf16.msra.mxu0 %v814
  %2529 = vmatprep.subr.bf16.mxu0 0
  %2530 = vmatpush1.bf16.msra.mxu0 %v817
  %2531 = vmatprep.subr.bf16.mxu0 0
  %2532 = vmatpush1.bf16.msra.mxu0 %v820
  %2533 = vmatprep.subr.bf16.mxu0 0
  %2534 = vmatpush1.bf16.msra.mxu0 0
  %2535 = vmatprep.subr.bf16.mxu0 0
  %2536 = vmatpush1.bf16.msra.mxu0 0
  %2537 = vmatprep.subr.bf16.mxu0 0
  %2538 = vmatpush1.bf16.msra.mxu0 0
  %2539 = vmatprep.subr.bf16.mxu0 0
  %2540 = vmatpush1.bf16.msra.mxu0 0
  %2541 = vmatprep.subr.bf16.mxu0 0
  %2542 = vmatpush1.bf16.msra.mxu0 0
  %2543 = vmatprep.subr.bf16.mxu0 0
  %2544 = vmatpush1.bf16.msra.mxu0 0
  %2545 = vmatprep.subr.bf16.mxu0 0
  %2546 = vmatpush1.bf16.msra.mxu0 0
  %2547 = vmatprep.subr.bf16.mxu0 0
  %2548 = vmatpush1.bf16.msra.mxu0 0
  %2549 = vmatprep.mubr.bf16.mxu0 0
  %2550 = vmatmul.mubr.bf16.gmra.mrb[0].mxu0 %v2291
  %v2551 = vpop.f32.mrb[0].mxu0
  %v2552 = vadd.f32 %v713, %v2551
  %v2553 = vpop.f32.mrb[0].mxu0
  %v2554 = vpop.f32.mrb[0].mxu0
  %v2555 = vpop.f32.mrb[0].mxu0
  %2556 = vdwg.mxu0
  %s2557 = scalar_lea.vmem [#allocation2], 120
  %v2558 = vld [vmem:[%s2557] sm:$0xff]
  %v2559 = vld [vmem:[%s2557 + $0x8] sm:$0xff]
  %v2560 = vld [vmem:[%s2557 + $0x10] sm:$0xff]
  %v2561 = vadd.f32 %v2558, %v2511
  %v2562 = vxor.u32 %v2561, 2147483648
  %v2563 = vmul.f32 %v2562, 1.442695
  %v2564 = vpow.pop %v2563
  %v2565 = vadd.f32 %v2564, 1.0
  %v2566 = vrcp.pop %v2565
  %v2567 = vmul.f32 1.0, %v2566
  %v2568 = vadd.f32 %v2559, %v2513
  %v2569 = vxor.u32 %v2568, 2147483648
  %v2570 = vmul.f32 %v2569, 1.442695
  %v2571 = vpow.pop %v2570
  %v2572 = vadd.f32 %v2571, 1.0
  %v2573 = vrcp.pop %v2572
  %v2574 = vmul.f32 1.0, %v2573
  %v2575 = vmul.f32 %v2567, %v2552
  %v2576 = vadd.f32 %v2560, %v2575
  %v2577 = vtanh.pop %v2576
  %v2578 = vsub.f32 1.0, %v2574
  %v2579 = vmul.f32 %v2578, %v2577
  %v2580 = vmul.f32 %v2574, %v2290
  %v2581 = vadd.f32 %v2579, %v2580
  %v2582 = vpack.c.bf16 %v2581, %v2581
  %2583 = vmatprep.subr.bf16.mxu0 %v1081
  %2584 = vmatpush1.bf16.msra.mxu0 %v1080
  %2585 = vmatprep.subr.bf16.mxu0 %v1084
  %2586 = vmatpush1.bf16.msra.mxu0 %v1083
  %2587 = vmatprep.subr.bf16.mxu0 %v1087
  %2588 = vmatpush1.bf16.msra.mxu0 %v1086
  %2589 = vmatprep.subr.bf16.mxu0 %v1090
  %2590 = vmatpush1.bf16.msra.mxu0 %v1089
  %2591 = vmatprep.subr.bf16.mxu0 %v1093
  %2592 = vmatpush1.bf16.msra.mxu0 %v1092
  %2593 = vmatprep.subr.bf16.mxu0 %v1096
  %2594 = vmatpush1.bf16.msra.mxu0 %v1095
  %2595 = vmatprep.subr.bf16.mxu0 %v1099
  %2596 = vmatpush1.bf16.msra.mxu0 %v1098
  %2597 = vmatprep.subr.bf16.mxu0 %v1102
  %2598 = vmatpush1.bf16.msra.mxu0 %v1101
  %2599 = vmatprep.subr.bf16.mxu0 0
  %2600 = vmatpush1.bf16.msra.mxu0 0
  %2601 = vmatprep.subr.bf16.mxu0 0
  %2602 = vmatpush1.bf16.msra.mxu0 0
  %2603 = vmatprep.subr.bf16.mxu0 0
  %2604 = vmatpush1.bf16.msra.mxu0 0
  %2605 = vmatprep.subr.bf16.mxu0 0
  %2606 = vmatpush1.bf16.msra.mxu0 0
  %2607 = vmatprep.subr.bf16.mxu0 0
  %2608 = vmatpush1.bf16.msra.mxu0 0
  %2609 = vmatprep.subr.bf16.mxu0 0
  %2610 = vmatpush1.bf16.msra.mxu0 0
  %2611 = vmatprep.subr.bf16.mxu0 0
  %2612 = vmatpush1.bf16.msra.mxu0 0
  %2613 = vmatprep.subr.bf16.mxu0 0
  %2614 = vmatpush1.bf16.msra.mxu0 0
  %2615 = vmatprep.mubr.bf16.mxu0 0
  %2616 = vmatmul.mubr.bf16.gmra.mrb[0].mxu0 %v2582
  %v2617 = vpop.f32.mrb[0].mxu0
  %v2618 = vadd.f32 %v988, %v2617
  %v2619 = vpop.f32.mrb[0].mxu0
  %v2620 = vadd.f32 %v992, %v2619
  %v2621 = vpop.f32.mrb[0].mxu0
  %v2622 = vpop.f32.mrb[0].mxu0
  %2623 = vdwg.mxu0
  %2624 = vmatprep.subr.bf16.mxu0 0
  %2625 = vmatpush1.bf16.msra.mxu0 %v1082
  %2626 = vmatprep.subr.bf16.mxu0 0
  %2627 = vmatpush1.bf16.msra.mxu0 %v1085
  %2628 = vmatprep.subr.bf16.mxu0 0
  %2629 = vmatpush1.bf16.msra.mxu0 %v1088
  %2630 = vmatprep.subr.bf16.mxu0 0
  %2631 = vmatpush1.bf16.msra.mxu0 %v1091
  %2632 = vmatprep.subr.bf16.mxu0 0
  %2633 = vmatpush1.bf16.msra.mxu0 %v1094
  %2634 = vmatprep.subr.bf16.mxu0 0
  %2635 = vmatpush1.bf16.msra.mxu0 %v1097
  %2636 = vmatprep.subr.bf16.mxu0 0
  %2637 = vmatpush1.bf16.msra.mxu0 %v1100
  %2638 = vmatprep.subr.bf16.mxu0 0
  %2639 = vmatpush1.bf16.msra.mxu0 %v1103
  %2640 = vmatprep.subr.bf16.mxu0 0
  %2641 = vmatpush1.bf16.msra.mxu0 0
  %2642 = vmatprep.subr.bf16.mxu0 0
  %2643 = vmatpush1.bf16.msra.mxu0 0
  %2644 = vmatprep.subr.bf16.mxu0 0
  %2645 = vmatpush1.bf16.msra.mxu0 0
  %2646 = vmatprep.subr.bf16.mxu0 0
  %2647 = vmatpush1.bf16.msra.mxu0 0
  %2648 = vmatprep.subr.bf16.mxu0 0
  %2649 = vmatpush1.bf16.msra.mxu0 0
  %2650 = vmatprep.subr.bf16.mxu0 0
  %2651 = vmatpush1.bf16.msra.mxu0 0
  %2652 = vmatprep.subr.bf16.mxu0 0
  %2653 = vmatpush1.bf16.msra.mxu0 0
  %2654 = vmatprep.subr.bf16.mxu0 0
  %2655 = vmatpush1.bf16.msra.mxu0 0
  %2656 = vmatprep.mubr.bf16.mxu0 0
  %2657 = vmatmul.mubr.bf16.gmra.mrb[0].mxu0 %v2582
  %v2658 = vpop.f32.mrb[0].mxu0
  %v2659 = vadd.f32 %v996, %v2658
  %v2660 = vpop.f32.mrb[0].mxu0
  %v2661 = vpop.f32.mrb[0].mxu0
  %v2662 = vpop.f32.mrb[0].mxu0
  %2663 = vdwg.mxu0
  %v2664 = vadd.f32 %v2618, %v2430
  %v2665 = vxor.u32 %v2664, 2147483648
  %v2666 = vmul.f32 %v2665, 1.442695
  %v2667 = vpow.pop %v2666
  %v2668 = vadd.f32 %v2667, 1.0
  %v2669 = vrcp.pop %v2668
  %v2670 = vmul.f32 1.0, %v2669
  %v2671 = vadd.f32 %v2620, %v2432
  %v2672 = vxor.u32 %v2671, 2147483648
  %v2673 = vmul.f32 %v2672, 1.442695
  %v2674 = vpow.pop %v2673
  %v2675 = vadd.f32 %v2674, 1.0
  %v2676 = vrcp.pop %v2675
  %v2677 = vmul.f32 1.0, %v2676
  %v2678 = vmul.f32 %v2670, %v2471
  %v2679 = vadd.f32 %v2659, %v2678
  %v2680 = vtanh.pop %v2679
  %v2681 = vsub.f32 1.0, %v2677
  %v2682 = vmul.f32 %v2681, %v2680
  %v2683 = vmul.f32 %v2677, %v2393
  %v2684 = vadd.f32 %v2682, %v2683
  %v2685 = vpack.c.bf16 %v2684, %v2684
  %2686 = vmatprep.subr.bf16.mxu0 %v540
  %2687 = vmatpush1.bf16.msra.mxu0 %v539
  %2688 = vmatprep.subr.bf16.mxu0 %v543
  %2689 = vmatpush1.bf16.msra.mxu0 %v542
  %2690 = vmatprep.subr.bf16.mxu0 %v546
  %2691 = vmatpush1.bf16.msra.mxu0 %v545
  %2692 = vmatprep.subr.bf16.mxu0 %v549
  %2693 = vmatpush1.bf16.msra.mxu0 %v548
  %2694 = vmatprep.subr.bf16.mxu0 %v552
  %2695 = vmatpush1.bf16.msra.mxu0 %v551
  %2696 = vmatprep.subr.bf16.mxu0 %v555
  %2697 = vmatpush1.bf16.msra.mxu0 %v554
  %2698 = vmatprep.subr.bf16.mxu0 %v558
  %2699 = vmatpush1.bf16.msra.mxu0 %v557
  %2700 = vmatprep.subr.bf16.mxu0 %v561
  %2701 = vmatpush1.bf16.msra.mxu0 %v560
  %2702 = vmatprep.subr.bf16.mxu0 0
  %2703 = vmatpush1.bf16.msra.mxu0 0
  %2704 = vmatprep.subr.bf16.mxu0 0
  %2705 = vmatpush1.bf16.msra.mxu0 0
  %2706 = vmatprep.subr.bf16.mxu0 0
  %2707 = vmatpush1.bf16.msra.mxu0 0
  %2708 = vmatprep.subr.bf16.mxu0 0
  %2709 = vmatpush1.bf16.msra.mxu0 0
  %2710 = vmatprep.subr.bf16.mxu0 0
  %2711 = vmatpush1.bf16.msra.mxu0 0
  %2712 = vmatprep.subr.bf16.mxu0 0
  %2713 = vmatpush1.bf16.msra.mxu0 0
  %2714 = vmatprep.subr.bf16.mxu0 0
  %2715 = vmatpush1.bf16.msra.mxu0 0
  %2716 = vmatprep.subr.bf16.mxu0 0
  %2717 = vmatpush1.bf16.msra.mxu0 0
  %2718 = vmatprep.mubr.bf16.mxu0 0
  %2719 = vmatmul.mubr.bf16.gmra.mrb[0].mxu0 %v2685
  %v2720 = vpop.f32.mrb[0].mxu0
  %v2721 = vadd.f32 %v447, %v2720
  %v2722 = vpop.f32.mrb[0].mxu0
  %v2723 = vadd.f32 %v451, %v2722
  %v2724 = vpop.f32.mrb[0].mxu0
  %v2725 = vpop.f32.mrb[0].mxu0
  %2726 = vdwg.mxu0
  %2727 = vmatprep.subr.bf16.mxu0 0
  %2728 = vmatpush1.bf16.msra.mxu0 %v541
  %2729 = vmatprep.subr.bf16.mxu0 0
  %2730 = vmatpush1.bf16.msra.mxu0 %v544
  %2731 = vmatprep.subr.bf16.mxu0 0
  %2732 = vmatpush1.bf16.msra.mxu0 %v547
  %2733 = vmatprep.subr.bf16.mxu0 0
  %2734 = vmatpush1.bf16.msra.mxu0 %v550
  %2735 = vmatprep.subr.bf16.mxu0 0
  %2736 = vmatpush1.bf16.msra.mxu0 %v553
  %2737 = vmatprep.subr.bf16.mxu0 0
  %2738 = vmatpush1.bf16.msra.mxu0 %v556
  %2739 = vmatprep.subr.bf16.mxu0 0
  %2740 = vmatpush1.bf16.msra.mxu0 %v559
  %2741 = vmatprep.subr.bf16.mxu0 0
  %2742 = vmatpush1.bf16.msra.mxu0 %v562
  %2743 = vmatprep.subr.bf16.mxu0 0
  %2744 = vmatpush1.bf16.msra.mxu0 0
  %2745 = vmatprep.subr.bf16.mxu0 0
  %2746 = vmatpush1.bf16.msra.mxu0 0
  %2747 = vmatprep.subr.bf16.mxu0 0
  %2748 = vmatpush1.bf16.msra.mxu0 0
  %2749 = vmatprep.subr.bf16.mxu0 0
  %2750 = vmatpush1.bf16.msra.mxu0 0
  %2751 = vmatprep.subr.bf16.mxu0 0
  %2752 = vmatpush1.bf16.msra.mxu0 0
  %2753 = vmatprep.subr.bf16.mxu0 0
  %2754 = vmatpush1.bf16.msra.mxu0 0
  %2755 = vmatprep.subr.bf16.mxu0 0
  %2756 = vmatpush1.bf16.msra.mxu0 0
  %2757 = vmatprep.subr.bf16.mxu0 0
  %2758 = vmatpush1.bf16.msra.mxu0 0
  %2759 = vmatprep.mubr.bf16.mxu0 0
  %2760 = vmatmul.mubr.bf16.gmra.mrb[0].mxu0 %v2685
  %v2761 = vpop.f32.mrb[0].mxu0
  %v2762 = vadd.f32 %v455, %v2761
  %v2763 = vpop.f32.mrb[0].mxu0
  %v2764 = vpop.f32.mrb[0].mxu0
  %v2765 = vpop.f32.mrb[0].mxu0
  %2766 = vdwg.mxu0
  %2767 = vmatprep.subr.bf16.mxu0 %v798
  %2768 = vmatpush1.bf16.msra.mxu0 %v797
  %2769 = vmatprep.subr.bf16.mxu0 %v801
  %2770 = vmatpush1.bf16.msra.mxu0 %v800
  %2771 = vmatprep.subr.bf16.mxu0 %v804
  %2772 = vmatpush1.bf16.msra.mxu0 %v803
  %2773 = vmatprep.subr.bf16.mxu0 %v807
  %2774 = vmatpush1.bf16.msra.mxu0 %v806
  %2775 = vmatprep.subr.bf16.mxu0 %v810
  %2776 = vmatpush1.bf16.msra.mxu0 %v809
  %2777 = vmatprep.subr.bf16.mxu0 %v813
  %2778 = vmatpush1.bf16.msra.mxu0 %v812
  %2779 = vmatprep.subr.bf16.mxu0 %v816
  %2780 = vmatpush1.bf16.msra.mxu0 %v815
  %2781 = vmatprep.subr.bf16.mxu0 %v819
  %2782 = vmatpush1.bf16.msra.mxu0 %v818
  %2783 = vmatprep.subr.bf16.mxu0 0
  %2784 = vmatpush1.bf16.msra.mxu0 0
  %2785 = vmatprep.subr.bf16.mxu0 0
  %2786 = vmatpush1.bf16.msra.mxu0 0
  %2787 = vmatprep.subr.bf16.mxu0 0
  %2788 = vmatpush1.bf16.msra.mxu0 0
  %2789 = vmatprep.subr.bf16.mxu0 0
  %2790 = vmatpush1.bf16.msra.mxu0 0
  %2791 = vmatprep.subr.bf16.mxu0 0
  %2792 = vmatpush1.bf16.msra.mxu0 0
  %2793 = vmatprep.subr.bf16.mxu0 0
  %2794 = vmatpush1.bf16.msra.mxu0 0
  %2795 = vmatprep.subr.bf16.mxu0 0
  %2796 = vmatpush1.bf16.msra.mxu0 0
  %2797 = vmatprep.subr.bf16.mxu0 0
  %2798 = vmatpush1.bf16.msra.mxu0 0
  %2799 = vmatprep.mubr.bf16.mxu0 0
  %2800 = vmatmul.mubr.bf16.gmra.mrb[0].mxu0 %v2582
  %v2801 = vpop.f32.mrb[0].mxu0
  %v2802 = vadd.f32 %v705, %v2801
  %v2803 = vpop.f32.mrb[0].mxu0
  %v2804 = vadd.f32 %v709, %v2803
  %v2805 = vpop.f32.mrb[0].mxu0
  %v2806 = vpop.f32.mrb[0].mxu0
  %2807 = vdwg.mxu0
  %2808 = vmatprep.subr.bf16.mxu0 0
  %2809 = vmatpush1.bf16.msra.mxu0 %v799
  %2810 = vmatprep.subr.bf16.mxu0 0
  %2811 = vmatpush1.bf16.msra.mxu0 %v802
  %2812 = vmatprep.subr.bf16.mxu0 0
  %2813 = vmatpush1.bf16.msra.mxu0 %v805
  %2814 = vmatprep.subr.bf16.mxu0 0
  %2815 = vmatpush1.bf16.msra.mxu0 %v808
  %2816 = vmatprep.subr.bf16.mxu0 0
  %2817 = vmatpush1.bf16.msra.mxu0 %v811
  %2818 = vmatprep.subr.bf16.mxu0 0
  %2819 = vmatpush1.bf16.msra.mxu0 %v814
  %2820 = vmatprep.subr.bf16.mxu0 0
  %2821 = vmatpush1.bf16.msra.mxu0 %v817
  %2822 = vmatprep.subr.bf16.mxu0 0
  %2823 = vmatpush1.bf16.msra.mxu0 %v820
  %2824 = vmatprep.subr.bf16.mxu0 0
  %2825 = vmatpush1.bf16.msra.mxu0 0
  %2826 = vmatprep.subr.bf16.mxu0 0
  %2827 = vmatpush1.bf16.msra.mxu0 0
  %2828 = vmatprep.subr.bf16.mxu0 0
  %2829 = vmatpush1.bf16.msra.mxu0 0
  %2830 = vmatprep.subr.bf16.mxu0 0
  %2831 = vmatpush1.bf16.msra.mxu0 0
  %2832 = vmatprep.subr.bf16.mxu0 0
  %2833 = vmatpush1.bf16.msra.mxu0 0
  %2834 = vmatprep.subr.bf16.mxu0 0
  %2835 = vmatpush1.bf16.msra.mxu0 0
  %2836 = vmatprep.subr.bf16.mxu0 0
  %2837 = vmatpush1.bf16.msra.mxu0 0
  %2838 = vmatprep.subr.bf16.mxu0 0
  %2839 = vmatpush1.bf16.msra.mxu0 0
  %2840 = vmatprep.mubr.bf16.mxu0 0
  %2841 = vmatmul.mubr.bf16.gmra.mrb[0].mxu0 %v2582
  %v2842 = vpop.f32.mrb[0].mxu0
  %v2843 = vadd.f32 %v713, %v2842
  %v2844 = vpop.f32.mrb[0].mxu0
  %v2845 = vpop.f32.mrb[0].mxu0
  %v2846 = vpop.f32.mrb[0].mxu0
  %2847 = vdwg.mxu0
  %s2848 = scalar_lea.vmem [#allocation2], 144
  %v2849 = vld [vmem:[%s2848] sm:$0xff]
  %v2850 = vld [vmem:[%s2848 + $0x8] sm:$0xff]
  %v2851 = vld [vmem:[%s2848 + $0x10] sm:$0xff]
  %v2852 = vadd.f32 %v2849, %v2802
  %v2853 = vxor.u32 %v2852, 2147483648
  %v2854 = vmul.f32 %v2853, 1.442695
  %v2855 = vpow.pop %v2854
  %v2856 = vadd.f32 %v2855, 1.0
  %v2857 = vrcp.pop %v2856
  %v2858 = vmul.f32 1.0, %v2857
  %v2859 = vadd.f32 %v2850, %v2804
  %v2860 = vxor.u32 %v2859, 2147483648
  %v2861 = vmul.f32 %v2860, 1.442695
  %v2862 = vpow.pop %v2861
  %v2863 = vadd.f32 %v2862, 1.0
  %v2864 = vrcp.pop %v2863
  %v2865 = vmul.f32 1.0, %v2864
  %v2866 = vmul.f32 %v2858, %v2843
  %v2867 = vadd.f32 %v2851, %v2866
  %v2868 = vtanh.pop %v2867
  %v2869 = vsub.f32 1.0, %v2865
  %v2870 = vmul.f32 %v2869, %v2868
  %v2871 = vmul.f32 %v2865, %v2581
  %v2872 = vadd.f32 %v2870, %v2871
  %v2873 = vpack.c.bf16 %v2872, %v2872
  %2874 = vmatprep.subr.bf16.mxu0 %v1081
  %2875 = vmatpush1.bf16.msra.mxu0 %v1080
  %2876 = vmatprep.subr.bf16.mxu0 %v1084
  %2877 = vmatpush1.bf16.msra.mxu0 %v1083
  %2878 = vmatprep.subr.bf16.mxu0 %v1087
  %2879 = vmatpush1.bf16.msra.mxu0 %v1086
  %2880 = vmatprep.subr.bf16.mxu0 %v1090
  %2881 = vmatpush1.bf16.msra.mxu0 %v1089
  %2882 = vmatprep.subr.bf16.mxu0 %v1093
  %2883 = vmatpush1.bf16.msra.mxu0 %v1092
  %2884 = vmatprep.subr.bf16.mxu0 %v1096
  %2885 = vmatpush1.bf16.msra.mxu0 %v1095
  %2886 = vmatprep.subr.bf16.mxu0 %v1099
  %2887 = vmatpush1.bf16.msra.mxu0 %v1098
  %2888 = vmatprep.subr.bf16.mxu0 %v1102
  %2889 = vmatpush1.bf16.msra.mxu0 %v1101
  %2890 = vmatprep.subr.bf16.mxu0 0
  %2891 = vmatpush1.bf16.msra.mxu0 0
  %2892 = vmatprep.subr.bf16.mxu0 0
  %2893 = vmatpush1.bf16.msra.mxu0 0
  %2894 = vmatprep.subr.bf16.mxu0 0
  %2895 = vmatpush1.bf16.msra.mxu0 0
  %2896 = vmatprep.subr.bf16.mxu0 0
  %2897 = vmatpush1.bf16.msra.mxu0 0
  %2898 = vmatprep.subr.bf16.mxu0 0
  %2899 = vmatpush1.bf16.msra.mxu0 0
  %2900 = vmatprep.subr.bf16.mxu0 0
  %2901 = vmatpush1.bf16.msra.mxu0 0
  %2902 = vmatprep.subr.bf16.mxu0 0
  %2903 = vmatpush1.bf16.msra.mxu0 0
  %2904 = vmatprep.subr.bf16.mxu0 0
  %2905 = vmatpush1.bf16.msra.mxu0 0
  %2906 = vmatprep.mubr.bf16.mxu0 0
  %2907 = vmatmul.mubr.bf16.gmra.mrb[0].mxu0 %v2873
  %v2908 = vpop.f32.mrb[0].mxu0
  %v2909 = vadd.f32 %v988, %v2908
  %v2910 = vpop.f32.mrb[0].mxu0
  %v2911 = vadd.f32 %v992, %v2910
  %v2912 = vpop.f32.mrb[0].mxu0
  %v2913 = vpop.f32.mrb[0].mxu0
  %2914 = vdwg.mxu0
  %2915 = vmatprep.subr.bf16.mxu0 0
  %2916 = vmatpush1.bf16.msra.mxu0 %v1082
  %2917 = vmatprep.subr.bf16.mxu0 0
  %2918 = vmatpush1.bf16.msra.mxu0 %v1085
  %2919 = vmatprep.subr.bf16.mxu0 0
  %2920 = vmatpush1.bf16.msra.mxu0 %v1088
  %2921 = vmatprep.subr.bf16.mxu0 0
  %2922 = vmatpush1.bf16.msra.mxu0 %v1091
  %2923 = vmatprep.subr.bf16.mxu0 0
  %2924 = vmatpush1.bf16.msra.mxu0 %v1094
  %2925 = vmatprep.subr.bf16.mxu0 0
  %2926 = vmatpush1.bf16.msra.mxu0 %v1097
  %2927 = vmatprep.subr.bf16.mxu0 0
  %2928 = vmatpush1.bf16.msra.mxu0 %v1100
  %2929 = vmatprep.subr.bf16.mxu0 0
  %2930 = vmatpush1.bf16.msra.mxu0 %v1103
  %2931 = vmatprep.subr.bf16.mxu0 0
  %2932 = vmatpush1.bf16.msra.mxu0 0
  %2933 = vmatprep.subr.bf16.mxu0 0
  %2934 = vmatpush1.bf16.msra.mxu0 0
  %2935 = vmatprep.subr.bf16.mxu0 0
  %2936 = vmatpush1.bf16.msra.mxu0 0
  %2937 = vmatprep.subr.bf16.mxu0 0
  %2938 = vmatpush1.bf16.msra.mxu0 0
  %2939 = vmatprep.subr.bf16.mxu0 0
  %2940 = vmatpush1.bf16.msra.mxu0 0
  %2941 = vmatprep.subr.bf16.mxu0 0
  %2942 = vmatpush1.bf16.msra.mxu0 0
  %2943 = vmatprep.subr.bf16.mxu0 0
  %2944 = vmatpush1.bf16.msra.mxu0 0
  %2945 = vmatprep.subr.bf16.mxu0 0
  %2946 = vmatpush1.bf16.msra.mxu0 0
  %2947 = vmatprep.mubr.bf16.mxu0 0
  %2948 = vmatmul.mubr.bf16.gmra.mrb[0].mxu0 %v2873
  %v2949 = vpop.f32.mrb[0].mxu0
  %v2950 = vadd.f32 %v996, %v2949
  %v2951 = vpop.f32.mrb[0].mxu0
  %v2952 = vpop.f32.mrb[0].mxu0
  %v2953 = vpop.f32.mrb[0].mxu0
  %2954 = vdwg.mxu0
  %v2955 = vadd.f32 %v2909, %v2721
  %v2956 = vxor.u32 %v2955, 2147483648
  %v2957 = vmul.f32 %v2956, 1.442695
  %v2958 = vpow.pop %v2957
  %v2959 = vadd.f32 %v2958, 1.0
  %v2960 = vrcp.pop %v2959
  %v2961 = vmul.f32 1.0, %v2960
  %v2962 = vadd.f32 %v2911, %v2723
  %v2963 = vxor.u32 %v2962, 2147483648
  %v2964 = vmul.f32 %v2963, 1.442695
  %v2965 = vpow.pop %v2964
  %v2966 = vadd.f32 %v2965, 1.0
  %v2967 = vrcp.pop %v2966
  %v2968 = vmul.f32 1.0, %v2967
  %v2969 = vmul.f32 %v2961, %v2762
  %v2970 = vadd.f32 %v2950, %v2969
  %v2971 = vtanh.pop %v2970
  %v2972 = vsub.f32 1.0, %v2968
  %v2973 = vmul.f32 %v2972, %v2971
  %v2974 = vmul.f32 %v2968, %v2684
  %v2975 = vadd.f32 %v2973, %v2974
  %v2976 = vpack.c.bf16 %v2975, %v2975
  %2977 = vmatprep.subr.bf16.mxu0 %v540
  %2978 = vmatpush1.bf16.msra.mxu0 %v539
  %2979 = vmatprep.subr.bf16.mxu0 %v543
  %2980 = vmatpush1.bf16.msra.mxu0 %v542
  %2981 = vmatprep.subr.bf16.mxu0 %v546
  %2982 = vmatpush1.bf16.msra.mxu0 %v545
  %2983 = vmatprep.subr.bf16.mxu0 %v549
  %2984 = vmatpush1.bf16.msra.mxu0 %v548
  %2985 = vmatprep.subr.bf16.mxu0 %v552
  %2986 = vmatpush1.bf16.msra.mxu0 %v551
  %2987 = vmatprep.subr.bf16.mxu0 %v555
  %2988 = vmatpush1.bf16.msra.mxu0 %v554
  %2989 = vmatprep.subr.bf16.mxu0 %v558
  %2990 = vmatpush1.bf16.msra.mxu0 %v557
  %2991 = vmatprep.subr.bf16.mxu0 %v561
  %2992 = vmatpush1.bf16.msra.mxu0 %v560
  %2993 = vmatprep.subr.bf16.mxu0 0
  %2994 = vmatpush1.bf16.msra.mxu0 0
  %2995 = vmatprep.subr.bf16.mxu0 0
  %2996 = vmatpush1.bf16.msra.mxu0 0
  %2997 = vmatprep.subr.bf16.mxu0 0
  %2998 = vmatpush1.bf16.msra.mxu0 0
  %2999 = vmatprep.subr.bf16.mxu0 0
  %3000 = vmatpush1.bf16.msra.mxu0 0
  %3001 = vmatprep.subr.bf16.mxu0 0
  %3002 = vmatpush1.bf16.msra.mxu0 0
  %3003 = vmatprep.subr.bf16.mxu0 0
  %3004 = vmatpush1.bf16.msra.mxu0 0
  %3005 = vmatprep.subr.bf16.mxu0 0
  %3006 = vmatpush1.bf16.msra.mxu0 0
  %3007 = vmatprep.subr.bf16.mxu0 0
  %3008 = vmatpush1.bf16.msra.mxu0 0
  %3009 = vmatprep.mubr.bf16.mxu0 0
  %3010 = vmatmul.mubr.bf16.gmra.mrb[0].mxu0 %v2976
  %v3011 = vpop.f32.mrb[0].mxu0
  %v3012 = vadd.f32 %v447, %v3011
  %v3013 = vpop.f32.mrb[0].mxu0
  %v3014 = vadd.f32 %v451, %v3013
  %v3015 = vpop.f32.mrb[0].mxu0
  %v3016 = vpop.f32.mrb[0].mxu0
  %3017 = vdwg.mxu0
  %3018 = vmatprep.subr.bf16.mxu0 0
  %3019 = vmatpush1.bf16.msra.mxu0 %v541
  %3020 = vmatprep.subr.bf16.mxu0 0
  %3021 = vmatpush1.bf16.msra.mxu0 %v544
  %3022 = vmatprep.subr.bf16.mxu0 0
  %3023 = vmatpush1.bf16.msra.mxu0 %v547
  %3024 = vmatprep.subr.bf16.mxu0 0
  %3025 = vmatpush1.bf16.msra.mxu0 %v550
  %3026 = vmatprep.subr.bf16.mxu0 0
  %3027 = vmatpush1.bf16.msra.mxu0 %v553
  %3028 = vmatprep.subr.bf16.mxu0 0
  %3029 = vmatpush1.bf16.msra.mxu0 %v556
  %3030 = vmatprep.subr.bf16.mxu0 0
  %3031 = vmatpush1.bf16.msra.mxu0 %v559
  %3032 = vmatprep.subr.bf16.mxu0 0
  %3033 = vmatpush1.bf16.msra.mxu0 %v562
  %3034 = vmatprep.subr.bf16.mxu0 0
  %3035 = vmatpush1.bf16.msra.mxu0 0
  %3036 = vmatprep.subr.bf16.mxu0 0
  %3037 = vmatpush1.bf16.msra.mxu0 0
  %3038 = vmatprep.subr.bf16.mxu0 0
  %3039 = vmatpush1.bf16.msra.mxu0 0
  %3040 = vmatprep.subr.bf16.mxu0 0
  %3041 = vmatpush1.bf16.msra.mxu0 0
  %3042 = vmatprep.subr.bf16.mxu0 0
  %3043 = vmatpush1.bf16.msra.mxu0 0
  %3044 = vmatprep.subr.bf16.mxu0 0
  %3045 = vmatpush1.bf16.msra.mxu0 0
  %3046 = vmatprep.subr.bf16.mxu0 0
  %3047 = vmatpush1.bf16.msra.mxu0 0
  %3048 = vmatprep.subr.bf16.mxu0 0
  %3049 = vmatpush1.bf16.msra.mxu0 0
  %3050 = vmatprep.mubr.bf16.mxu0 0
  %3051 = vmatmul.mubr.bf16.gmra.mrb[0].mxu0 %v2976
  %v3052 = vpop.f32.mrb[0].mxu0
  %v3053 = vadd.f32 %v455, %v3052
  %v3054 = vpop.f32.mrb[0].mxu0
  %v3055 = vpop.f32.mrb[0].mxu0
  %v3056 = vpop.f32.mrb[0].mxu0
  %3057 = vdwg.mxu0
  %3058 = vmatprep.subr.bf16.mxu0 %v798
  %3059 = vmatpush1.bf16.msra.mxu0 %v797
  %3060 = vmatprep.subr.bf16.mxu0 %v801
  %3061 = vmatpush1.bf16.msra.mxu0 %v800
  %3062 = vmatprep.subr.bf16.mxu0 %v804
  %3063 = vmatpush1.bf16.msra.mxu0 %v803
  %3064 = vmatprep.subr.bf16.mxu0 %v807
  %3065 = vmatpush1.bf16.msra.mxu0 %v806
  %3066 = vmatprep.subr.bf16.mxu0 %v810
  %3067 = vmatpush1.bf16.msra.mxu0 %v809
  %3068 = vmatprep.subr.bf16.mxu0 %v813
  %3069 = vmatpush1.bf16.msra.mxu0 %v812
  %3070 = vmatprep.subr.bf16.mxu0 %v816
  %3071 = vmatpush1.bf16.msra.mxu0 %v815
  %3072 = vmatprep.subr.bf16.mxu0 %v819
  %3073 = vmatpush1.bf16.msra.mxu0 %v818
  %3074 = vmatprep.subr.bf16.mxu0 0
  %3075 = vmatpush1.bf16.msra.mxu0 0
  %3076 = vmatprep.subr.bf16.mxu0 0
  %3077 = vmatpush1.bf16.msra.mxu0 0
  %3078 = vmatprep.subr.bf16.mxu0 0
  %3079 = vmatpush1.bf16.msra.mxu0 0
  %3080 = vmatprep.subr.bf16.mxu0 0
  %3081 = vmatpush1.bf16.msra.mxu0 0
  %3082 = vmatprep.subr.bf16.mxu0 0
  %3083 = vmatpush1.bf16.msra.mxu0 0
  %3084 = vmatprep.subr.bf16.mxu0 0
  %3085 = vmatpush1.bf16.msra.mxu0 0
  %3086 = vmatprep.subr.bf16.mxu0 0
  %3087 = vmatpush1.bf16.msra.mxu0 0
  %3088 = vmatprep.subr.bf16.mxu0 0
  %3089 = vmatpush1.bf16.msra.mxu0 0
  %3090 = vmatprep.mubr.bf16.mxu0 0
  %3091 = vmatmul.mubr.bf16.gmra.mrb[0].mxu0 %v2873
  %v3092 = vpop.f32.mrb[0].mxu0
  %v3093 = vadd.f32 %v705, %v3092
  %v3094 = vpop.f32.mrb[0].mxu0
  %v3095 = vadd.f32 %v709, %v3094
  %v3096 = vpop.f32.mrb[0].mxu0
  %v3097 = vpop.f32.mrb[0].mxu0
  %3098 = vdwg.mxu0
  %3099 = vmatprep.subr.bf16.mxu0 0
  %3100 = vmatpush1.bf16.msra.mxu0 %v799
  %3101 = vmatprep.subr.bf16.mxu0 0
  %3102 = vmatpush1.bf16.msra.mxu0 %v802
  %3103 = vmatprep.subr.bf16.mxu0 0
  %3104 = vmatpush1.bf16.msra.mxu0 %v805
  %3105 = vmatprep.subr.bf16.mxu0 0
  %3106 = vmatpush1.bf16.msra.mxu0 %v808
  %3107 = vmatprep.subr.bf16.mxu0 0
  %3108 = vmatpush1.bf16.msra.mxu0 %v811
  %3109 = vmatprep.subr.bf16.mxu0 0
  %3110 = vmatpush1.bf16.msra.mxu0 %v814
  %3111 = vmatprep.subr.bf16.mxu0 0
  %3112 = vmatpush1.bf16.msra.mxu0 %v817
  %3113 = vmatprep.subr.bf16.mxu0 0
  %3114 = vmatpush1.bf16.msra.mxu0 %v820
  %3115 = vmatprep.subr.bf16.mxu0 0
  %3116 = vmatpush1.bf16.msra.mxu0 0
  %3117 = vmatprep.subr.bf16.mxu0 0
  %3118 = vmatpush1.bf16.msra.mxu0 0
  %3119 = vmatprep.subr.bf16.mxu0 0
  %3120 = vmatpush1.bf16.msra.mxu0 0
  %3121 = vmatprep.subr.bf16.mxu0 0
  %3122 = vmatpush1.bf16.msra.mxu0 0
  %3123 = vmatprep.subr.bf16.mxu0 0
  %3124 = vmatpush1.bf16.msra.mxu0 0
  %3125 = vmatprep.subr.bf16.mxu0 0
  %3126 = vmatpush1.bf16.msra.mxu0 0
  %3127 = vmatprep.subr.bf16.mxu0 0
  %3128 = vmatpush1.bf16.msra.mxu0 0
  %3129 = vmatprep.subr.bf16.mxu0 0
  %3130 = vmatpush1.bf16.msra.mxu0 0
  %3131 = vmatprep.mubr.bf16.mxu0 0
  %3132 = vmatmul.mubr.bf16.gmra.mrb[0].mxu0 %v2873
  %v3133 = vpop.f32.mrb[0].mxu0
  %v3134 = vadd.f32 %v713, %v3133
  %v3135 = vpop.f32.mrb[0].mxu0
  %v3136 = vpop.f32.mrb[0].mxu0
  %v3137 = vpop.f32.mrb[0].mxu0
  %3138 = vdwg.mxu0
  %s3139 = scalar_lea.vmem [#allocation2], 168
  %v3140 = vld [vmem:[%s3139] sm:$0xff]
  %v3141 = vld [vmem:[%s3139 + $0x8] sm:$0xff]
  %v3142 = vld [vmem:[%s3139 + $0x10] sm:$0xff]
  %v3143 = vadd.f32 %v3140, %v3093
  %v3144 = vxor.u32 %v3143, 2147483648
  %v3145 = vmul.f32 %v3144, 1.442695
  %v3146 = vpow.pop %v3145
  %v3147 = vadd.f32 %v3146, 1.0
  %v3148 = vrcp.pop %v3147
  %v3149 = vmul.f32 1.0, %v3148
  %v3150 = vadd.f32 %v3141, %v3095
  %v3151 = vxor.u32 %v3150, 2147483648
  %v3152 = vmul.f32 %v3151, 1.442695
  %v3153 = vpow.pop %v3152
  %v3154 = vadd.f32 %v3153, 1.0
  %v3155 = vrcp.pop %v3154
  %v3156 = vmul.f32 1.0, %v3155
  %v3157 = vmul.f32 %v3149, %v3134
  %v3158 = vadd.f32 %v3142, %v3157
  %v3159 = vtanh.pop %v3158
  %v3160 = vsub.f32 1.0, %v3156
  %v3161 = vmul.f32 %v3160, %v3159
  %v3162 = vmul.f32 %v3156, %v2872
  %v3163 = vadd.f32 %v3161, %v3162
  %v3164 = vpack.c.bf16 %v3163, %v3163
  %3165 = vmatprep.subr.bf16.mxu0 %v1081
  %3166 = vmatpush1.bf16.msra.mxu0 %v1080
  %3167 = vmatprep.subr.bf16.mxu0 %v1084
  %3168 = vmatpush1.bf16.msra.mxu0 %v1083
  %3169 = vmatprep.subr.bf16.mxu0 %v1087
  %3170 = vmatpush1.bf16.msra.mxu0 %v1086
  %3171 = vmatprep.subr.bf16.mxu0 %v1090
  %3172 = vmatpush1.bf16.msra.mxu0 %v1089
  %3173 = vmatprep.subr.bf16.mxu0 %v1093
  %3174 = vmatpush1.bf16.msra.mxu0 %v1092
  %3175 = vmatprep.subr.bf16.mxu0 %v1096
  %3176 = vmatpush1.bf16.msra.mxu0 %v1095
  %3177 = vmatprep.subr.bf16.mxu0 %v1099
  %3178 = vmatpush1.bf16.msra.mxu0 %v1098
  %3179 = vmatprep.subr.bf16.mxu0 %v1102
  %3180 = vmatpush1.bf16.msra.mxu0 %v1101
  %3181 = vmatprep.subr.bf16.mxu0 0
  %3182 = vmatpush1.bf16.msra.mxu0 0
  %3183 = vmatprep.subr.bf16.mxu0 0
  %3184 = vmatpush1.bf16.msra.mxu0 0
  %3185 = vmatprep.subr.bf16.mxu0 0
  %3186 = vmatpush1.bf16.msra.mxu0 0
  %3187 = vmatprep.subr.bf16.mxu0 0
  %3188 = vmatpush1.bf16.msra.mxu0 0
  %3189 = vmatprep.subr.bf16.mxu0 0
  %3190 = vmatpush1.bf16.msra.mxu0 0
  %3191 = vmatprep.subr.bf16.mxu0 0
  %3192 = vmatpush1.bf16.msra.mxu0 0
  %3193 = vmatprep.subr.bf16.mxu0 0
  %3194 = vmatpush1.bf16.msra.mxu0 0
  %3195 = vmatprep.subr.bf16.mxu0 0
  %3196 = vmatpush1.bf16.msra.mxu0 0
  %3197 = vmatprep.mubr.bf16.mxu0 0
  %3198 = vmatmul.mubr.bf16.gmra.mrb[0].mxu0 %v3164
  %v3199 = vpop.f32.mrb[0].mxu0
  %v3200 = vadd.f32 %v988, %v3199
  %v3201 = vpop.f32.mrb[0].mxu0
  %v3202 = vadd.f32 %v992, %v3201
  %v3203 = vpop.f32.mrb[0].mxu0
  %v3204 = vpop.f32.mrb[0].mxu0
  %3205 = vdwg.mxu0
  %3206 = vmatprep.subr.bf16.mxu0 0
  %3207 = vmatpush1.bf16.msra.mxu0 %v1082
  %3208 = vmatprep.subr.bf16.mxu0 0
  %3209 = vmatpush1.bf16.msra.mxu0 %v1085
  %3210 = vmatprep.subr.bf16.mxu0 0
  %3211 = vmatpush1.bf16.msra.mxu0 %v1088
  %3212 = vmatprep.subr.bf16.mxu0 0
  %3213 = vmatpush1.bf16.msra.mxu0 %v1091
  %3214 = vmatprep.subr.bf16.mxu0 0
  %3215 = vmatpush1.bf16.msra.mxu0 %v1094
  %3216 = vmatprep.subr.bf16.mxu0 0
  %3217 = vmatpush1.bf16.msra.mxu0 %v1097
  %3218 = vmatprep.subr.bf16.mxu0 0
  %3219 = vmatpush1.bf16.msra.mxu0 %v1100
  %3220 = vmatprep.subr.bf16.mxu0 0
  %3221 = vmatpush1.bf16.msra.mxu0 %v1103
  %3222 = vmatprep.subr.bf16.mxu0 0
  %3223 = vmatpush1.bf16.msra.mxu0 0
  %3224 = vmatprep.subr.bf16.mxu0 0
  %3225 = vmatpush1.bf16.msra.mxu0 0
  %3226 = vmatprep.subr.bf16.mxu0 0
  %3227 = vmatpush1.bf16.msra.mxu0 0
  %3228 = vmatprep.subr.bf16.mxu0 0
  %3229 = vmatpush1.bf16.msra.mxu0 0
  %3230 = vmatprep.subr.bf16.mxu0 0
  %3231 = vmatpush1.bf16.msra.mxu0 0
  %3232 = vmatprep.subr.bf16.mxu0 0
  %3233 = vmatpush1.bf16.msra.mxu0 0
  %3234 = vmatprep.subr.bf16.mxu0 0
  %3235 = vmatpush1.bf16.msra.mxu0 0
  %3236 = vmatprep.subr.bf16.mxu0 0
  %3237 = vmatpush1.bf16.msra.mxu0 0
  %3238 = vmatprep.mubr.bf16.mxu0 0
  %3239 = vmatmul.mubr.bf16.gmra.mrb[0].mxu0 %v3164
  %v3240 = vpop.f32.mrb[0].mxu0
  %v3241 = vadd.f32 %v996, %v3240
  %v3242 = vpop.f32.mrb[0].mxu0
  %v3243 = vpop.f32.mrb[0].mxu0
  %v3244 = vpop.f32.mrb[0].mxu0
  %3245 = vdwg.mxu0
  %v3246 = vadd.f32 %v3200, %v3012
  %v3247 = vxor.u32 %v3246, 2147483648
  %v3248 = vmul.f32 %v3247, 1.442695
  %v3249 = vpow.pop %v3248
  %v3250 = vadd.f32 %v3249, 1.0
  %v3251 = vrcp.pop %v3250
  %v3252 = vmul.f32 1.0, %v3251
  %v3253 = vadd.f32 %v3202, %v3014
  %v3254 = vxor.u32 %v3253, 2147483648
  %v3255 = vmul.f32 %v3254, 1.442695
  %v3256 = vpow.pop %v3255
  %v3257 = vadd.f32 %v3256, 1.0
  %v3258 = vrcp.pop %v3257
  %v3259 = vmul.f32 1.0, %v3258
  %v3260 = vmul.f32 %v3252, %v3053
  %v3261 = vadd.f32 %v3241, %v3260
  %v3262 = vtanh.pop %v3261
  %v3263 = vsub.f32 1.0, %v3259
  %v3264 = vmul.f32 %v3263, %v3262
  %v3265 = vmul.f32 %v3259, %v2975
  %v3266 = vadd.f32 %v3264, %v3265
  %v3267 = vpack.c.bf16 %v3266, %v3266
  %v3268 = vld [vmem:[%s9] sm:$0xf]
  %v3269 = vld [vmem:[%s9 + $0x4] sm:$0xf]
  %v3270 = vld [vmem:[%s9 + $0x8] sm:$0xf]
  %v3271 = vld [vmem:[%s9 + $0xc] sm:$0xf]
  %v3272 = vld [vmem:[%s9 + $0x10] sm:$0xf]
  %v3273 = vld [vmem:[%s9 + $0x14] sm:$0xf]
  %v3274 = vld [vmem:[%s9 + $0x18] sm:$0xf]
  %v3275 = vld [vmem:[%s9 + $0x1c] sm:$0xf]
  %v3276 = vld [vmem:[%s9 + $0x20] sm:$0xf]
  %v3277 = vld [vmem:[%s9 + $0x24] sm:$0xf]
  %v3278 = vld [vmem:[%s9 + $0x28] sm:$0xf]
  %v3279 = vld [vmem:[%s9 + $0x2c] sm:$0xf]
  %v3280 = vld [vmem:[%s9 + $0x30] sm:$0xf]
  %v3281 = vld [vmem:[%s9 + $0x34] sm:$0xf]
  %v3282 = vld [vmem:[%s9 + $0x38] sm:$0xf]
  %v3283 = vld [vmem:[%s9 + $0x3c] sm:$0xf]
  %v3284 = vld [vmem:[%s10] sm:$0x1]
  %v3286 = vlaneseq
  %v3287 = vshrl.u32 %v3286, 7
  %v3288 = vsub.s32 0, %v3287
  %v3289 = vrot.slane %v3284, %v3288
  %v3307 = vunpack.c.l.b16 %v3268
  %v3308 = vunpack.c.l.b16 %v3269
  %v3309 = vunpack.c.l.b16 %v3270
  %v3310 = vunpack.c.l.b16 %v3271
  %v3311 = vunpack.c.l.b16 %v3272
  %v3312 = vunpack.c.l.b16 %v3273
  %v3313 = vunpack.c.l.b16 %v3274
  %v3314 = vunpack.c.l.b16 %v3275
  %v3315 = vunpack.c.l.b16 %v3276
  %v3316 = vunpack.c.l.b16 %v3277
  %v3317 = vunpack.c.l.b16 %v3278
  %v3318 = vunpack.c.l.b16 %v3279
  %v3319 = vunpack.c.l.b16 %v3280
  %v3320 = vunpack.c.l.b16 %v3281
  %v3321 = vunpack.c.l.b16 %v3282
  %v3322 = vunpack.c.l.b16 %v3283
  %v3323 = vpack.c.b16 %v3308, %v3307
  %v3324 = vpack.c.b16 %v3310, %v3309
  %v3325 = vpack.c.b16 %v3312, %v3311
  %v3326 = vpack.c.b16 %v3314, %v3313
  %v3327 = vpack.c.b16 %v3316, %v3315
  %v3328 = vpack.c.b16 %v3318, %v3317
  %v3329 = vpack.c.b16 %v3320, %v3319
  %v3330 = vpack.c.b16 %v3322, %v3321
  %3339 = vmatprep.subr.bf16.mxu0 0
  %3340 = vmatpush1.bf16.msra.mxu0 %v3323
  %3341 = vmatprep.subr.bf16.mxu0 0
  %3342 = vmatpush1.bf16.msra.mxu0 %v3324
  %3343 = vmatprep.subr.bf16.mxu0 0
  %3344 = vmatpush1.bf16.msra.mxu0 %v3325
  %3345 = vmatprep.subr.bf16.mxu0 0
  %3346 = vmatpush1.bf16.msra.mxu0 %v3326
  %3347 = vmatprep.subr.bf16.mxu0 0
  %3348 = vmatpush1.bf16.msra.mxu0 %v3327
  %3349 = vmatprep.subr.bf16.mxu0 0
  %3350 = vmatpush1.bf16.msra.mxu0 %v3328
  %3351 = vmatprep.subr.bf16.mxu0 0
  %3352 = vmatpush1.bf16.msra.mxu0 %v3329
  %3353 = vmatprep.subr.bf16.mxu0 0
  %3354 = vmatpush1.bf16.msra.mxu0 %v3330
  %3355 = vmatprep.subr.bf16.mxu0 0
  %3356 = vmatpush1.bf16.msra.mxu0 0
  %3357 = vmatprep.subr.bf16.mxu0 0
  %3358 = vmatpush1.bf16.msra.mxu0 0
  %3359 = vmatprep.subr.bf16.mxu0 0
  %3360 = vmatpush1.bf16.msra.mxu0 0
  %3361 = vmatprep.subr.bf16.mxu0 0
  %3362 = vmatpush1.bf16.msra.mxu0 0
  %3363 = vmatprep.subr.bf16.mxu0 0
  %3364 = vmatpush1.bf16.msra.mxu0 0
  %3365 = vmatprep.subr.bf16.mxu0 0
  %3366 = vmatpush1.bf16.msra.mxu0 0
  %3367 = vmatprep.subr.bf16.mxu0 0
  %3368 = vmatpush1.bf16.msra.mxu0 0
  %3369 = vmatprep.subr.bf16.mxu0 0
  %3370 = vmatpush1.bf16.msra.mxu0 0
  %3371 = vmatprep.mubr.bf16.mxu0 0
  %3372 = vmatmul.mubr.bf16.gmra.mrb[0].mxu0 %v3267
  %v3373 = vpop.f32.mrb[0].mxu0
  %v3374 = vadd.f32 %v3289, %v3373
  %v3375 = vpop.f32.mrb[0].mxu0
  %v3376 = vpop.f32.mrb[0].mxu0
  %v3377 = vpop.f32.mrb[0].mxu0
  %3378 = vdwg.mxu0
  %3379 = vst [vmem:[%s11] sm:$0x3] %v3374
  // Predicated region
  $region46: #{gru_forward.1} parent=0 // pred_check
    _
  $region47: #{gru_forward.1} parent=0 // pred_check_branch
    %3381 = sbr.rel (0) target = $region49
  $region48: #{gru_forward.1} parent=0 // pred_region
    _
  $region49: #{gru_forward.1} parent=0 // pred_fallthru
    _
  // Predicated region
  $region50: #{gru_forward.1} parent=0 // pred_check
    _
  $region51: #{gru_forward.1} parent=0 // pred_check_branch
    %3383 = sbr.rel (0) target = $region53
  $region52: #{gru_forward.1} parent=0 // pred_region
    _
  $region53: #{gru_forward.1} parent=0 // pred_fallthru
    _

</llo_original>
